<compile_context>
chip_gen: v7x
topology: tpu7x:2x2x1
jax: 0.10.0
libtpu: 0.0.40
codegen_flags: <defaults>
</compile_context>

<pallas_src>
import functools

import jax
import jax.numpy as jnp
from jax.experimental import pallas as pl
from jax.experimental.pallas import tpu as pltpu

# ---- small synthetic BERT config (shapes consistent with the module) -------
VOCAB = 100
MAX_POS = 16
HIDDEN = 32
NUM_HEADS = 4
HEAD_DIM = HIDDEN // NUM_HEADS
INTER = 64
NUM_LAYERS = 2
NUM_CLASSES = 3
BATCH = 2
SEQ = 8
LN_EPS = 1e-12

_SQRT_HALF = 0.7071067811865476


# --------------------------- in-kernel helpers -------------------------------
def _erf_approx(x):
    # Abramowitz & Stegun 7.1.26 (|abs err| < 1.5e-7 with exact divide); the
    # divide is pushed to the EUP via pl.reciprocal(approx=True) which relaxes
    # that bound slightly — acceptable for GELU in inference.
    a1, a2, a3, a4, a5 = 0.254829592, -0.284496736, 1.421413741, -1.453152027, 1.061405429
    p = 0.3275911
    ax = jnp.abs(x)
    t = pl.reciprocal(1.0 + p * ax, approx=True)
    poly = ((((a5 * t + a4) * t + a3) * t + a2) * t + a1) * t
    y = 1.0 - poly * jnp.exp(-ax * ax)
    return jnp.where(x >= 0, y, -y)


def _gelu_erf(x):
    return 0.5 * x * (1.0 + _erf_approx(x * _SQRT_HALF))


def _layernorm_rows(x, gamma, beta, eps):
    mean = jnp.mean(x, axis=-1, keepdims=True)
    xc = x - mean
    var = jnp.mean(xc * xc, axis=-1, keepdims=True)
    return xc * jax.lax.rsqrt(var + eps) * gamma + beta


# ----------------------------- fused Pallas kernel ---------------------------
def _bert_kernel(emb_ref, mask_ref, sel_ref, embg_ref, embb_ref,
                 wqkv_ref, bqkv_ref, wao_ref, bao_ref, ln1g_ref, ln1b_ref,
                 wi_ref, bi_ref, wo_ref, bo_ref, ln2g_ref, ln2b_ref,
                 pw_ref, pb_ref, cw_ref, cb_ref,
                 logits_ref,
                 x_ref, ctx_ref,
                 *, batch, seq, num_heads, head_dim, eps):
    f32 = jnp.float32
    bf16 = jnp.bfloat16
    hid = num_heads * head_dim
    rows = batch * seq
    scale = 1.0 / float(head_dim) ** 0.5
    layer = pl.program_id(0)

    # ---- layer-0 prologue: embedding LayerNorm into resident VMEM scratch ---
    @pl.when(layer == 0)
    def _():
        x_ref[...] = _layernorm_rows(emb_ref[...].astype(f32),
                                     embg_ref[...], embb_ref[...], eps)

    x = x_ref[...]                       # (rows, hid) f32, VMEM-resident
    mask = mask_ref[...]                 # (batch, seq) additive f32 mask

    # ---- fused QKV projection: bf16 operands, f32 accumulation --------------
    qkv = jnp.dot(x.astype(bf16), wqkv_ref[...], preferred_element_type=f32)
    qkv = (qkv + bqkv_ref[...]).reshape(batch, seq, 3 * hid)

    # ---- per-head attention, batched over batch; ctx written into scratch ---
    for h in range(num_heads):           # static unroll (num_heads is small)
        lo = h * head_dim
        q = qkv[:, :, lo:lo + head_dim]
        k = qkv[:, :, hid + lo:hid + lo + head_dim]
        v = qkv[:, :, 2 * hid + lo:2 * hid + lo + head_dim]
        s = jnp.einsum("bqd,bkd->bqk", q.astype(bf16), k.astype(bf16),
                       preferred_element_type=f32)
        s = s * scale + mask[:, None, :]
        s = s - jnp.max(s, axis=-1, keepdims=True)
        p = jnp.exp(s)
        p = p * pl.reciprocal(jnp.sum(p, axis=-1, keepdims=True), approx=True)
        ctx_ref[:, :, lo:lo + head_dim] = jnp.einsum(
            "bqk,bkd->bqd", p.astype(bf16), v.astype(bf16),
            preferred_element_type=f32)

    # ---- attention output projection + residual + LayerNorm -----------------
    ctx = ctx_ref[...].reshape(rows, hid)
    attn = jnp.dot(ctx.astype(bf16), wao_ref[...],
                   preferred_element_type=f32) + bao_ref[...]
    x = _layernorm_rows(attn + x, ln1g_ref[...], ln1b_ref[...], eps)

    # ---- FFN (exact-erf GELU) + residual + LayerNorm -------------------------
    inter = jnp.dot(x.astype(bf16), wi_ref[...],
                    preferred_element_type=f32) + bi_ref[...]
    inter = _gelu_erf(inter)
    ffn = jnp.dot(inter.astype(bf16), wo_ref[...],
                  preferred_element_type=f32) + bo_ref[...]
    x = _layernorm_rows(ffn + x, ln2g_ref[...], ln2b_ref[...], eps)
    x_ref[...] = x                       # carry activations to next layer

    # ---- last-layer epilogue: pooler (tanh on [CLS]) + classifier ------------
    @pl.when(layer == pl.num_programs(0) - 1)
    def _():
        # Exact [CLS]-row selection via a 0/1 selector matmul (f32, exact).
        cls = jnp.dot(sel_ref[...], x, preferred_element_type=f32)      # (B, hid)
        pooled = jnp.tanh(jnp.dot(cls.astype(bf16), pw_ref[...],
                                  preferred_element_type=f32) + pb_ref[...])
        logits = jnp.dot(pooled.astype(bf16), cw_ref[...],
                         preferred_element_type=f32) + cb_ref[...]
        logits_ref[...] = logits.astype(logits_ref.dtype)


def _cost_estimate(B, S, H, I, L, C, nh, hd):
    M = B * S
    mm = lambda m, k, n: 2 * m * k * n
    per_layer = (mm(M, H, 3 * H) + mm(M, H, H) + mm(M, H, I) + mm(M, I, H)
                 + B * nh * (mm(S, hd, S) + mm(S, S, hd)))
    flops = L * per_layer + mm(B, M, H) + mm(B, H, H) + mm(B, H, C)
    trans = L * (B * nh * S * S + 2 * M * I) + B * H
    weight_bytes = L * 2 * (3 * H * H + H * H + 2 * H * I) + 2 * (H * H + H * C)
    act_bytes = 4 * (M * H + B * S + B * M + B * C)
    return pl.CostEstimate(flops=flops, transcendentals=trans,
                           bytes_accessed=weight_bytes + act_bytes)


# ------------------------------ model wrapper --------------------------------
def init_params(key):
    keys = iter(jax.random.split(key, 16))

    def nrm(shape, dtype=jnp.float32):
        return (0.02 * jax.random.normal(next(keys), shape)).astype(dtype)

    ones = lambda s: jnp.ones(s, jnp.float32)
    zeros = lambda s: jnp.zeros(s, jnp.float32)
    L, H, I = NUM_LAYERS, HIDDEN, INTER

    return {
        "word_emb": nrm((VOCAB, H)),
        "pos_emb": nrm((MAX_POS, H)),
        "type_emb": nrm((2, H)),
        "emb_ln_g": ones((H,)), "emb_ln_b": zeros((H,)),
        "pool_w": nrm((H, H), jnp.bfloat16), "pool_b": zeros((H,)),
        "cls_w": nrm((H, NUM_CLASSES), jnp.bfloat16), "cls_b": zeros((NUM_CLASSES,)),
        # Per-layer weights stacked along a leading layer axis (streamed by the
        # layer-indexed BlockSpecs); matmul weights in bf16, bias/LN in f32.
        "layers": {
            "qkv_w": nrm((L, H, 3 * H), jnp.bfloat16), "qkv_b": zeros((L, 1, 3 * H)),
            "ao_w": nrm((L, H, H), jnp.bfloat16), "ao_b": zeros((L, 1, H)),
            "attn_ln_g": ones((L, 1, H)), "attn_ln_b": zeros((L, 1, H)),
            "i_w": nrm((L, H, I), jnp.bfloat16), "i_b": zeros((L, 1, I)),
            "o_w": nrm((L, I, H), jnp.bfloat16), "o_b": zeros((L, 1, H)),
            "out_ln_g": ones((L, 1, H)), "out_ln_b": zeros((L, 1, H)),
        },
    }


def bert_forward(params, input_ids, attention_mask):
    B, S = input_ids.shape
    H, I, L, C = HIDDEN, INTER, NUM_LAYERS, NUM_CLASSES
    M = B * S

    # TODO(synk): embedding-table gathers stay in XLA — a random row gather has
    # no tile-friendly BlockSpec at these shapes.  Dropout = identity (eval).
    we = jnp.take(params["word_emb"], input_ids, axis=0)             # (B, S, H)
    pe = params["pos_emb"][:S][None, :, :]
    te = params["type_emb"][0][None, None, :]
    emb = (we + pe + te).reshape(M, H).astype(jnp.float32)

    # Extended additive attention mask over key positions: (1 - mask) * -10000.
    ext_mask = (1.0 - attention_mask.astype(jnp.float32)) * -10000.0  # (B, S)

    # One-hot selector of the [CLS] rows in the flattened (B*S, H) activations.
    cls_sel = jnp.zeros((B, M), jnp.float32).at[
        jnp.arange(B), jnp.arange(B) * S].set(1.0)

    lyr = params["layers"]
    kern = functools.partial(_bert_kernel, batch=B, seq=S,
                             num_heads=NUM_HEADS, head_dim=HEAD_DIM, eps=LN_EPS)
    const2 = lambda l: (0, 0)                  # resident blocks (DMA'd once)
    lw3 = lambda l: (l, 0, 0)                  # streamed per-layer weights

    logits = pl.pallas_call(
        kern,
        out_shape=jax.ShapeDtypeStruct((B, C), jnp.float32),
        grid=(L,),
        in_specs=[
            pl.BlockSpec((M, H), const2),                  # embeddings (layer 0)
            pl.BlockSpec((B, S), const2),                  # additive mask
            pl.BlockSpec((B, M), const2),                  # [CLS] selector
            pl.BlockSpec((1, H), const2),                  # emb LN gamma
            pl.BlockSpec((1, H), const2),                  # emb LN beta
            pl.BlockSpec((None, H, 3 * H), lw3),           # qkv_w  (bf16, streamed)
            pl.BlockSpec((None, 1, 3 * H), lw3),           # qkv_b
            pl.BlockSpec((None, H, H), lw3),               # ao_w
            pl.BlockSpec((None, 1, H), lw3),               # ao_b
            pl.BlockSpec((None, 1, H), lw3),               # attn LN gamma
            pl.BlockSpec((None, 1, H), lw3),               # attn LN beta
            pl.BlockSpec((None, H, I), lw3),               # i_w
            pl.BlockSpec((None, 1, I), lw3),               # i_b
            pl.BlockSpec((None, I, H), lw3),               # o_w
            pl.BlockSpec((None, 1, H), lw3),               # o_b
            pl.BlockSpec((None, 1, H), lw3),               # out LN gamma
            pl.BlockSpec((None, 1, H), lw3),               # out LN beta
            pl.BlockSpec((H, H), const2),                  # pooler W
            pl.BlockSpec((1, H), const2),                  # pooler b
            pl.BlockSpec((H, C), const2),                  # classifier W
            pl.BlockSpec((1, C), const2),                  # classifier b
        ],
        out_specs=pl.BlockSpec((B, C), const2),
        scratch_shapes=[
            pltpu.VMEM((M, H), jnp.float32),               # resident activations
            pltpu.VMEM((B, S, H), jnp.float32),            # attention context
        ],
        compiler_params=pltpu.CompilerParams(
            dimension_semantics=("arbitrary",),            # layer loop is sequential
            vmem_limit_bytes=32 * 1024 * 1024),
        cost_estimate=_cost_estimate(B, S, H, I, L, C, NUM_HEADS, HEAD_DIM),
    )(emb, ext_mask, cls_sel,
      params["emb_ln_g"].reshape(1, H), params["emb_ln_b"].reshape(1, H),
      lyr["qkv_w"], lyr["qkv_b"], lyr["ao_w"], lyr["ao_b"],
      lyr["attn_ln_g"], lyr["attn_ln_b"],
      lyr["i_w"], lyr["i_b"], lyr["o_w"], lyr["o_b"],
      lyr["out_ln_g"], lyr["out_ln_b"],
      params["pool_w"], params["pool_b"].reshape(1, H),
      params["cls_w"], params["cls_b"].reshape(1, C))
    return logits                                           # (B, num_classes)


if __name__ == "__main__":
    key = jax.random.PRNGKey(0)
    pkey, ikey = jax.random.split(key)
    params = init_params(pkey)

    input_ids = jax.random.randint(ikey, (BATCH, SEQ), 0, VOCAB, dtype=jnp.int32)
    attention_mask = jnp.ones((BATCH, SEQ), jnp.int32).at[1, 6:].set(0)  # pad tail

    logits = jax.jit(bert_forward)(params, input_ids, attention_mask)
    jax.block_until_ready(logits)
    assert logits.shape == (BATCH, NUM_CLASSES) and logits.dtype == jnp.float32
    print("KERNEL_OK")
</pallas_src>

<mosaic_0001>
module attributes {stable_mosaic.version = 11 : i64} {
  func.func @_bert_kernel(%arg0: i32, %arg1: memref<16x32xf32, #tpu.memory_space<vmem>>, %arg2: memref<2x8xf32, #tpu.memory_space<vmem>>, %arg3: memref<2x16xf32, #tpu.memory_space<vmem>>, %arg4: memref<1x32xf32, #tpu.memory_space<vmem>>, %arg5: memref<1x32xf32, #tpu.memory_space<vmem>>, %arg6: memref<1x32x96xbf16, #tpu.memory_space<vmem>>, %arg7: memref<1x1x96xf32, #tpu.memory_space<vmem>>, %arg8: memref<1x32x32xbf16, #tpu.memory_space<vmem>>, %arg9: memref<1x1x32xf32, #tpu.memory_space<vmem>>, %arg10: memref<1x1x32xf32, #tpu.memory_space<vmem>>, %arg11: memref<1x1x32xf32, #tpu.memory_space<vmem>>, %arg12: memref<1x32x64xbf16, #tpu.memory_space<vmem>>, %arg13: memref<1x1x64xf32, #tpu.memory_space<vmem>>, %arg14: memref<1x64x32xbf16, #tpu.memory_space<vmem>>, %arg15: memref<1x1x32xf32, #tpu.memory_space<vmem>>, %arg16: memref<1x1x32xf32, #tpu.memory_space<vmem>>, %arg17: memref<1x1x32xf32, #tpu.memory_space<vmem>>, %arg18: memref<32x32xbf16, #tpu.memory_space<vmem>>, %arg19: memref<1x32xf32, #tpu.memory_space<vmem>>, %arg20: memref<32x3xbf16, #tpu.memory_space<vmem>>, %arg21: memref<1x3xf32, #tpu.memory_space<vmem>>, %arg22: memref<2x3xf32, #tpu.memory_space<vmem>>, %arg23: memref<16x32xf32, #tpu.memory_space<vmem>>, %arg24: memref<2x8x32xf32, #tpu.memory_space<vmem>>) attributes {dimension_semantics = [#tpu.dimension_semantics<arbitrary>], iteration_bounds = array<i64: 2>, scalar_prefetch = 0 : i64, scratch_operands = 2 : i64, tpu.core_type = #tpu.core_type<tc>, window_params = [{pipeline_mode = #tpu.pipeline_mode<synchronous>, transform_indices = @transform_0, window_bounds = array<i64: 16, 32>}, {pipeline_mode = #tpu.pipeline_mode<synchronous>, transform_indices = @transform_1, window_bounds = array<i64: 2, 8>}, {pipeline_mode = #tpu.pipeline_mode<synchronous>, transform_indices = @transform_2, window_bounds = array<i64: 2, 16>}, {pipeline_mode = #tpu.pipeline_mode<synchronous>, transform_indices = @transform_3, window_bounds = array<i64: 1, 32>}, {pipeline_mode = #tpu.pipeline_mode<synchronous>, transform_indices = @transform_4, window_bounds = array<i64: 1, 32>}, {transform_indices = @transform_5, window_bounds = array<i64: 1, 32, 96>}, {transform_indices = @transform_6, window_bounds = array<i64: 1, 1, 96>}, {transform_indices = @transform_7, window_bounds = array<i64: 1, 32, 32>}, {transform_indices = @transform_8, window_bounds = array<i64: 1, 1, 32>}, {transform_indices = @transform_9, window_bounds = array<i64: 1, 1, 32>}, {transform_indices = @transform_10, window_bounds = array<i64: 1, 1, 32>}, {transform_indices = @transform_11, window_bounds = array<i64: 1, 32, 64>}, {transform_indices = @transform_12, window_bounds = array<i64: 1, 1, 64>}, {transform_indices = @transform_13, window_bounds = array<i64: 1, 64, 32>}, {transform_indices = @transform_14, window_bounds = array<i64: 1, 1, 32>}, {transform_indices = @transform_15, window_bounds = array<i64: 1, 1, 32>}, {transform_indices = @transform_16, window_bounds = array<i64: 1, 1, 32>}, {pipeline_mode = #tpu.pipeline_mode<synchronous>, transform_indices = @transform_17, window_bounds = array<i64: 32, 32>}, {pipeline_mode = #tpu.pipeline_mode<synchronous>, transform_indices = @transform_18, window_bounds = array<i64: 1, 32>}, {pipeline_mode = #tpu.pipeline_mode<synchronous>, transform_indices = @transform_19, window_bounds = array<i64: 32, 3>}, {pipeline_mode = #tpu.pipeline_mode<synchronous>, transform_indices = @transform_20, window_bounds = array<i64: 1, 3>}, {pipeline_mode = #tpu.pipeline_mode<synchronous>, transform_indices = @transform_21, window_bounds = array<i64: 2, 3>}]} {
    %c0_i32 = arith.constant 0 : i32
    %0 = arith.cmpi eq, %arg0, %c0_i32 : i32
    %1 = arith.extui %0 : i1 to i32
    %c0_i32_0 = arith.constant 0 : i32
    %2 = arith.cmpi ne, %1, %c0_i32_0 : i32
    scf.if %2 {
      %c0_102 = arith.constant 0 : index
      %c0_103 = arith.constant 0 : index
      %233 = vector.load %arg1[%c0_102, %c0_103] : memref<16x32xf32, #tpu.memory_space<vmem>>, vector<16x32xf32>
      %c0_104 = arith.constant 0 : index
      %c0_105 = arith.constant 0 : index
      %234 = vector.load %arg4[%c0_104, %c0_105] : memref<1x32xf32, #tpu.memory_space<vmem>>, vector<1x32xf32>
      %c0_106 = arith.constant 0 : index
      %c0_107 = arith.constant 0 : index
      %235 = vector.load %arg5[%c0_106, %c0_107] : memref<1x32xf32, #tpu.memory_space<vmem>>, vector<1x32xf32>
      %cst_108 = arith.constant dense<0.000000e+00> : vector<16xf32>
      %236 = vector.multi_reduction <add>, %233, %cst_108 [1] : vector<16x32xf32> to vector<16xf32>
      %237 = vector.shape_cast %236 : vector<16xf32> to vector<16x1xf32>
      %cst_109 = arith.constant 3.200000e+01 : f32
      %238 = vector.broadcast %cst_109 : f32 to vector<16x1xf32>
      %239 = arith.divf %237, %238 : vector<16x1xf32>
      %240 = vector.broadcast %239 : vector<16x1xf32> to vector<16x32xf32>
      %241 = arith.subf %233, %240 : vector<16x32xf32>
      %242 = arith.mulf %241, %241 : vector<16x32xf32>
      %cst_110 = arith.constant dense<0.000000e+00> : vector<16xf32>
      %243 = vector.multi_reduction <add>, %242, %cst_110 [1] : vector<16x32xf32> to vector<16xf32>
      %244 = vector.shape_cast %243 : vector<16xf32> to vector<16x1xf32>
      %cst_111 = arith.constant 3.200000e+01 : f32
      %245 = vector.broadcast %cst_111 : f32 to vector<16x1xf32>
      %246 = arith.divf %244, %245 : vector<16x1xf32>
      %cst_112 = arith.constant 9.99999996E-13 : f32
      %247 = vector.broadcast %cst_112 : f32 to vector<16x1xf32>
      %248 = arith.addf %246, %247 : vector<16x1xf32>
      %249 = math.rsqrt %248 : vector<16x1xf32>
      %250 = vector.broadcast %249 : vector<16x1xf32> to vector<16x32xf32>
      %251 = arith.mulf %241, %250 : vector<16x32xf32>
      %252 = vector.broadcast %234 : vector<1x32xf32> to vector<16x32xf32>
      %253 = arith.mulf %251, %252 : vector<16x32xf32>
      %254 = vector.broadcast %235 : vector<1x32xf32> to vector<16x32xf32>
      %255 = arith.addf %253, %254 : vector<16x32xf32>
      %c0_113 = arith.constant 0 : index
      %c0_114 = arith.constant 0 : index
      %256 = vector.load %arg23[%c0_113, %c0_114] : memref<16x32xf32, #tpu.memory_space<vmem>>, vector<16x32xf32>
      tpu.vector_store %arg23[%c0_113, %c0_114], %255 {strides = array<i32>} : memref<16x32xf32, #tpu.memory_space<vmem>>, vector<16x32xf32>,
    } else {
    }
    %c0 = arith.constant 0 : index
    %c0_1 = arith.constant 0 : index
    %3 = vector.load %arg23[%c0, %c0_1] : memref<16x32xf32, #tpu.memory_space<vmem>>, vector<16x32xf32>
    %c0_2 = arith.constant 0 : index
    %c0_3 = arith.constant 0 : index
    %4 = vector.load %arg2[%c0_2, %c0_3] : memref<2x8xf32, #tpu.memory_space<vmem>>, vector<2x8xf32>
    %5 = arith.truncf %3 : vector<16x32xf32> to vector<16x32xbf16>
    %c0_4 = arith.constant 0 : index
    %c0_5 = arith.constant 0 : index
    %c0_6 = arith.constant 0 : index
    %6 = vector.load %arg6[%c0_4, %c0_5, %c0_6] : memref<1x32x96xbf16, #tpu.memory_space<vmem>>, vector<1x32x96xbf16>
    %7 = vector.shape_cast %6 : vector<1x32x96xbf16> to vector<32x96xbf16>
    %cst = arith.constant dense<0.000000e+00> : vector<16x96xf32>
    %8 = tpu.matmul %5, %7, %cst {dimension_numbers = #tpu.dot_dimension_numbers<[1], [0], [0], [1], [0, 0, 1, 1], [], []>} : vector<16x32xbf16>, vector<32x96xbf16>, vector<16x96xf32> -> vector<16x96xf32>
    %c0_7 = arith.constant 0 : index
    %c0_8 = arith.constant 0 : index
    %c0_9 = arith.constant 0 : index
    %9 = vector.load %arg7[%c0_7, %c0_8, %c0_9] : memref<1x1x96xf32, #tpu.memory_space<vmem>>, vector<1x1x96xf32>
    %10 = vector.shape_cast %9 : vector<1x1x96xf32> to vector<1x96xf32>
    %11 = vector.broadcast %10 : vector<1x96xf32> to vector<16x96xf32>
    %12 = arith.addf %8, %11 : vector<16x96xf32>
    %13 = vector.shape_cast %12 : vector<16x96xf32> to vector<2x8x96xf32>
    %14 = vector.extract_strided_slice %13 {offsets = [0, 0, 0], sizes = [2, 8, 8], strides = [1, 1, 1]} : vector<2x8x96xf32> to vector<2x8x8xf32>
    %15 = vector.extract_strided_slice %13 {offsets = [0, 0, 32], sizes = [2, 8, 8], strides = [1, 1, 1]} : vector<2x8x96xf32> to vector<2x8x8xf32>
    %16 = vector.extract_strided_slice %13 {offsets = [0, 0, 64], sizes = [2, 8, 8], strides = [1, 1, 1]} : vector<2x8x96xf32> to vector<2x8x8xf32>
    %17 = arith.truncf %14 : vector<2x8x8xf32> to vector<2x8x8xbf16>
    %18 = arith.truncf %15 : vector<2x8x8xf32> to vector<2x8x8xbf16>
    "tpu.trace_start"() <{level = 10 : i32, message = "bqd,bkd->bqk"}> : () -> ()
    %cst_10 = arith.constant dense<0.000000e+00> : vector<2x8x8xf32>
    %19 = tpu.matmul %17, %18, %cst_10 {dimension_numbers = #tpu.dot_dimension_numbers<[2], [2], [1], [1], [0, 0, 0, 1, 1, 1], [0], [0]>} : vector<2x8x8xbf16>, vector<2x8x8xbf16>, vector<2x8x8xf32> -> vector<2x8x8xf32>
    "tpu.trace_stop"() : () -> ()
    %cst_11 = arith.constant 0.353553385 : f32
    %20 = vector.broadcast %cst_11 : f32 to vector<2x8x8xf32>
    %21 = arith.mulf %19, %20 : vector<2x8x8xf32>
    %22 = vector.shape_cast %4 : vector<2x8xf32> to vector<2x1x8xf32>
    %23 = vector.broadcast %22 : vector<2x1x8xf32> to vector<2x8x8xf32>
    %24 = arith.addf %21, %23 : vector<2x8x8xf32>
    %cst_12 = arith.constant dense<0xFF800000> : vector<2x8xf32>
    %25 = vector.multi_reduction <maximumf>, %24, %cst_12 [2] : vector<2x8x8xf32> to vector<2x8xf32>
    %26 = vector.shape_cast %25 : vector<2x8xf32> to vector<2x8x1xf32>
    %27 = vector.broadcast %26 : vector<2x8x1xf32> to vector<2x8x8xf32>
    %28 = arith.subf %24, %27 : vector<2x8x8xf32>
    %29 = math.exp %28 : vector<2x8x8xf32>
    %cst_13 = arith.constant dense<0.000000e+00> : vector<2x8xf32>
    %30 = vector.multi_reduction <add>, %29, %cst_13 [2] : vector<2x8x8xf32> to vector<2x8xf32>
    %31 = vector.shape_cast %30 : vector<2x8xf32> to vector<2x8x1xf32>
    %32 = tpu.reciprocal %31 {approx = true} : vector<2x8x1xf32> -> vector<2x8x1xf32>
    %33 = vector.broadcast %32 : vector<2x8x1xf32> to vector<2x8x8xf32>
    %34 = arith.mulf %29, %33 : vector<2x8x8xf32>
    %35 = arith.truncf %34 : vector<2x8x8xf32> to vector<2x8x8xbf16>
    %36 = arith.truncf %16 : vector<2x8x8xf32> to vector<2x8x8xbf16>
    "tpu.trace_start"() <{level = 10 : i32, message = "bqk,bkd->bqd"}> : () -> ()
    %cst_14 = arith.constant dense<0.000000e+00> : vector<2x8x8xf32>
    %37 = tpu.matmul %35, %36, %cst_14 {dimension_numbers = #tpu.dot_dimension_numbers<[2], [1], [1], [2], [0, 0, 0, 1, 1, 2], [0], [0]>} : vector<2x8x8xbf16>, vector<2x8x8xbf16>, vector<2x8x8xf32> -> vector<2x8x8xf32>
    "tpu.trace_stop"() : () -> ()
    %c0_15 = arith.constant 0 : index
    %c0_16 = arith.constant 0 : index
    %c0_17 = arith.constant 0 : index
    %38 = vector.load %arg24[%c0_15, %c0_16, %c0_17] : memref<2x8x32xf32, #tpu.memory_space<vmem>>, vector<2x8x8xf32>
    tpu.vector_store %arg24[%c0_15, %c0_16, %c0_17], %37 {strides = array<i32>} : memref<2x8x32xf32, #tpu.memory_space<vmem>>, vector<2x8x8xf32>,
    %39 = vector.extract_strided_slice %13 {offsets = [0, 0, 8], sizes = [2, 8, 8], strides = [1, 1, 1]} : vector<2x8x96xf32> to vector<2x8x8xf32>
    %40 = vector.extract_strided_slice %13 {offsets = [0, 0, 40], sizes = [2, 8, 8], strides = [1, 1, 1]} : vector<2x8x96xf32> to vector<2x8x8xf32>
    %41 = vector.extract_strided_slice %13 {offsets = [0, 0, 72], sizes = [2, 8, 8], strides = [1, 1, 1]} : vector<2x8x96xf32> to vector<2x8x8xf32>
    %42 = arith.truncf %39 : vector<2x8x8xf32> to vector<2x8x8xbf16>
    %43 = arith.truncf %40 : vector<2x8x8xf32> to vector<2x8x8xbf16>
    "tpu.trace_start"() <{level = 10 : i32, message = "bqd,bkd->bqk"}> : () -> ()
    %cst_18 = arith.constant dense<0.000000e+00> : vector<2x8x8xf32>
    %44 = tpu.matmul %42, %43, %cst_18 {dimension_numbers = #tpu.dot_dimension_numbers<[2], [2], [1], [1], [0, 0, 0, 1, 1, 1], [0], [0]>} : vector<2x8x8xbf16>, vector<2x8x8xbf16>, vector<2x8x8xf32> -> vector<2x8x8xf32>
    "tpu.trace_stop"() : () -> ()
    %cst_19 = arith.constant 0.353553385 : f32
    %45 = vector.broadcast %cst_19 : f32 to vector<2x8x8xf32>
    %46 = arith.mulf %44, %45 : vector<2x8x8xf32>
    %47 = vector.shape_cast %4 : vector<2x8xf32> to vector<2x1x8xf32>
    %48 = vector.broadcast %47 : vector<2x1x8xf32> to vector<2x8x8xf32>
    %49 = arith.addf %46, %48 : vector<2x8x8xf32>
    %cst_20 = arith.constant dense<0xFF800000> : vector<2x8xf32>
    %50 = vector.multi_reduction <maximumf>, %49, %cst_20 [2] : vector<2x8x8xf32> to vector<2x8xf32>
    %51 = vector.shape_cast %50 : vector<2x8xf32> to vector<2x8x1xf32>
    %52 = vector.broadcast %51 : vector<2x8x1xf32> to vector<2x8x8xf32>
    %53 = arith.subf %49, %52 : vector<2x8x8xf32>
    %54 = math.exp %53 : vector<2x8x8xf32>
    %cst_21 = arith.constant dense<0.000000e+00> : vector<2x8xf32>
    %55 = vector.multi_reduction <add>, %54, %cst_21 [2] : vector<2x8x8xf32> to vector<2x8xf32>
    %56 = vector.shape_cast %55 : vector<2x8xf32> to vector<2x8x1xf32>
    %57 = tpu.reciprocal %56 {approx = true} : vector<2x8x1xf32> -> vector<2x8x1xf32>
    %58 = vector.broadcast %57 : vector<2x8x1xf32> to vector<2x8x8xf32>
    %59 = arith.mulf %54, %58 : vector<2x8x8xf32>
    %60 = arith.truncf %59 : vector<2x8x8xf32> to vector<2x8x8xbf16>
    %61 = arith.truncf %41 : vector<2x8x8xf32> to vector<2x8x8xbf16>
    "tpu.trace_start"() <{level = 10 : i32, message = "bqk,bkd->bqd"}> : () -> ()
    %cst_22 = arith.constant dense<0.000000e+00> : vector<2x8x8xf32>
    %62 = tpu.matmul %60, %61, %cst_22 {dimension_numbers = #tpu.dot_dimension_numbers<[2], [1], [1], [2], [0, 0, 0, 1, 1, 2], [0], [0]>} : vector<2x8x8xbf16>, vector<2x8x8xbf16>, vector<2x8x8xf32> -> vector<2x8x8xf32>
    "tpu.trace_stop"() : () -> ()
    %c0_23 = arith.constant 0 : index
    %c0_24 = arith.constant 0 : index
    %c8 = arith.constant 8 : index
    %63 = vector.load %arg24[%c0_23, %c0_24, %c8] : memref<2x8x32xf32, #tpu.memory_space<vmem>>, vector<2x8x8xf32>
    tpu.vector_store %arg24[%c0_23, %c0_24, %c8], %62 {strides = array<i32>} : memref<2x8x32xf32, #tpu.memory_space<vmem>>, vector<2x8x8xf32>,
    %64 = vector.extract_strided_slice %13 {offsets = [0, 0, 16], sizes = [2, 8, 8], strides = [1, 1, 1]} : vector<2x8x96xf32> to vector<2x8x8xf32>
    %65 = vector.extract_strided_slice %13 {offsets = [0, 0, 48], sizes = [2, 8, 8], strides = [1, 1, 1]} : vector<2x8x96xf32> to vector<2x8x8xf32>
    %66 = vector.extract_strided_slice %13 {offsets = [0, 0, 80], sizes = [2, 8, 8], strides = [1, 1, 1]} : vector<2x8x96xf32> to vector<2x8x8xf32>
    %67 = arith.truncf %64 : vector<2x8x8xf32> to vector<2x8x8xbf16>
    %68 = arith.truncf %65 : vector<2x8x8xf32> to vector<2x8x8xbf16>
    "tpu.trace_start"() <{level = 10 : i32, message = "bqd,bkd->bqk"}> : () -> ()
    %cst_25 = arith.constant dense<0.000000e+00> : vector<2x8x8xf32>
    %69 = tpu.matmul %67, %68, %cst_25 {dimension_numbers = #tpu.dot_dimension_numbers<[2], [2], [1], [1], [0, 0, 0, 1, 1, 1], [0], [0]>} : vector<2x8x8xbf16>, vector<2x8x8xbf16>, vector<2x8x8xf32> -> vector<2x8x8xf32>
    "tpu.trace_stop"() : () -> ()
    %cst_26 = arith.constant 0.353553385 : f32
    %70 = vector.broadcast %cst_26 : f32 to vector<2x8x8xf32>
    %71 = arith.mulf %69, %70 : vector<2x8x8xf32>
    %72 = vector.shape_cast %4 : vector<2x8xf32> to vector<2x1x8xf32>
    %73 = vector.broadcast %72 : vector<2x1x8xf32> to vector<2x8x8xf32>
    %74 = arith.addf %71, %73 : vector<2x8x8xf32>
    %cst_27 = arith.constant dense<0xFF800000> : vector<2x8xf32>
    %75 = vector.multi_reduction <maximumf>, %74, %cst_27 [2] : vector<2x8x8xf32> to vector<2x8xf32>
    %76 = vector.shape_cast %75 : vector<2x8xf32> to vector<2x8x1xf32>
    %77 = vector.broadcast %76 : vector<2x8x1xf32> to vector<2x8x8xf32>
    %78 = arith.subf %74, %77 : vector<2x8x8xf32>
    %79 = math.exp %78 : vector<2x8x8xf32>
    %cst_28 = arith.constant dense<0.000000e+00> : vector<2x8xf32>
    %80 = vector.multi_reduction <add>, %79, %cst_28 [2] : vector<2x8x8xf32> to vector<2x8xf32>
    %81 = vector.shape_cast %80 : vector<2x8xf32> to vector<2x8x1xf32>
    %82 = tpu.reciprocal %81 {approx = true} : vector<2x8x1xf32> -> vector<2x8x1xf32>
    %83 = vector.broadcast %82 : vector<2x8x1xf32> to vector<2x8x8xf32>
    %84 = arith.mulf %79, %83 : vector<2x8x8xf32>
    %85 = arith.truncf %84 : vector<2x8x8xf32> to vector<2x8x8xbf16>
    %86 = arith.truncf %66 : vector<2x8x8xf32> to vector<2x8x8xbf16>
    "tpu.trace_start"() <{level = 10 : i32, message = "bqk,bkd->bqd"}> : () -> ()
    %cst_29 = arith.constant dense<0.000000e+00> : vector<2x8x8xf32>
    %87 = tpu.matmul %85, %86, %cst_29 {dimension_numbers = #tpu.dot_dimension_numbers<[2], [1], [1], [2], [0, 0, 0, 1, 1, 2], [0], [0]>} : vector<2x8x8xbf16>, vector<2x8x8xbf16>, vector<2x8x8xf32> -> vector<2x8x8xf32>
    "tpu.trace_stop"() : () -> ()
    %c0_30 = arith.constant 0 : index
    %c0_31 = arith.constant 0 : index
    %c16 = arith.constant 16 : index
    %88 = vector.load %arg24[%c0_30, %c0_31, %c16] : memref<2x8x32xf32, #tpu.memory_space<vmem>>, vector<2x8x8xf32>
    tpu.vector_store %arg24[%c0_30, %c0_31, %c16], %87 {strides = array<i32>} : memref<2x8x32xf32, #tpu.memory_space<vmem>>, vector<2x8x8xf32>,
    %89 = vector.extract_strided_slice %13 {offsets = [0, 0, 24], sizes = [2, 8, 8], strides = [1, 1, 1]} : vector<2x8x96xf32> to vector<2x8x8xf32>
    %90 = vector.extract_strided_slice %13 {offsets = [0, 0, 56], sizes = [2, 8, 8], strides = [1, 1, 1]} : vector<2x8x96xf32> to vector<2x8x8xf32>
    %91 = vector.extract_strided_slice %13 {offsets = [0, 0, 88], sizes = [2, 8, 8], strides = [1, 1, 1]} : vector<2x8x96xf32> to vector<2x8x8xf32>
    %92 = arith.truncf %89 : vector<2x8x8xf32> to vector<2x8x8xbf16>
    %93 = arith.truncf %90 : vector<2x8x8xf32> to vector<2x8x8xbf16>
    "tpu.trace_start"() <{level = 10 : i32, message = "bqd,bkd->bqk"}> : () -> ()
    %cst_32 = arith.constant dense<0.000000e+00> : vector<2x8x8xf32>
    %94 = tpu.matmul %92, %93, %cst_32 {dimension_numbers = #tpu.dot_dimension_numbers<[2], [2], [1], [1], [0, 0, 0, 1, 1, 1], [0], [0]>} : vector<2x8x8xbf16>, vector<2x8x8xbf16>, vector<2x8x8xf32> -> vector<2x8x8xf32>
    "tpu.trace_stop"() : () -> ()
    %cst_33 = arith.constant 0.353553385 : f32
    %95 = vector.broadcast %cst_33 : f32 to vector<2x8x8xf32>
    %96 = arith.mulf %94, %95 : vector<2x8x8xf32>
    %97 = vector.shape_cast %4 : vector<2x8xf32> to vector<2x1x8xf32>
    %98 = vector.broadcast %97 : vector<2x1x8xf32> to vector<2x8x8xf32>
    %99 = arith.addf %96, %98 : vector<2x8x8xf32>
    %cst_34 = arith.constant dense<0xFF800000> : vector<2x8xf32>
    %100 = vector.multi_reduction <maximumf>, %99, %cst_34 [2] : vector<2x8x8xf32> to vector<2x8xf32>
    %101 = vector.shape_cast %100 : vector<2x8xf32> to vector<2x8x1xf32>
    %102 = vector.broadcast %101 : vector<2x8x1xf32> to vector<2x8x8xf32>
    %103 = arith.subf %99, %102 : vector<2x8x8xf32>
    %104 = math.exp %103 : vector<2x8x8xf32>
    %cst_35 = arith.constant dense<0.000000e+00> : vector<2x8xf32>
    %105 = vector.multi_reduction <add>, %104, %cst_35 [2] : vector<2x8x8xf32> to vector<2x8xf32>
    %106 = vector.shape_cast %105 : vector<2x8xf32> to vector<2x8x1xf32>
    %107 = tpu.reciprocal %106 {approx = true} : vector<2x8x1xf32> -> vector<2x8x1xf32>
    %108 = vector.broadcast %107 : vector<2x8x1xf32> to vector<2x8x8xf32>
    %109 = arith.mulf %104, %108 : vector<2x8x8xf32>
    %110 = arith.truncf %109 : vector<2x8x8xf32> to vector<2x8x8xbf16>
    %111 = arith.truncf %91 : vector<2x8x8xf32> to vector<2x8x8xbf16>
    "tpu.trace_start"() <{level = 10 : i32, message = "bqk,bkd->bqd"}> : () -> ()
    %cst_36 = arith.constant dense<0.000000e+00> : vector<2x8x8xf32>
    %112 = tpu.matmul %110, %111, %cst_36 {dimension_numbers = #tpu.dot_dimension_numbers<[2], [1], [1], [2], [0, 0, 0, 1, 1, 2], [0], [0]>} : vector<2x8x8xbf16>, vector<2x8x8xbf16>, vector<2x8x8xf32> -> vector<2x8x8xf32>
    "tpu.trace_stop"() : () -> ()
    %c0_37 = arith.constant 0 : index
    %c0_38 = arith.constant 0 : index
    %c24 = arith.constant 24 : index
    %113 = vector.load %arg24[%c0_37, %c0_38, %c24] : memref<2x8x32xf32, #tpu.memory_space<vmem>>, vector<2x8x8xf32>
    tpu.vector_store %arg24[%c0_37, %c0_38, %c24], %112 {strides = array<i32>} : memref<2x8x32xf32, #tpu.memory_space<vmem>>, vector<2x8x8xf32>,
    %c0_39 = arith.constant 0 : index
    %c0_40 = arith.constant 0 : index
    %c0_41 = arith.constant 0 : index
    %114 = vector.load %arg24[%c0_39, %c0_40, %c0_41] : memref<2x8x32xf32, #tpu.memory_space<vmem>>, vector<2x8x32xf32>
    %115 = vector.shape_cast %114 : vector<2x8x32xf32> to vector<16x32xf32>
    %116 = arith.truncf %115 : vector<16x32xf32> to vector<16x32xbf16>
    %c0_42 = arith.constant 0 : index
    %c0_43 = arith.constant 0 : index
    %c0_44 = arith.constant 0 : index
    %117 = vector.load %arg8[%c0_42, %c0_43, %c0_44] : memref<1x32x32xbf16, #tpu.memory_space<vmem>>, vector<1x32x32xbf16>
    %118 = vector.shape_cast %117 : vector<1x32x32xbf16> to vector<32x32xbf16>
    %cst_45 = arith.constant dense<0.000000e+00> : vector<16x32xf32>
    %119 = tpu.matmul %116, %118, %cst_45 {dimension_numbers = #tpu.dot_dimension_numbers<[1], [0], [0], [1], [0, 0, 1, 1], [], []>} : vector<16x32xbf16>, vector<32x32xbf16>, vector<16x32xf32> -> vector<16x32xf32>
    %c0_46 = arith.constant 0 : index
    %c0_47 = arith.constant 0 : index
    %c0_48 = arith.constant 0 : index
    %120 = vector.load %arg9[%c0_46, %c0_47, %c0_48] : memref<1x1x32xf32, #tpu.memory_space<vmem>>, vector<1x1x32xf32>
    %121 = vector.shape_cast %120 : vector<1x1x32xf32> to vector<1x32xf32>
    %122 = vector.broadcast %121 : vector<1x32xf32> to vector<16x32xf32>
    %123 = arith.addf %119, %122 : vector<16x32xf32>
    %124 = arith.addf %123, %3 : vector<16x32xf32>
    %c0_49 = arith.constant 0 : index
    %c0_50 = arith.constant 0 : index
    %c0_51 = arith.constant 0 : index
    %125 = vector.load %arg10[%c0_49, %c0_50, %c0_51] : memref<1x1x32xf32, #tpu.memory_space<vmem>>, vector<1x1x32xf32>
    %126 = vector.shape_cast %125 : vector<1x1x32xf32> to vector<1x32xf32>
    %c0_52 = arith.constant 0 : index
    %c0_53 = arith.constant 0 : index
    %c0_54 = arith.constant 0 : index
    %127 = vector.load %arg11[%c0_52, %c0_53, %c0_54] : memref<1x1x32xf32, #tpu.memory_space<vmem>>, vector<1x1x32xf32>
    %128 = vector.shape_cast %127 : vector<1x1x32xf32> to vector<1x32xf32>
    %cst_55 = arith.constant dense<0.000000e+00> : vector<16xf32>
    %129 = vector.multi_reduction <add>, %124, %cst_55 [1] : vector<16x32xf32> to vector<16xf32>
    %130 = vector.shape_cast %129 : vector<16xf32> to vector<16x1xf32>
    %cst_56 = arith.constant 3.200000e+01 : f32
    %131 = vector.broadcast %cst_56 : f32 to vector<16x1xf32>
    %132 = arith.divf %130, %131 : vector<16x1xf32>
    %133 = vector.broadcast %132 : vector<16x1xf32> to vector<16x32xf32>
    %134 = arith.subf %124, %133 : vector<16x32xf32>
    %135 = arith.mulf %134, %134 : vector<16x32xf32>
    %cst_57 = arith.constant dense<0.000000e+00> : vector<16xf32>
    %136 = vector.multi_reduction <add>, %135, %cst_57 [1] : vector<16x32xf32> to vector<16xf32>
    %137 = vector.shape_cast %136 : vector<16xf32> to vector<16x1xf32>
    %cst_58 = arith.constant 3.200000e+01 : f32
    %138 = vector.broadcast %cst_58 : f32 to vector<16x1xf32>
    %139 = arith.divf %137, %138 : vector<16x1xf32>
    %cst_59 = arith.constant 9.99999996E-13 : f32
    %140 = vector.broadcast %cst_59 : f32 to vector<16x1xf32>
    %141 = arith.addf %139, %140 : vector<16x1xf32>
    %142 = math.rsqrt %141 : vector<16x1xf32>
    %143 = vector.broadcast %142 : vector<16x1xf32> to vector<16x32xf32>
    %144 = arith.mulf %134, %143 : vector<16x32xf32>
    %145 = vector.broadcast %126 : vector<1x32xf32> to vector<16x32xf32>
    %146 = arith.mulf %144, %145 : vector<16x32xf32>
    %147 = vector.broadcast %128 : vector<1x32xf32> to vector<16x32xf32>
    %148 = arith.addf %146, %147 : vector<16x32xf32>
    %149 = arith.truncf %148 : vector<16x32xf32> to vector<16x32xbf16>
    %c0_60 = arith.constant 0 : index
    %c0_61 = arith.constant 0 : index
    %c0_62 = arith.constant 0 : index
    %150 = vector.load %arg12[%c0_60, %c0_61, %c0_62] : memref<1x32x64xbf16, #tpu.memory_space<vmem>>, vector<1x32x64xbf16>
    %151 = vector.shape_cast %150 : vector<1x32x64xbf16> to vector<32x64xbf16>
    %cst_63 = arith.constant dense<0.000000e+00> : vector<16x64xf32>
    %152 = tpu.matmul %149, %151, %cst_63 {dimension_numbers = #tpu.dot_dimension_numbers<[1], [0], [0], [1], [0, 0, 1, 1], [], []>} : vector<16x32xbf16>, vector<32x64xbf16>, vector<16x64xf32> -> vector<16x64xf32>
    %c0_64 = arith.constant 0 : index
    %c0_65 = arith.constant 0 : index
    %c0_66 = arith.constant 0 : index
    %153 = vector.load %arg13[%c0_64, %c0_65, %c0_66] : memref<1x1x64xf32, #tpu.memory_space<vmem>>, vector<1x1x64xf32>
    %154 = vector.shape_cast %153 : vector<1x1x64xf32> to vector<1x64xf32>
    %155 = vector.broadcast %154 : vector<1x64xf32> to vector<16x64xf32>
    %156 = arith.addf %152, %155 : vector<16x64xf32>
    %cst_67 = arith.constant 5.000000e-01 : f32
    %157 = vector.broadcast %cst_67 : f32 to vector<16x64xf32>
    %158 = arith.mulf %157, %156 : vector<16x64xf32>
    %cst_68 = arith.constant 0.707106769 : f32
    %159 = vector.broadcast %cst_68 : f32 to vector<16x64xf32>
    %160 = arith.mulf %156, %159 : vector<16x64xf32>
    %161 = math.absf %160 : vector<16x64xf32>
    %cst_69 = arith.constant 0.327591091 : f32
    %162 = vector.broadcast %cst_69 : f32 to vector<16x64xf32>
    %163 = arith.mulf %162, %161 : vector<16x64xf32>
    %cst_70 = arith.constant 1.000000e+00 : f32
    %164 = vector.broadcast %cst_70 : f32 to vector<16x64xf32>
    %165 = arith.addf %164, %163 : vector<16x64xf32>
    %166 = tpu.reciprocal %165 {approx = true} : vector<16x64xf32> -> vector<16x64xf32>
    %cst_71 = arith.constant 1.06140542 : f32
    %167 = vector.broadcast %cst_71 : f32 to vector<16x64xf32>
    %168 = arith.mulf %167, %166 : vector<16x64xf32>
    %cst_72 = arith.constant -1.45315206 : f32
    %169 = vector.broadcast %cst_72 : f32 to vector<16x64xf32>
    %170 = arith.addf %168, %169 : vector<16x64xf32>
    %171 = arith.mulf %170, %166 : vector<16x64xf32>
    %cst_73 = arith.constant 1.42141378 : f32
    %172 = vector.broadcast %cst_73 : f32 to vector<16x64xf32>
    %173 = arith.addf %171, %172 : vector<16x64xf32>
    %174 = arith.mulf %173, %166 : vector<16x64xf32>
    %cst_74 = arith.constant -0.284496725 : f32
    %175 = vector.broadcast %cst_74 : f32 to vector<16x64xf32>
    %176 = arith.addf %174, %175 : vector<16x64xf32>
    %177 = arith.mulf %176, %166 : vector<16x64xf32>
    %cst_75 = arith.constant 0.254829586 : f32
    %178 = vector.broadcast %cst_75 : f32 to vector<16x64xf32>
    %179 = arith.addf %177, %178 : vector<16x64xf32>
    %180 = arith.mulf %179, %166 : vector<16x64xf32>
    %cst_76 = arith.constant 0.000000e+00 : f32
    %181 = vector.broadcast %cst_76 : f32 to vector<16x64xf32>
    %182 = arith.subf %181, %161 : vector<16x64xf32>
    %183 = arith.mulf %182, %161 : vector<16x64xf32>
    %184 = math.exp %183 : vector<16x64xf32>
    %185 = arith.mulf %180, %184 : vector<16x64xf32>
    %cst_77 = arith.constant 1.000000e+00 : f32
    %186 = vector.broadcast %cst_77 : f32 to vector<16x64xf32>
    %187 = arith.subf %186, %185 : vector<16x64xf32>
    %cst_78 = arith.constant 0.000000e+00 : f32
    %188 = vector.broadcast %cst_78 : f32 to vector<16x64xf32>
    %189 = arith.cmpf oge, %160, %188 : vector<16x64xf32>
    %cst_79 = arith.constant 0.000000e+00 : f32
    %190 = vector.broadcast %cst_79 : f32 to vector<16x64xf32>
    %191 = arith.subf %190, %187 : vector<16x64xf32>
    %192 = arith.select %189, %187, %191 : vector<16x64xi1>, vector<16x64xf32>
    %cst_80 = arith.constant 1.000000e+00 : f32
    %193 = vector.broadcast %cst_80 : f32 to vector<16x64xf32>
    %194 = arith.addf %193, %192 : vector<16x64xf32>
    %195 = arith.mulf %158, %194 : vector<16x64xf32>
    %196 = arith.truncf %195 : vector<16x64xf32> to vector<16x64xbf16>
    %c0_81 = arith.constant 0 : index
    %c0_82 = arith.constant 0 : index
    %c0_83 = arith.constant 0 : index
    %197 = vector.load %arg14[%c0_81, %c0_82, %c0_83] : memref<1x64x32xbf16, #tpu.memory_space<vmem>>, vector<1x64x32xbf16>
    %198 = vector.shape_cast %197 : vector<1x64x32xbf16> to vector<64x32xbf16>
    %cst_84 = arith.constant dense<0.000000e+00> : vector<16x32xf32>
    %199 = tpu.matmul %196, %198, %cst_84 {dimension_numbers = #tpu.dot_dimension_numbers<[1], [0], [0], [1], [0, 0, 1, 1], [], []>} : vector<16x64xbf16>, vector<64x32xbf16>, vector<16x32xf32> -> vector<16x32xf32>
    %c0_85 = arith.constant 0 : index
    %c0_86 = arith.constant 0 : index
    %c0_87 = arith.constant 0 : index
    %200 = vector.load %arg15[%c0_85, %c0_86, %c0_87] : memref<1x1x32xf32, #tpu.memory_space<vmem>>, vector<1x1x32xf32>
    %201 = vector.shape_cast %200 : vector<1x1x32xf32> to vector<1x32xf32>
    %202 = vector.broadcast %201 : vector<1x32xf32> to vector<16x32xf32>
    %203 = arith.addf %199, %202 : vector<16x32xf32>
    %204 = arith.addf %203, %148 : vector<16x32xf32>
    %c0_88 = arith.constant 0 : index
    %c0_89 = arith.constant 0 : index
    %c0_90 = arith.constant 0 : index
    %205 = vector.load %arg16[%c0_88, %c0_89, %c0_90] : memref<1x1x32xf32, #tpu.memory_space<vmem>>, vector<1x1x32xf32>
    %206 = vector.shape_cast %205 : vector<1x1x32xf32> to vector<1x32xf32>
    %c0_91 = arith.constant 0 : index
    %c0_92 = arith.constant 0 : index
    %c0_93 = arith.constant 0 : index
    %207 = vector.load %arg17[%c0_91, %c0_92, %c0_93] : memref<1x1x32xf32, #tpu.memory_space<vmem>>, vector<1x1x32xf32>
    %208 = vector.shape_cast %207 : vector<1x1x32xf32> to vector<1x32xf32>
    %cst_94 = arith.constant dense<0.000000e+00> : vector<16xf32>
    %209 = vector.multi_reduction <add>, %204, %cst_94 [1] : vector<16x32xf32> to vector<16xf32>
    %210 = vector.shape_cast %209 : vector<16xf32> to vector<16x1xf32>
    %cst_95 = arith.constant 3.200000e+01 : f32
    %211 = vector.broadcast %cst_95 : f32 to vector<16x1xf32>
    %212 = arith.divf %210, %211 : vector<16x1xf32>
    %213 = vector.broadcast %212 : vector<16x1xf32> to vector<16x32xf32>
    %214 = arith.subf %204, %213 : vector<16x32xf32>
    %215 = arith.mulf %214, %214 : vector<16x32xf32>
    %cst_96 = arith.constant dense<0.000000e+00> : vector<16xf32>
    %216 = vector.multi_reduction <add>, %215, %cst_96 [1] : vector<16x32xf32> to vector<16xf32>
    %217 = vector.shape_cast %216 : vector<16xf32> to vector<16x1xf32>
    %cst_97 = arith.constant 3.200000e+01 : f32
    %218 = vector.broadcast %cst_97 : f32 to vector<16x1xf32>
    %219 = arith.divf %217, %218 : vector<16x1xf32>
    %cst_98 = arith.constant 9.99999996E-13 : f32
    %220 = vector.broadcast %cst_98 : f32 to vector<16x1xf32>
    %221 = arith.addf %219, %220 : vector<16x1xf32>
    %222 = math.rsqrt %221 : vector<16x1xf32>
    %223 = vector.broadcast %222 : vector<16x1xf32> to vector<16x32xf32>
    %224 = arith.mulf %214, %223 : vector<16x32xf32>
    %225 = vector.broadcast %206 : vector<1x32xf32> to vector<16x32xf32>
    %226 = arith.mulf %224, %225 : vector<16x32xf32>
    %227 = vector.broadcast %208 : vector<1x32xf32> to vector<16x32xf32>
    %228 = arith.addf %226, %227 : vector<16x32xf32>
    %c0_99 = arith.constant 0 : index
    %c0_100 = arith.constant 0 : index
    %229 = vector.load %arg23[%c0_99, %c0_100] : memref<16x32xf32, #tpu.memory_space<vmem>>, vector<16x32xf32>
    tpu.vector_store %arg23[%c0_99, %c0_100], %228 {strides = array<i32>} : memref<16x32xf32, #tpu.memory_space<vmem>>, vector<16x32xf32>,
    %c1_i32 = arith.constant 1 : i32
    %230 = arith.cmpi eq, %arg0, %c1_i32 : i32
    %231 = arith.extui %230 : i1 to i32
    %c0_i32_101 = arith.constant 0 : i32
    %232 = arith.cmpi ne, %231, %c0_i32_101 : i32
    scf.if %232 {
      %c0_102 = arith.constant 0 : index
      %c0_103 = arith.constant 0 : index
      %233 = vector.load %arg3[%c0_102, %c0_103] : memref<2x16xf32, #tpu.memory_space<vmem>>, vector<2x16xf32>
      %cst_104 = arith.constant dense<0.000000e+00> : vector<2x32xf32>
      %234 = tpu.matmul %233, %228, %cst_104 {dimension_numbers = #tpu.dot_dimension_numbers<[1], [0], [0], [1], [0, 0, 1, 1], [], []>} : vector<2x16xf32>, vector<16x32xf32>, vector<2x32xf32> -> vector<2x32xf32>
      %235 = arith.truncf %234 : vector<2x32xf32> to vector<2x32xbf16>
      %c0_105 = arith.constant 0 : index
      %c0_106 = arith.constant 0 : index
      %236 = vector.load %arg18[%c0_105, %c0_106] : memref<32x32xbf16, #tpu.memory_space<vmem>>, vector<32x32xbf16>
      %cst_107 = arith.constant dense<0.000000e+00> : vector<2x32xf32>
      %237 = tpu.matmul %235, %236, %cst_107 {dimension_numbers = #tpu.dot_dimension_numbers<[1], [0], [0], [1], [0, 0, 1, 1], [], []>} : vector<2x32xbf16>, vector<32x32xbf16>, vector<2x32xf32> -> vector<2x32xf32>
      %c0_108 = arith.constant 0 : index
      %c0_109 = arith.constant 0 : index
      %238 = vector.load %arg19[%c0_108, %c0_109] : memref<1x32xf32, #tpu.memory_space<vmem>>, vector<1x32xf32>
      %239 = vector.broadcast %238 : vector<1x32xf32> to vector<2x32xf32>
      %240 = arith.addf %237, %239 : vector<2x32xf32>
      %241 = math.tanh %240 : vector<2x32xf32>
      %242 = arith.truncf %241 : vector<2x32xf32> to vector<2x32xbf16>
      %c0_110 = arith.constant 0 : index
      %c0_111 = arith.constant 0 : index
      %243 = vector.load %arg20[%c0_110, %c0_111] : memref<32x3xbf16, #tpu.memory_space<vmem>>, vector<32x3xbf16>
      %cst_112 = arith.constant dense<0.000000e+00> : vector<2x3xf32>
      %244 = tpu.matmul %242, %243, %cst_112 {dimension_numbers = #tpu.dot_dimension_numbers<[1], [0], [0], [1], [0, 0, 1, 1], [], []>} : vector<2x32xbf16>, vector<32x3xbf16>, vector<2x3xf32> -> vector<2x3xf32>
      %c0_113 = arith.constant 0 : index
      %c0_114 = arith.constant 0 : index
      %245 = vector.load %arg21[%c0_113, %c0_114] : memref<1x3xf32, #tpu.memory_space<vmem>>, vector<1x3xf32>
      %246 = vector.broadcast %245 : vector<1x3xf32> to vector<2x3xf32>
      %247 = arith.addf %244, %246 : vector<2x3xf32>
      %c0_115 = arith.constant 0 : index
      %c0_116 = arith.constant 0 : index
      %248 = vector.load %arg22[%c0_115, %c0_116] : memref<2x3xf32, #tpu.memory_space<vmem>>, vector<2x3xf32>
      tpu.vector_store %arg22[%c0_115, %c0_116], %247 {strides = array<i32>} : memref<2x3xf32, #tpu.memory_space<vmem>>, vector<2x3xf32>,
    } else {
    }
    return
  }
  func.func @transform_0(%arg0: i32) -> (i32, i32) {
    %c0_i32 = arith.constant 0 : i32
    %c0_i32_0 = arith.constant 0 : i32
    %c0_i32_1 = arith.constant 0 : i32
    return %c0_i32, %c0_i32_0 : i32, i32
  }
  func.func @transform_1(%arg0: i32) -> (i32, i32) {
    %c0_i32 = arith.constant 0 : i32
    %c0_i32_0 = arith.constant 0 : i32
    %c0_i32_1 = arith.constant 0 : i32
    return %c0_i32, %c0_i32_0 : i32, i32
  }
  func.func @transform_2(%arg0: i32) -> (i32, i32) {
    %c0_i32 = arith.constant 0 : i32
    %c0_i32_0 = arith.constant 0 : i32
    %c0_i32_1 = arith.constant 0 : i32
    return %c0_i32, %c0_i32_0 : i32, i32
  }
  func.func @transform_3(%arg0: i32) -> (i32, i32) {
    %c0_i32 = arith.constant 0 : i32
    %c0_i32_0 = arith.constant 0 : i32
    %c0_i32_1 = arith.constant 0 : i32
    return %c0_i32, %c0_i32_0 : i32, i32
  }
  func.func @transform_4(%arg0: i32) -> (i32, i32) {
    %c0_i32 = arith.constant 0 : i32
    %c0_i32_0 = arith.constant 0 : i32
    %c0_i32_1 = arith.constant 0 : i32
    return %c0_i32, %c0_i32_0 : i32, i32
  }
  func.func @transform_5(%arg0: i32) -> (i32, i32, i32) {
    %c0_i32 = arith.constant 0 : i32
    %c0_i32_0 = arith.constant 0 : i32
    %c0_i32_1 = arith.constant 0 : i32
    return %arg0, %c0_i32, %c0_i32_0 : i32, i32, i32
  }
  func.func @transform_6(%arg0: i32) -> (i32, i32, i32) {
    %c0_i32 = arith.constant 0 : i32
    %c0_i32_0 = arith.constant 0 : i32
    %c0_i32_1 = arith.constant 0 : i32
    return %arg0, %c0_i32, %c0_i32_0 : i32, i32, i32
  }
  func.func @transform_7(%arg0: i32) -> (i32, i32, i32) {
    %c0_i32 = arith.constant 0 : i32
    %c0_i32_0 = arith.constant 0 : i32
    %c0_i32_1 = arith.constant 0 : i32
    return %arg0, %c0_i32, %c0_i32_0 : i32, i32, i32
  }
  func.func @transform_8(%arg0: i32) -> (i32, i32, i32) {
    %c0_i32 = arith.constant 0 : i32
    %c0_i32_0 = arith.constant 0 : i32
    %c0_i32_1 = arith.constant 0 : i32
    return %arg0, %c0_i32, %c0_i32_0 : i32, i32, i32
  }
  func.func @transform_9(%arg0: i32) -> (i32, i32, i32) {
    %c0_i32 = arith.constant 0 : i32
    %c0_i32_0 = arith.constant 0 : i32
    %c0_i32_1 = arith.constant 0 : i32
    return %arg0, %c0_i32, %c0_i32_0 : i32, i32, i32
  }
  func.func @transform_10(%arg0: i32) -> (i32, i32, i32) {
    %c0_i32 = arith.constant 0 : i32
    %c0_i32_0 = arith.constant 0 : i32
    %c0_i32_1 = arith.constant 0 : i32
    return %arg0, %c0_i32, %c0_i32_0 : i32, i32, i32
  }
  func.func @transform_11(%arg0: i32) -> (i32, i32, i32) {
    %c0_i32 = arith.constant 0 : i32
    %c0_i32_0 = arith.constant 0 : i32
    %c0_i32_1 = arith.constant 0 : i32
    return %arg0, %c0_i32, %c0_i32_0 : i32, i32, i32
  }
  func.func @transform_12(%arg0: i32) -> (i32, i32, i32) {
    %c0_i32 = arith.constant 0 : i32
    %c0_i32_0 = arith.constant 0 : i32
    %c0_i32_1 = arith.constant 0 : i32
    return %arg0, %c0_i32, %c0_i32_0 : i32, i32, i32
  }
  func.func @transform_13(%arg0: i32) -> (i32, i32, i32) {
    %c0_i32 = arith.constant 0 : i32
    %c0_i32_0 = arith.constant 0 : i32
    %c0_i32_1 = arith.constant 0 : i32
    return %arg0, %c0_i32, %c0_i32_0 : i32, i32, i32
  }
  func.func @transform_14(%arg0: i32) -> (i32, i32, i32) {
    %c0_i32 = arith.constant 0 : i32
    %c0_i32_0 = arith.constant 0 : i32
    %c0_i32_1 = arith.constant 0 : i32
    return %arg0, %c0_i32, %c0_i32_0 : i32, i32, i32
  }
  func.func @transform_15(%arg0: i32) -> (i32, i32, i32) {
    %c0_i32 = arith.constant 0 : i32
    %c0_i32_0 = arith.constant 0 : i32
    %c0_i32_1 = arith.constant 0 : i32
    return %arg0, %c0_i32, %c0_i32_0 : i32, i32, i32
  }
  func.func @transform_16(%arg0: i32) -> (i32, i32, i32) {
    %c0_i32 = arith.constant 0 : i32
    %c0_i32_0 = arith.constant 0 : i32
    %c0_i32_1 = arith.constant 0 : i32
    return %arg0, %c0_i32, %c0_i32_0 : i32, i32, i32
  }
  func.func @transform_17(%arg0: i32) -> (i32, i32) {
    %c0_i32 = arith.constant 0 : i32
    %c0_i32_0 = arith.constant 0 : i32
    %c0_i32_1 = arith.constant 0 : i32
    return %c0_i32, %c0_i32_0 : i32, i32
  }
  func.func @transform_18(%arg0: i32) -> (i32, i32) {
    %c0_i32 = arith.constant 0 : i32
    %c0_i32_0 = arith.constant 0 : i32
    %c0_i32_1 = arith.constant 0 : i32
    return %c0_i32, %c0_i32_0 : i32, i32
  }
  func.func @transform_19(%arg0: i32) -> (i32, i32) {
    %c0_i32 = arith.constant 0 : i32
    %c0_i32_0 = arith.constant 0 : i32
    %c0_i32_1 = arith.constant 0 : i32
    return %c0_i32, %c0_i32_0 : i32, i32
  }
  func.func @transform_20(%arg0: i32) -> (i32, i32) {
    %c0_i32 = arith.constant 0 : i32
    %c0_i32_0 = arith.constant 0 : i32
    %c0_i32_1 = arith.constant 0 : i32
    return %c0_i32, %c0_i32_0 : i32, i32
  }
  func.func @transform_21(%arg0: i32) -> (i32, i32) {
    %c0_i32 = arith.constant 0 : i32
    %c0_i32_0 = arith.constant 0 : i32
    %c0_i32_1 = arith.constant 0 : i32
    return %c0_i32, %c0_i32_0 : i32, i32
  }
}

</mosaic_0001>

<llo_original>
// kernel: bert_forward.1
$region0: #{bert_forward.1}
  #allocation0 [shape = 'u32[]', space=smem, size = 0x4, offset = 0x4, fixed_abs, tag = 'smem constant byte address 0x4 - core index']
  #allocation1 [shape = 'u32[144,128]{1,0:T(1,128)}', space=vmem, size = 0x12000, scoped, tag = 'internal scratch']
  #allocation2 [shape = 'f32[16,32]{1,0:T(8,128)}', space=vmem, size = 0x2000, scoped, tag = 'scratch operand']
  #allocation3 [shape = 'f32[2,8,32]{2,1,0:T(8,128)}', space=vmem, size = 0x2000, scoped, tag = 'scratch operand']
  %s0 = inlined_call_operand.vmem [shape: f32[16,32], index: 0, kind: input, shape index: {}]
  %s1 = inlined_call_operand.vmem [shape: f32[2,8], index: 1, kind: input, shape index: {}]
  %s2 = inlined_call_operand.vmem [shape: f32[2,16], index: 2, kind: input, shape index: {}]
  %s3 = inlined_call_operand.vmem [shape: f32[1,32], index: 3, kind: input, shape index: {}]
  %s4 = inlined_call_operand.vmem [shape: f32[1,32], index: 4, kind: input, shape index: {}]
  %s5 = inlined_call_operand.vmem [shape: bf16[2,32,96], index: 5, kind: input, shape index: {}]
  %s6 = inlined_call_operand.vmem [shape: f32[2,1,96], index: 6, kind: input, shape index: {}]
  %s7 = inlined_call_operand.vmem [shape: bf16[2,32,32], index: 7, kind: input, shape index: {}]
  %s8 = inlined_call_operand.vmem [shape: f32[2,1,32], index: 8, kind: input, shape index: {}]
  %s9 = inlined_call_operand.vmem [shape: f32[2,1,32], index: 9, kind: input, shape index: {}]
  %s10 = inlined_call_operand.vmem [shape: f32[2,1,32], index: 10, kind: input, shape index: {}]
  %s11 = inlined_call_operand.vmem [shape: bf16[2,32,64], index: 11, kind: input, shape index: {}]
  %s12 = inlined_call_operand.vmem [shape: f32[2,1,64], index: 12, kind: input, shape index: {}]
  %s13 = inlined_call_operand.vmem [shape: bf16[2,64,32], index: 13, kind: input, shape index: {}]
  %s14 = inlined_call_operand.vmem [shape: f32[2,1,32], index: 14, kind: input, shape index: {}]
  %s15 = inlined_call_operand.vmem [shape: f32[2,1,32], index: 15, kind: input, shape index: {}]
  %s16 = inlined_call_operand.vmem [shape: f32[2,1,32], index: 16, kind: input, shape index: {}]
  %s17 = inlined_call_operand.vmem [shape: bf16[32,32], index: 17, kind: input, shape index: {}]
  %s18 = inlined_call_operand.vmem [shape: f32[1,32], index: 18, kind: input, shape index: {}]
  %s19 = inlined_call_operand.vmem [shape: bf16[32,3], index: 19, kind: input, shape index: {}]
  %s20 = inlined_call_operand.vmem [shape: f32[1,3], index: 20, kind: input, shape index: {}]
  %s21 = inlined_call_operand.hbm [shape: f32[2,3], index: 21, kind: output, shape index: {}]
  %s22 = sld [smem:[#allocation0]]
  $region125: #{bert_forward.1} parent=0
    _
  %s24 = ssub.s32 1, %s22
  %s25 = scalar_select 0, %s24, %s22
  $region1: #{bert_forward.1} parent=0
    #allocation4 [shape = 'u8[1024]{0}', space=vmem, size = 0x400, scoped, tag = 'output window, operand 0, single buffered']
    #allocation5 [shape = 's32[2]{0}', space=sflag, size = 0x8, scoped, tag = 'scoped memory for bert_forward.1']
    %26 = vsyncpa [#allocation5], 0
    loop: start=0, step=1, limit=4
    $region2: #{bert_forward.1} parent=1 // loop_pre_header
      _
    $region3: #{bert_forward.1} parent=1 // loop_header
      %s28 = sphi 0, %s32
      %p29 = scmp.ge.s32.totalorder %s28, 4
      %s36 = sphi 0, %s36
      %s38 = sphi 0, %s36
      %s39 = sphi 0, %s38
      %s53 = sphi 0, %s39
      %s57 = sphi 0, %s57
      %s59 = sphi 0, %s57
      %s60 = sphi 0, %s59
      %s74 = sphi 0, %s60
      %s78 = sphi 0, %s78
      %s80 = sphi 0, %s78
      %s81 = sphi 0, %s80
      %s95 = sphi 0, %s81
      %s99 = sphi 0, %s99
      %s101 = sphi 0, %s99
      %s102 = sphi 0, %s101
      %s116 = sphi 0, %s102
      %s120 = sphi 0, %s120
      %s122 = sphi 0, %s120
      %s123 = sphi 0, %s122
      %s137 = sphi 0, %s123
      %s143 = sphi 0, %s145
      %s146 = sphi 0, %s143
      %s147 = sphi 0, %s146
      %s163 = sphi 0, %s147
      %s169 = sphi 0, %s171
      %s172 = sphi 0, %s169
      %s173 = sphi 0, %s172
      %s189 = sphi 0, %s173
      %s195 = sphi 0, %s197
      %s198 = sphi 0, %s195
      %s199 = sphi 0, %s198
      %s215 = sphi 0, %s199
      %s221 = sphi 0, %s223
      %s224 = sphi 0, %s221
      %s225 = sphi 0, %s224
      %s241 = sphi 0, %s225
      %s247 = sphi 0, %s249
      %s250 = sphi 0, %s247
      %s251 = sphi 0, %s250
      %s267 = sphi 0, %s251
      %s273 = sphi 0, %s275
      %s276 = sphi 0, %s273
      %s277 = sphi 0, %s276
      %s293 = sphi 0, %s277
      %s299 = sphi 0, %s301
      %s302 = sphi 0, %s299
      %s303 = sphi 0, %s302
      %s319 = sphi 0, %s303
      %s325 = sphi 0, %s327
      %s328 = sphi 0, %s325
      %s329 = sphi 0, %s328
      %s345 = sphi 0, %s329
      %s351 = sphi 0, %s353
      %s354 = sphi 0, %s351
      %s355 = sphi 0, %s354
      %s371 = sphi 0, %s355
      %s377 = sphi 0, %s379
      %s380 = sphi 0, %s377
      %s381 = sphi 0, %s380
      %s397 = sphi 0, %s381
      %s403 = sphi 0, %s405
      %s406 = sphi 0, %s403
      %s407 = sphi 0, %s406
      %s423 = sphi 0, %s407
      %s429 = sphi 0, %s431
      %s432 = sphi 0, %s429
      %s433 = sphi 0, %s432
      %s449 = sphi 0, %s433
      %s453 = sphi 0, %s453
      %s455 = sphi 0, %s453
      %s456 = sphi 0, %s455
      %s470 = sphi 0, %s456
      %s474 = sphi 0, %s474
      %s476 = sphi 0, %s474
      %s477 = sphi 0, %s476
      %s491 = sphi 0, %s477
      %s495 = sphi 0, %s495
      %s497 = sphi 0, %s495
      %s498 = sphi 0, %s497
      %s512 = sphi 0, %s498
      %s516 = sphi 0, %s516
      %s518 = sphi 0, %s516
      %s519 = sphi 0, %s518
      %s533 = sphi 0, %s519
      %s537 = sphi 0, %s537
      %s539 = sphi 0, %s537
      %s540 = sphi 0, %s539
      %s554 = sphi 0, %s540
    $region4: #{bert_forward.1} parent=1 // loop_header_branch
      %31 = sbr.rel (%p29) target = $region8
    $region5: #{bert_forward.1} parent=1 // loop_body
      %s33 = ssub.s32 %s28, 1
      %s34 = ssub.s32 %s28, 2
      %s35 = sadd.s32 %s28, 1
      %s37 = sadd.s32 %s36, 1
      %p40 = scmp.eq.s32.totalorder %s28, 1
      %p41 = scmp.ne.s32.totalorder %s36, %s38
      %p42 = scmp.eq.s32.totalorder %s28, 0
      %p43 = por %p41, %p42
      %p44 = scmp.ne.s32.totalorder %s36, %s38
      %p45 = scmp.eq.s32.totalorder %s33, 1
      %p46 = por %p44, %p45
      %p47 = scmp.ne.s32.totalorder %s38, %s39
      %p48 = scmp.eq.s32.totalorder %s33, 0
      %p49 = por %p47, %p48
      %p50 = scmp.ne.s32.totalorder %s38, %s39
      %p51 = scmp.eq.s32.totalorder %s34, 1
      %p52 = por %p50, %p51
      %p54 = scmp.ne.s32.totalorder %s39, %s53
      %p55 = scmp.eq.s32.totalorder %s34, 0
      %p56 = por %p54, %p55
      %s58 = sadd.s32 %s57, 1
      %p61 = scmp.eq.s32.totalorder %s28, 1
      %p62 = scmp.ne.s32.totalorder %s57, %s59
      %p63 = scmp.eq.s32.totalorder %s28, 0
      %p64 = por %p62, %p63
      %p65 = scmp.ne.s32.totalorder %s57, %s59
      %p66 = scmp.eq.s32.totalorder %s33, 1
      %p67 = por %p65, %p66
      %p68 = scmp.ne.s32.totalorder %s59, %s60
      %p69 = scmp.eq.s32.totalorder %s33, 0
      %p70 = por %p68, %p69
      %p71 = scmp.ne.s32.totalorder %s59, %s60
      %p72 = scmp.eq.s32.totalorder %s34, 1
      %p73 = por %p71, %p72
      %p75 = scmp.ne.s32.totalorder %s60, %s74
      %p76 = scmp.eq.s32.totalorder %s34, 0
      %p77 = por %p75, %p76
      %s79 = sadd.s32 %s78, 1
      %p82 = scmp.eq.s32.totalorder %s28, 1
      %p83 = scmp.ne.s32.totalorder %s78, %s80
      %p84 = scmp.eq.s32.totalorder %s28, 0
      %p85 = por %p83, %p84
      %p86 = scmp.ne.s32.totalorder %s78, %s80
      %p87 = scmp.eq.s32.totalorder %s33, 1
      %p88 = por %p86, %p87
      %p89 = scmp.ne.s32.totalorder %s80, %s81
      %p90 = scmp.eq.s32.totalorder %s33, 0
      %p91 = por %p89, %p90
      %p92 = scmp.ne.s32.totalorder %s80, %s81
      %p93 = scmp.eq.s32.totalorder %s34, 1
      %p94 = por %p92, %p93
      %p96 = scmp.ne.s32.totalorder %s81, %s95
      %p97 = scmp.eq.s32.totalorder %s34, 0
      %p98 = por %p96, %p97
      %s100 = sadd.s32 %s99, 1
      %p103 = scmp.eq.s32.totalorder %s28, 1
      %p104 = scmp.ne.s32.totalorder %s99, %s101
      %p105 = scmp.eq.s32.totalorder %s28, 0
      %p106 = por %p104, %p105
      %p107 = scmp.ne.s32.totalorder %s99, %s101
      %p108 = scmp.eq.s32.totalorder %s33, 1
      %p109 = por %p107, %p108
      %p110 = scmp.ne.s32.totalorder %s101, %s102
      %p111 = scmp.eq.s32.totalorder %s33, 0
      %p112 = por %p110, %p111
      %p113 = scmp.ne.s32.totalorder %s101, %s102
      %p114 = scmp.eq.s32.totalorder %s34, 1
      %p115 = por %p113, %p114
      %p117 = scmp.ne.s32.totalorder %s102, %s116
      %p118 = scmp.eq.s32.totalorder %s34, 0
      %p119 = por %p117, %p118
      %s121 = sadd.s32 %s120, 1
      %p124 = scmp.eq.s32.totalorder %s28, 1
      %p125 = scmp.ne.s32.totalorder %s120, %s122
      %p126 = scmp.eq.s32.totalorder %s28, 0
      %p127 = por %p125, %p126
      %p128 = scmp.ne.s32.totalorder %s120, %s122
      %p129 = scmp.eq.s32.totalorder %s33, 1
      %p130 = por %p128, %p129
      %p131 = scmp.ne.s32.totalorder %s122, %s123
      %p132 = scmp.eq.s32.totalorder %s33, 0
      %p133 = por %p131, %p132
      %p134 = scmp.ne.s32.totalorder %s122, %s123
      %p135 = scmp.eq.s32.totalorder %s34, 1
      %p136 = por %p134, %p135
      %p138 = scmp.ne.s32.totalorder %s123, %s137
      %p139 = scmp.eq.s32.totalorder %s34, 0
      %p140 = por %p138, %p139
      %s141 = ssub.s32 %s28, %s35
      %p142 = scmp.eq.s32.totalorder %s141, 0
      %s144 = sadd.s32 %s143, 1
      %s145 = scalar_select %p142, %s143, %s144
      %p148 = pneg %p142
      %p149 = scmp.eq.s32.totalorder %s28, 1
      %p150 = por %p148, %p149
      %p151 = scmp.ne.s32.totalorder %s143, %s146
      %p152 = scmp.eq.s32.totalorder %s28, 0
      %p153 = por %p151, %p152
      %p154 = scmp.ne.s32.totalorder %s143, %s146
      %p155 = scmp.eq.s32.totalorder %s33, 1
      %p156 = por %p154, %p155
      %p157 = scmp.ne.s32.totalorder %s146, %s147
      %p158 = scmp.eq.s32.totalorder %s33, 0
      %p159 = por %p157, %p158
      %p160 = scmp.ne.s32.totalorder %s146, %s147
      %p161 = scmp.eq.s32.totalorder %s34, 1
      %p162 = por %p160, %p161
      %p164 = scmp.ne.s32.totalorder %s147, %s163
      %p165 = scmp.eq.s32.totalorder %s34, 0
      %p166 = por %p164, %p165
      %s167 = ssub.s32 %s28, %s35
      %p168 = scmp.eq.s32.totalorder %s167, 0
      %s170 = sadd.s32 %s169, 1
      %s171 = scalar_select %p168, %s169, %s170
      %p174 = pneg %p168
      %p175 = scmp.eq.s32.totalorder %s28, 1
      %p176 = por %p174, %p175
      %p177 = scmp.ne.s32.totalorder %s169, %s172
      %p178 = scmp.eq.s32.totalorder %s28, 0
      %p179 = por %p177, %p178
      %p180 = scmp.ne.s32.totalorder %s169, %s172
      %p181 = scmp.eq.s32.totalorder %s33, 1
      %p182 = por %p180, %p181
      %p183 = scmp.ne.s32.totalorder %s172, %s173
      %p184 = scmp.eq.s32.totalorder %s33, 0
      %p185 = por %p183, %p184
      %p186 = scmp.ne.s32.totalorder %s172, %s173
      %p187 = scmp.eq.s32.totalorder %s34, 1
      %p188 = por %p186, %p187
      %p190 = scmp.ne.s32.totalorder %s173, %s189
      %p191 = scmp.eq.s32.totalorder %s34, 0
      %p192 = por %p190, %p191
      %s193 = ssub.s32 %s28, %s35
      %p194 = scmp.eq.s32.totalorder %s193, 0
      %s196 = sadd.s32 %s195, 1
      %s197 = scalar_select %p194, %s195, %s196
      %p200 = pneg %p194
      %p201 = scmp.eq.s32.totalorder %s28, 1
      %p202 = por %p200, %p201
      %p203 = scmp.ne.s32.totalorder %s195, %s198
      %p204 = scmp.eq.s32.totalorder %s28, 0
      %p205 = por %p203, %p204
      %p206 = scmp.ne.s32.totalorder %s195, %s198
      %p207 = scmp.eq.s32.totalorder %s33, 1
      %p208 = por %p206, %p207
      %p209 = scmp.ne.s32.totalorder %s198, %s199
      %p210 = scmp.eq.s32.totalorder %s33, 0
      %p211 = por %p209, %p210
      %p212 = scmp.ne.s32.totalorder %s198, %s199
      %p213 = scmp.eq.s32.totalorder %s34, 1
      %p214 = por %p212, %p213
      %p216 = scmp.ne.s32.totalorder %s199, %s215
      %p217 = scmp.eq.s32.totalorder %s34, 0
      %p218 = por %p216, %p217
      %s219 = ssub.s32 %s28, %s35
      %p220 = scmp.eq.s32.totalorder %s219, 0
      %s222 = sadd.s32 %s221, 1
      %s223 = scalar_select %p220, %s221, %s222
      %p226 = pneg %p220
      %p227 = scmp.eq.s32.totalorder %s28, 1
      %p228 = por %p226, %p227
      %p229 = scmp.ne.s32.totalorder %s221, %s224
      %p230 = scmp.eq.s32.totalorder %s28, 0
      %p231 = por %p229, %p230
      %p232 = scmp.ne.s32.totalorder %s221, %s224
      %p233 = scmp.eq.s32.totalorder %s33, 1
      %p234 = por %p232, %p233
      %p235 = scmp.ne.s32.totalorder %s224, %s225
      %p236 = scmp.eq.s32.totalorder %s33, 0
      %p237 = por %p235, %p236
      %p238 = scmp.ne.s32.totalorder %s224, %s225
      %p239 = scmp.eq.s32.totalorder %s34, 1
      %p240 = por %p238, %p239
      %p242 = scmp.ne.s32.totalorder %s225, %s241
      %p243 = scmp.eq.s32.totalorder %s34, 0
      %p244 = por %p242, %p243
      %s245 = ssub.s32 %s28, %s35
      %p246 = scmp.eq.s32.totalorder %s245, 0
      %s248 = sadd.s32 %s247, 1
      %s249 = scalar_select %p246, %s247, %s248
      %p252 = pneg %p246
      %p253 = scmp.eq.s32.totalorder %s28, 1
      %p254 = por %p252, %p253
      %p255 = scmp.ne.s32.totalorder %s247, %s250
      %p256 = scmp.eq.s32.totalorder %s28, 0
      %p257 = por %p255, %p256
      %p258 = scmp.ne.s32.totalorder %s247, %s250
      %p259 = scmp.eq.s32.totalorder %s33, 1
      %p260 = por %p258, %p259
      %p261 = scmp.ne.s32.totalorder %s250, %s251
      %p262 = scmp.eq.s32.totalorder %s33, 0
      %p263 = por %p261, %p262
      %p264 = scmp.ne.s32.totalorder %s250, %s251
      %p265 = scmp.eq.s32.totalorder %s34, 1
      %p266 = por %p264, %p265
      %p268 = scmp.ne.s32.totalorder %s251, %s267
      %p269 = scmp.eq.s32.totalorder %s34, 0
      %p270 = por %p268, %p269
      %s271 = ssub.s32 %s28, %s35
      %p272 = scmp.eq.s32.totalorder %s271, 0
      %s274 = sadd.s32 %s273, 1
      %s275 = scalar_select %p272, %s273, %s274
      %p278 = pneg %p272
      %p279 = scmp.eq.s32.totalorder %s28, 1
      %p280 = por %p278, %p279
      %p281 = scmp.ne.s32.totalorder %s273, %s276
      %p282 = scmp.eq.s32.totalorder %s28, 0
      %p283 = por %p281, %p282
      %p284 = scmp.ne.s32.totalorder %s273, %s276
      %p285 = scmp.eq.s32.totalorder %s33, 1
      %p286 = por %p284, %p285
      %p287 = scmp.ne.s32.totalorder %s276, %s277
      %p288 = scmp.eq.s32.totalorder %s33, 0
      %p289 = por %p287, %p288
      %p290 = scmp.ne.s32.totalorder %s276, %s277
      %p291 = scmp.eq.s32.totalorder %s34, 1
      %p292 = por %p290, %p291
      %p294 = scmp.ne.s32.totalorder %s277, %s293
      %p295 = scmp.eq.s32.totalorder %s34, 0
      %p296 = por %p294, %p295
      %s297 = ssub.s32 %s28, %s35
      %p298 = scmp.eq.s32.totalorder %s297, 0
      %s300 = sadd.s32 %s299, 1
      %s301 = scalar_select %p298, %s299, %s300
      %p304 = pneg %p298
      %p305 = scmp.eq.s32.totalorder %s28, 1
      %p306 = por %p304, %p305
      %p307 = scmp.ne.s32.totalorder %s299, %s302
      %p308 = scmp.eq.s32.totalorder %s28, 0
      %p309 = por %p307, %p308
      %p310 = scmp.ne.s32.totalorder %s299, %s302
      %p311 = scmp.eq.s32.totalorder %s33, 1
      %p312 = por %p310, %p311
      %p313 = scmp.ne.s32.totalorder %s302, %s303
      %p314 = scmp.eq.s32.totalorder %s33, 0
      %p315 = por %p313, %p314
      %p316 = scmp.ne.s32.totalorder %s302, %s303
      %p317 = scmp.eq.s32.totalorder %s34, 1
      %p318 = por %p316, %p317
      %p320 = scmp.ne.s32.totalorder %s303, %s319
      %p321 = scmp.eq.s32.totalorder %s34, 0
      %p322 = por %p320, %p321
      %s323 = ssub.s32 %s28, %s35
      %p324 = scmp.eq.s32.totalorder %s323, 0
      %s326 = sadd.s32 %s325, 1
      %s327 = scalar_select %p324, %s325, %s326
      %p330 = pneg %p324
      %p331 = scmp.eq.s32.totalorder %s28, 1
      %p332 = por %p330, %p331
      %p333 = scmp.ne.s32.totalorder %s325, %s328
      %p334 = scmp.eq.s32.totalorder %s28, 0
      %p335 = por %p333, %p334
      %p336 = scmp.ne.s32.totalorder %s325, %s328
      %p337 = scmp.eq.s32.totalorder %s33, 1
      %p338 = por %p336, %p337
      %p339 = scmp.ne.s32.totalorder %s328, %s329
      %p340 = scmp.eq.s32.totalorder %s33, 0
      %p341 = por %p339, %p340
      %p342 = scmp.ne.s32.totalorder %s328, %s329
      %p343 = scmp.eq.s32.totalorder %s34, 1
      %p344 = por %p342, %p343
      %p346 = scmp.ne.s32.totalorder %s329, %s345
      %p347 = scmp.eq.s32.totalorder %s34, 0
      %p348 = por %p346, %p347
      %s349 = ssub.s32 %s28, %s35
      %p350 = scmp.eq.s32.totalorder %s349, 0
      %s352 = sadd.s32 %s351, 1
      %s353 = scalar_select %p350, %s351, %s352
      %p356 = pneg %p350
      %p357 = scmp.eq.s32.totalorder %s28, 1
      %p358 = por %p356, %p357
      %p359 = scmp.ne.s32.totalorder %s351, %s354
      %p360 = scmp.eq.s32.totalorder %s28, 0
      %p361 = por %p359, %p360
      %p362 = scmp.ne.s32.totalorder %s351, %s354
      %p363 = scmp.eq.s32.totalorder %s33, 1
      %p364 = por %p362, %p363
      %p365 = scmp.ne.s32.totalorder %s354, %s355
      %p366 = scmp.eq.s32.totalorder %s33, 0
      %p367 = por %p365, %p366
      %p368 = scmp.ne.s32.totalorder %s354, %s355
      %p369 = scmp.eq.s32.totalorder %s34, 1
      %p370 = por %p368, %p369
      %p372 = scmp.ne.s32.totalorder %s355, %s371
      %p373 = scmp.eq.s32.totalorder %s34, 0
      %p374 = por %p372, %p373
      %s375 = ssub.s32 %s28, %s35
      %p376 = scmp.eq.s32.totalorder %s375, 0
      %s378 = sadd.s32 %s377, 1
      %s379 = scalar_select %p376, %s377, %s378
      %p382 = pneg %p376
      %p383 = scmp.eq.s32.totalorder %s28, 1
      %p384 = por %p382, %p383
      %p385 = scmp.ne.s32.totalorder %s377, %s380
      %p386 = scmp.eq.s32.totalorder %s28, 0
      %p387 = por %p385, %p386
      %p388 = scmp.ne.s32.totalorder %s377, %s380
      %p389 = scmp.eq.s32.totalorder %s33, 1
      %p390 = por %p388, %p389
      %p391 = scmp.ne.s32.totalorder %s380, %s381
      %p392 = scmp.eq.s32.totalorder %s33, 0
      %p393 = por %p391, %p392
      %p394 = scmp.ne.s32.totalorder %s380, %s381
      %p395 = scmp.eq.s32.totalorder %s34, 1
      %p396 = por %p394, %p395
      %p398 = scmp.ne.s32.totalorder %s381, %s397
      %p399 = scmp.eq.s32.totalorder %s34, 0
      %p400 = por %p398, %p399
      %s401 = ssub.s32 %s28, %s35
      %p402 = scmp.eq.s32.totalorder %s401, 0
      %s404 = sadd.s32 %s403, 1
      %s405 = scalar_select %p402, %s403, %s404
      %p408 = pneg %p402
      %p409 = scmp.eq.s32.totalorder %s28, 1
      %p410 = por %p408, %p409
      %p411 = scmp.ne.s32.totalorder %s403, %s406
      %p412 = scmp.eq.s32.totalorder %s28, 0
      %p413 = por %p411, %p412
      %p414 = scmp.ne.s32.totalorder %s403, %s406
      %p415 = scmp.eq.s32.totalorder %s33, 1
      %p416 = por %p414, %p415
      %p417 = scmp.ne.s32.totalorder %s406, %s407
      %p418 = scmp.eq.s32.totalorder %s33, 0
      %p419 = por %p417, %p418
      %p420 = scmp.ne.s32.totalorder %s406, %s407
      %p421 = scmp.eq.s32.totalorder %s34, 1
      %p422 = por %p420, %p421
      %p424 = scmp.ne.s32.totalorder %s407, %s423
      %p425 = scmp.eq.s32.totalorder %s34, 0
      %p426 = por %p424, %p425
      %s427 = ssub.s32 %s28, %s35
      %p428 = scmp.eq.s32.totalorder %s427, 0
      %s430 = sadd.s32 %s429, 1
      %s431 = scalar_select %p428, %s429, %s430
      %p434 = pneg %p428
      %p435 = scmp.eq.s32.totalorder %s28, 1
      %p436 = por %p434, %p435
      %p437 = scmp.ne.s32.totalorder %s429, %s432
      %p438 = scmp.eq.s32.totalorder %s28, 0
      %p439 = por %p437, %p438
      %p440 = scmp.ne.s32.totalorder %s429, %s432
      %p441 = scmp.eq.s32.totalorder %s33, 1
      %p442 = por %p440, %p441
      %p443 = scmp.ne.s32.totalorder %s432, %s433
      %p444 = scmp.eq.s32.totalorder %s33, 0
      %p445 = por %p443, %p444
      %p446 = scmp.ne.s32.totalorder %s432, %s433
      %p447 = scmp.eq.s32.totalorder %s34, 1
      %p448 = por %p446, %p447
      %p450 = scmp.ne.s32.totalorder %s433, %s449
      %p451 = scmp.eq.s32.totalorder %s34, 0
      %p452 = por %p450, %p451
      %s454 = sadd.s32 %s453, 1
      %p457 = scmp.eq.s32.totalorder %s28, 1
      %p458 = scmp.ne.s32.totalorder %s453, %s455
      %p459 = scmp.eq.s32.totalorder %s28, 0
      %p460 = por %p458, %p459
      %p461 = scmp.ne.s32.totalorder %s453, %s455
      %p462 = scmp.eq.s32.totalorder %s33, 1
      %p463 = por %p461, %p462
      %p464 = scmp.ne.s32.totalorder %s455, %s456
      %p465 = scmp.eq.s32.totalorder %s33, 0
      %p466 = por %p464, %p465
      %p467 = scmp.ne.s32.totalorder %s455, %s456
      %p468 = scmp.eq.s32.totalorder %s34, 1
      %p469 = por %p467, %p468
      %p471 = scmp.ne.s32.totalorder %s456, %s470
      %p472 = scmp.eq.s32.totalorder %s34, 0
      %p473 = por %p471, %p472
      %s475 = sadd.s32 %s474, 1
      %p478 = scmp.eq.s32.totalorder %s28, 1
      %p479 = scmp.ne.s32.totalorder %s474, %s476
      %p480 = scmp.eq.s32.totalorder %s28, 0
      %p481 = por %p479, %p480
      %p482 = scmp.ne.s32.totalorder %s474, %s476
      %p483 = scmp.eq.s32.totalorder %s33, 1
      %p484 = por %p482, %p483
      %p485 = scmp.ne.s32.totalorder %s476, %s477
      %p486 = scmp.eq.s32.totalorder %s33, 0
      %p487 = por %p485, %p486
      %p488 = scmp.ne.s32.totalorder %s476, %s477
      %p489 = scmp.eq.s32.totalorder %s34, 1
      %p490 = por %p488, %p489
      %p492 = scmp.ne.s32.totalorder %s477, %s491
      %p493 = scmp.eq.s32.totalorder %s34, 0
      %p494 = por %p492, %p493
      %s496 = sadd.s32 %s495, 1
      %p499 = scmp.eq.s32.totalorder %s28, 1
      %p500 = scmp.ne.s32.totalorder %s495, %s497
      %p501 = scmp.eq.s32.totalorder %s28, 0
      %p502 = por %p500, %p501
      %p503 = scmp.ne.s32.totalorder %s495, %s497
      %p504 = scmp.eq.s32.totalorder %s33, 1
      %p505 = por %p503, %p504
      %p506 = scmp.ne.s32.totalorder %s497, %s498
      %p507 = scmp.eq.s32.totalorder %s33, 0
      %p508 = por %p506, %p507
      %p509 = scmp.ne.s32.totalorder %s497, %s498
      %p510 = scmp.eq.s32.totalorder %s34, 1
      %p511 = por %p509, %p510
      %p513 = scmp.ne.s32.totalorder %s498, %s512
      %p514 = scmp.eq.s32.totalorder %s34, 0
      %p515 = por %p513, %p514
      %s517 = sadd.s32 %s516, 1
      %p520 = scmp.eq.s32.totalorder %s28, 1
      %p521 = scmp.ne.s32.totalorder %s516, %s518
      %p522 = scmp.eq.s32.totalorder %s28, 0
      %p523 = por %p521, %p522
      %p524 = scmp.ne.s32.totalorder %s516, %s518
      %p525 = scmp.eq.s32.totalorder %s33, 1
      %p526 = por %p524, %p525
      %p527 = scmp.ne.s32.totalorder %s518, %s519
      %p528 = scmp.eq.s32.totalorder %s33, 0
      %p529 = por %p527, %p528
      %p530 = scmp.ne.s32.totalorder %s518, %s519
      %p531 = scmp.eq.s32.totalorder %s34, 1
      %p532 = por %p530, %p531
      %p534 = scmp.ne.s32.totalorder %s519, %s533
      %p535 = scmp.eq.s32.totalorder %s34, 0
      %p536 = por %p534, %p535
      %s538 = sadd.s32 %s537, 1
      %p541 = scmp.eq.s32.totalorder %s28, 1
      %p542 = scmp.ne.s32.totalorder %s537, %s539
      %p543 = scmp.eq.s32.totalorder %s28, 0
      %p544 = por %p542, %p543
      %p545 = scmp.ne.s32.totalorder %s537, %s539
      %p546 = scmp.eq.s32.totalorder %s33, 1
      %p547 = por %p545, %p546
      %p548 = scmp.ne.s32.totalorder %s539, %s540
      %p549 = scmp.eq.s32.totalorder %s33, 0
      %p550 = por %p548, %p549
      %p551 = scmp.ne.s32.totalorder %s539, %s540
      %p552 = scmp.eq.s32.totalorder %s34, 1
      %p553 = por %p551, %p552
      %p555 = scmp.ne.s32.totalorder %s540, %s554
      %p556 = scmp.eq.s32.totalorder %s34, 0
      %p557 = por %p555, %p556
      %p558 = scmp.le.s32.totalorder 1, %s28
      %p559 = scmp.lt.s32.totalorder %s28, 3
      %p560 = pnand %p558, %p559
      %p561 = pneg %p560
      // Predicated region
      $region9: #{bert_forward.1} parent=5 // pred_check
        _
      $region10: #{bert_forward.1} parent=5 // pred_check_branch
        %563 = sbr.rel (%p560) target = $region12
      $region11: #{bert_forward.1} parent=5 // pred_region
        %s564 = ssub.s32 %s28, 1
        // Predicated region
        $region13: #{bert_forward.1} parent=11 // pred_check
          %p565 = pneg %p49
        $region14: #{bert_forward.1} parent=11 // pred_check_branch
          %567 = sbr.rel (%p565) target = $region16
        $region15: #{bert_forward.1} parent=11 // pred_region
          _
        $region16: #{bert_forward.1} parent=11 // pred_fallthru
          _
        // Predicated region
        $region17: #{bert_forward.1} parent=11 // pred_check
          %p568 = pneg %p70
        $region18: #{bert_forward.1} parent=11 // pred_check_branch
          %570 = sbr.rel (%p568) target = $region20
        $region19: #{bert_forward.1} parent=11 // pred_region
          _
        $region20: #{bert_forward.1} parent=11 // pred_fallthru
          _
        // Predicated region
        $region21: #{bert_forward.1} parent=11 // pred_check
          %p571 = pneg %p91
        $region22: #{bert_forward.1} parent=11 // pred_check_branch
          %573 = sbr.rel (%p571) target = $region24
        $region23: #{bert_forward.1} parent=11 // pred_region
          _
        $region24: #{bert_forward.1} parent=11 // pred_fallthru
          _
        // Predicated region
        $region25: #{bert_forward.1} parent=11 // pred_check
          %p574 = pneg %p112
        $region26: #{bert_forward.1} parent=11 // pred_check_branch
          %576 = sbr.rel (%p574) target = $region28
        $region27: #{bert_forward.1} parent=11 // pred_region
          _
        $region28: #{bert_forward.1} parent=11 // pred_fallthru
          _
        // Predicated region
        $region29: #{bert_forward.1} parent=11 // pred_check
          %p577 = pneg %p133
        $region30: #{bert_forward.1} parent=11 // pred_check_branch
          %579 = sbr.rel (%p577) target = $region32
        $region31: #{bert_forward.1} parent=11 // pred_region
          _
        $region32: #{bert_forward.1} parent=11 // pred_fallthru
          _
        // Predicated region
        $region33: #{bert_forward.1} parent=11 // pred_check
          %p580 = pneg %p466
        $region34: #{bert_forward.1} parent=11 // pred_check_branch
          %582 = sbr.rel (%p580) target = $region36
        $region35: #{bert_forward.1} parent=11 // pred_region
          _
        $region36: #{bert_forward.1} parent=11 // pred_fallthru
          _
        // Predicated region
        $region37: #{bert_forward.1} parent=11 // pred_check
          %p583 = pneg %p487
        $region38: #{bert_forward.1} parent=11 // pred_check_branch
          %585 = sbr.rel (%p583) target = $region40
        $region39: #{bert_forward.1} parent=11 // pred_region
          _
        $region40: #{bert_forward.1} parent=11 // pred_fallthru
          _
        // Predicated region
        $region41: #{bert_forward.1} parent=11 // pred_check
          %p586 = pneg %p508
        $region42: #{bert_forward.1} parent=11 // pred_check_branch
          %588 = sbr.rel (%p586) target = $region44
        $region43: #{bert_forward.1} parent=11 // pred_region
          _
        $region44: #{bert_forward.1} parent=11 // pred_fallthru
          _
        // Predicated region
        $region45: #{bert_forward.1} parent=11 // pred_check
          %p589 = pneg %p529
        $region46: #{bert_forward.1} parent=11 // pred_check_branch
          %591 = sbr.rel (%p589) target = $region48
        $region47: #{bert_forward.1} parent=11 // pred_region
          _
        $region48: #{bert_forward.1} parent=11 // pred_fallthru
          _
      $region12: #{bert_forward.1} parent=5 // pred_fallthru
        _
      %p592 = scmp.lt.s32.totalorder %s28, 2
      // Predicated region
      $region49: #{bert_forward.1} parent=5 // pred_check
        %p593 = pneg %p592
      $region50: #{bert_forward.1} parent=5 // pred_check_branch
        %595 = sbr.rel (%p593) target = $region52
      $region51: #{bert_forward.1} parent=5 // pred_region
        // Predicated region
        $region53: #{bert_forward.1} parent=51 // pred_check
          %p596 = pneg %p153
        $region54: #{bert_forward.1} parent=51 // pred_check_branch
          %598 = sbr.rel (%p596) target = $region56
        $region55: #{bert_forward.1} parent=51 // pred_region
          %p599 = scmp.lt.s32.totalorder %s28, 1
          %s600 = scalar_select %p599, %s28, 1
          %s601 = smul.addr %s600, 4
          %s602 = smul.addr %s601, 4
          %s603 = scalar_lea.vmem %s5, %s602
        $region56: #{bert_forward.1} parent=51 // pred_fallthru
          _
        // Predicated region
        $region57: #{bert_forward.1} parent=51 // pred_check
          %p604 = pneg %p179
        $region58: #{bert_forward.1} parent=51 // pred_check_branch
          %606 = sbr.rel (%p604) target = $region60
        $region59: #{bert_forward.1} parent=51 // pred_region
          %p607 = scmp.lt.s32.totalorder %s28, 1
          %s608 = scalar_select %p607, %s28, 1
          %s609 = scalar_lea.vmem %s6, %s608
        $region60: #{bert_forward.1} parent=51 // pred_fallthru
          _
        // Predicated region
        $region61: #{bert_forward.1} parent=51 // pred_check
          %p610 = pneg %p205
        $region62: #{bert_forward.1} parent=51 // pred_check_branch
          %612 = sbr.rel (%p610) target = $region64
        $region63: #{bert_forward.1} parent=51 // pred_region
          %p613 = scmp.lt.s32.totalorder %s28, 1
          %s614 = scalar_select %p613, %s28, 1
          %s615 = smul.addr %s614, 4
          %s616 = smul.addr %s615, 4
          %s617 = scalar_lea.vmem %s7, %s616
        $region64: #{bert_forward.1} parent=51 // pred_fallthru
          _
        // Predicated region
        $region65: #{bert_forward.1} parent=51 // pred_check
          %p618 = pneg %p231
        $region66: #{bert_forward.1} parent=51 // pred_check_branch
          %620 = sbr.rel (%p618) target = $region68
        $region67: #{bert_forward.1} parent=51 // pred_region
          %p621 = scmp.lt.s32.totalorder %s28, 1
          %s622 = scalar_select %p621, %s28, 1
          %s623 = scalar_lea.vmem %s8, %s622
        $region68: #{bert_forward.1} parent=51 // pred_fallthru
          _
        // Predicated region
        $region69: #{bert_forward.1} parent=51 // pred_check
          %p624 = pneg %p257
        $region70: #{bert_forward.1} parent=51 // pred_check_branch
          %626 = sbr.rel (%p624) target = $region72
        $region71: #{bert_forward.1} parent=51 // pred_region
          %p627 = scmp.lt.s32.totalorder %s28, 1
          %s628 = scalar_select %p627, %s28, 1
          %s629 = scalar_lea.vmem %s9, %s628
        $region72: #{bert_forward.1} parent=51 // pred_fallthru
          _
        // Predicated region
        $region73: #{bert_forward.1} parent=51 // pred_check
          %p630 = pneg %p283
        $region74: #{bert_forward.1} parent=51 // pred_check_branch
          %632 = sbr.rel (%p630) target = $region76
        $region75: #{bert_forward.1} parent=51 // pred_region
          %p633 = scmp.lt.s32.totalorder %s28, 1
          %s634 = scalar_select %p633, %s28, 1
          %s635 = scalar_lea.vmem %s10, %s634
        $region76: #{bert_forward.1} parent=51 // pred_fallthru
          _
        // Predicated region
        $region77: #{bert_forward.1} parent=51 // pred_check
          %p636 = pneg %p309
        $region78: #{bert_forward.1} parent=51 // pred_check_branch
          %638 = sbr.rel (%p636) target = $region80
        $region79: #{bert_forward.1} parent=51 // pred_region
          %p639 = scmp.lt.s32.totalorder %s28, 1
          %s640 = scalar_select %p639, %s28, 1
          %s641 = smul.addr %s640, 4
          %s642 = smul.addr %s641, 4
          %s643 = scalar_lea.vmem %s11, %s642
        $region80: #{bert_forward.1} parent=51 // pred_fallthru
          _
        // Predicated region
        $region81: #{bert_forward.1} parent=51 // pred_check
          %p644 = pneg %p335
        $region82: #{bert_forward.1} parent=51 // pred_check_branch
          %646 = sbr.rel (%p644) target = $region84
        $region83: #{bert_forward.1} parent=51 // pred_region
          %p647 = scmp.lt.s32.totalorder %s28, 1
          %s648 = scalar_select %p647, %s28, 1
          %s649 = scalar_lea.vmem %s12, %s648
        $region84: #{bert_forward.1} parent=51 // pred_fallthru
          _
        // Predicated region
        $region85: #{bert_forward.1} parent=51 // pred_check
          %p650 = pneg %p361
        $region86: #{bert_forward.1} parent=51 // pred_check_branch
          %652 = sbr.rel (%p650) target = $region88
        $region87: #{bert_forward.1} parent=51 // pred_region
          %p653 = scmp.lt.s32.totalorder %s28, 1
          %s654 = scalar_select %p653, %s28, 1
          %s655 = smul.addr %s654, 8
          %s656 = smul.addr %s655, 4
          %s657 = scalar_lea.vmem %s13, %s656
        $region88: #{bert_forward.1} parent=51 // pred_fallthru
          _
        // Predicated region
        $region89: #{bert_forward.1} parent=51 // pred_check
          %p658 = pneg %p387
        $region90: #{bert_forward.1} parent=51 // pred_check_branch
          %660 = sbr.rel (%p658) target = $region92
        $region91: #{bert_forward.1} parent=51 // pred_region
          %p661 = scmp.lt.s32.totalorder %s28, 1
          %s662 = scalar_select %p661, %s28, 1
          %s663 = scalar_lea.vmem %s14, %s662
        $region92: #{bert_forward.1} parent=51 // pred_fallthru
          _
        // Predicated region
        $region93: #{bert_forward.1} parent=51 // pred_check
          %p664 = pneg %p413
        $region94: #{bert_forward.1} parent=51 // pred_check_branch
          %666 = sbr.rel (%p664) target = $region96
        $region95: #{bert_forward.1} parent=51 // pred_region
          %p667 = scmp.lt.s32.totalorder %s28, 1
          %s668 = scalar_select %p667, %s28, 1
          %s669 = scalar_lea.vmem %s15, %s668
        $region96: #{bert_forward.1} parent=51 // pred_fallthru
          _
        // Predicated region
        $region97: #{bert_forward.1} parent=51 // pred_check
          %p670 = pneg %p439
        $region98: #{bert_forward.1} parent=51 // pred_check_branch
          %672 = sbr.rel (%p670) target = $region100
        $region99: #{bert_forward.1} parent=51 // pred_region
          %p673 = scmp.lt.s32.totalorder %s28, 1
          %s674 = scalar_select %p673, %s28, 1
          %s675 = scalar_lea.vmem %s16, %s674
        $region100: #{bert_forward.1} parent=51 // pred_fallthru
          _
      $region52: #{bert_forward.1} parent=5 // pred_fallthru
        _
      %p676 = scmp.le.s32.totalorder 1, %s28
      %p677 = scmp.lt.s32.totalorder %s28, 3
      %p678 = pnand %p676, %p677
      %p679 = pneg %p678
      // Predicated region
      $region101: #{bert_forward.1} parent=5 // pred_check
        _
      $region102: #{bert_forward.1} parent=5 // pred_check_branch
        %681 = sbr.rel (%p678) target = $region104
      $region103: #{bert_forward.1} parent=5 // pred_region
        %s682 = ssub.s32 %s28, 1
        %p683 = pneg %p49
        %p684 = pneg %p46
        %p685 = pneg %p70
        %p686 = pneg %p67
        %p687 = pneg %p91
        %p688 = pneg %p88
        %p689 = pneg %p112
        %p690 = pneg %p109
        %p691 = pneg %p133
        %p692 = pneg %p130
        %p693 = scmp.lt.s32.totalorder %s33, 1
        %s694 = scalar_select %p693, %s33, 1
        %s695 = smul.addr %s694, 4
        %s696 = smul.addr %s695, 4
        %s697 = scalar_lea.vmem %s5, %s696
        %p698 = pneg %p159
        %p699 = pneg %p156
        %p700 = scmp.lt.s32.totalorder %s33, 1
        %s701 = scalar_select %p700, %s33, 1
        %s702 = scalar_lea.vmem %s6, %s701
        %p703 = pneg %p185
        %p704 = pneg %p182
        %p705 = scmp.lt.s32.totalorder %s33, 1
        %s706 = scalar_select %p705, %s33, 1
        %s707 = smul.addr %s706, 4
        %s708 = smul.addr %s707, 4
        %s709 = scalar_lea.vmem %s7, %s708
        %p710 = pneg %p211
        %p711 = pneg %p208
        %p712 = scmp.lt.s32.totalorder %s33, 1
        %s713 = scalar_select %p712, %s33, 1
        %s714 = scalar_lea.vmem %s8, %s713
        %p715 = pneg %p237
        %p716 = pneg %p234
        %p717 = scmp.lt.s32.totalorder %s33, 1
        %s718 = scalar_select %p717, %s33, 1
        %s719 = scalar_lea.vmem %s9, %s718
        %p720 = pneg %p263
        %p721 = pneg %p260
        %p722 = scmp.lt.s32.totalorder %s33, 1
        %s723 = scalar_select %p722, %s33, 1
        %s724 = scalar_lea.vmem %s10, %s723
        %p725 = pneg %p289
        %p726 = pneg %p286
        %p727 = scmp.lt.s32.totalorder %s33, 1
        %s728 = scalar_select %p727, %s33, 1
        %s729 = smul.addr %s728, 4
        %s730 = smul.addr %s729, 4
        %s731 = scalar_lea.vmem %s11, %s730
        %p732 = pneg %p315
        %p733 = pneg %p312
        %p734 = scmp.lt.s32.totalorder %s33, 1
        %s735 = scalar_select %p734, %s33, 1
        %s736 = scalar_lea.vmem %s12, %s735
        %p737 = pneg %p341
        %p738 = pneg %p338
        %p739 = scmp.lt.s32.totalorder %s33, 1
        %s740 = scalar_select %p739, %s33, 1
        %s741 = smul.addr %s740, 8
        %s742 = smul.addr %s741, 4
        %s743 = scalar_lea.vmem %s13, %s742
        %p744 = pneg %p367
        %p745 = pneg %p364
        %p746 = scmp.lt.s32.totalorder %s33, 1
        %s747 = scalar_select %p746, %s33, 1
        %s748 = scalar_lea.vmem %s14, %s747
        %p749 = pneg %p393
        %p750 = pneg %p390
        %p751 = scmp.lt.s32.totalorder %s33, 1
        %s752 = scalar_select %p751, %s33, 1
        %s753 = scalar_lea.vmem %s15, %s752
        %p754 = pneg %p419
        %p755 = pneg %p416
        %p756 = scmp.lt.s32.totalorder %s33, 1
        %s757 = scalar_select %p756, %s33, 1
        %s758 = scalar_lea.vmem %s16, %s757
        %p759 = pneg %p445
        %p760 = pneg %p442
        %p761 = pneg %p466
        %p762 = pneg %p463
        %p763 = pneg %p487
        %p764 = pneg %p484
        %p765 = pneg %p508
        %p766 = pneg %p505
        %p767 = pneg %p529
        %p768 = pneg %p526
        %p769 = pneg %p550
        %p770 = pneg %p547
        %p771 = scmp.lt.s32.totalorder %s33, 1
        %s772 = scalar_select %p771, %s33, 1
        %s773 = smul.addr %s772, 4
        %s774 = smul.addr %s773, 4
        %s775 = scalar_lea.vmem %s5, %s774
        %p776 = scmp.lt.s32.totalorder %s33, 1
        %s777 = scalar_select %p776, %s33, 1
        %s778 = scalar_lea.vmem %s6, %s777
        %p779 = scmp.lt.s32.totalorder %s33, 1
        %s780 = scalar_select %p779, %s33, 1
        %s781 = smul.addr %s780, 4
        %s782 = smul.addr %s781, 4
        %s783 = scalar_lea.vmem %s7, %s782
        %p784 = scmp.lt.s32.totalorder %s33, 1
        %s785 = scalar_select %p784, %s33, 1
        %s786 = scalar_lea.vmem %s8, %s785
        %p787 = scmp.lt.s32.totalorder %s33, 1
        %s788 = scalar_select %p787, %s33, 1
        %s789 = scalar_lea.vmem %s9, %s788
        %p790 = scmp.lt.s32.totalorder %s33, 1
        %s791 = scalar_select %p790, %s33, 1
        %s792 = scalar_lea.vmem %s10, %s791
        %p793 = scmp.lt.s32.totalorder %s33, 1
        %s794 = scalar_select %p793, %s33, 1
        %s795 = smul.addr %s794, 4
        %s796 = smul.addr %s795, 4
        %s797 = scalar_lea.vmem %s11, %s796
        %p798 = scmp.lt.s32.totalorder %s33, 1
        %s799 = scalar_select %p798, %s33, 1
        %s800 = scalar_lea.vmem %s12, %s799
        %p801 = scmp.lt.s32.totalorder %s33, 1
        %s802 = scalar_select %p801, %s33, 1
        %s803 = smul.addr %s802, 8
        %s804 = smul.addr %s803, 4
        %s805 = scalar_lea.vmem %s13, %s804
        %p806 = scmp.lt.s32.totalorder %s33, 1
        %s807 = scalar_select %p806, %s33, 1
        %s808 = scalar_lea.vmem %s14, %s807
        %p809 = scmp.lt.s32.totalorder %s33, 1
        %s810 = scalar_select %p809, %s33, 1
        %s811 = scalar_lea.vmem %s15, %s810
        %p812 = scmp.lt.s32.totalorder %s33, 1
        %s813 = scalar_select %p812, %s33, 1
        %s814 = scalar_lea.vmem %s16, %s813
        %p816 = scmp.eq.s32.totalorder %s33, 0
        // Predicated region
        $region105: #{bert_forward.1} parent=103 // pred_check
          %p817 = pneg %p816
        $region106: #{bert_forward.1} parent=103 // pred_check_branch
          %819 = sbr.rel (%p817) target = $region108
        $region107: #{bert_forward.1} parent=103 // pred_region
          %v820 = vld [vmem:[%s0] sm:$0xff]
          %v821 = vld [vmem:[%s0 + $0x8] sm:$0xff]
          %v822 = vld [vmem:[%s3] sm:$0x1]
          %v823 = vld [vmem:[%s4] sm:$0x1]
          %vm824 = vcmask 261120
          %v825 = vsel %vm824, %v820, 0.0
          %826 = vadd.xlane.f32.xlu0 %v825
          %v827 = vpop.xlane.xlu0 %826
          %v828 = vsel %vm824, %v821, 0.0
          %829 = vadd.xlane.f32.xlu0 %v828
          %v830 = vpop.xlane.xlu0 %829
          %v831 = vrcp.pop 32.0
          %v832 = vmul.f32 %v827, %v831
          %v833 = vmul.f32 %v830, %v831
          %v834 = vsub.f32 %v820, %v832
          %v835 = vsub.f32 %v821, %v833
          %v836 = vmul.f32 %v834, %v834
          %v837 = vmul.f32 %v835, %v835
          %v838 = vsel %vm824, %v836, 0.0
          %839 = vadd.xlane.f32.xlu0 %v838
          %v840 = vpop.xlane.xlu0 %839
          %v841 = vsel %vm824, %v837, 0.0
          %842 = vadd.xlane.f32.xlu0 %v841
          %v843 = vpop.xlane.xlu0 %842
          %v844 = vmul.f32 %v840, %v831
          %v845 = vmul.f32 %v843, %v831
          %v846 = vadd.f32 %v844, 1e-12
          %v847 = vadd.f32 %v845, 1e-12
          %v848 = vrsqrt.pop %v846
          %v849 = vrsqrt.pop %v847
          %v850 = vmul.f32 %v834, %v848
          %v851 = vmul.f32 %v835, %v849
          %v853 = vlaneseq
          %v854 = vshrl.u32 %v853, 7
          %v855 = vsub.s32 0, %v854
          %v856 = vrot.slane %v822, %v855
          %v858 = vmul.f32 %v850, %v856
          %v859 = vmul.f32 %v851, %v856
          %v861 = vlaneseq
          %v862 = vshrl.u32 %v861, 7
          %v863 = vsub.s32 0, %v862
          %v864 = vrot.slane %v823, %v863
          %v866 = vadd.f32 %v858, %v864
          %v867 = vadd.f32 %v859, %v864
          %868 = vst.msk [vmem:[#allocation2] sm:$0xff] %vm824, %v866
          %869 = vst.msk [vmem:[#allocation2 + $0x8] sm:$0xff] %vm824, %v867
        $region108: #{bert_forward.1} parent=103 // pred_fallthru
          _
        %v870 = vld [vmem:[#allocation2] sm:$0xff]
        %v871 = vld [vmem:[#allocation2 + $0x8] sm:$0xff]
        %v872 = vld [vmem:[%s1] sm:$0x3]
        %v873 = vpack.c.bf16 %v871, %v870
        %v874 = vld [vmem:[%s775] sm:$0xf]
        %v875 = vld [vmem:[%s775 + $0x4] sm:$0xf]
        %v876 = vld [vmem:[%s775 + $0x8] sm:$0xf]
        %v877 = vld [vmem:[%s775 + $0xc] sm:$0xf]
        %v878 = vld [vmem:[%s778] sm:$0x1]
        %v880 = vlaneseq
        %v881 = vshrl.u32 %v880, 7
        %v882 = vsub.s32 0, %v881
        %v883 = vrot.slane %v878, %v882
        %v889 = vunpack.c.l.b16 %v874
        %v890 = vunpack.c.l.b16 %v875
        %v891 = vunpack.c.l.b16 %v876
        %v892 = vunpack.c.l.b16 %v877
        %v893 = vpack.c.b16 %v890, %v889
        %v894 = vpack.c.b16 %v892, %v891
        %vm897 = vcmask 261120
        %v899 = vsel %vm897, %v873, 0
        %901 = vmatprep.subr.bf16.mxu0 0
        %902 = vmatpush1.bf16.msra.mxu0 %v893
        %903 = vmatprep.subr.bf16.mxu0 0
        %904 = vmatpush1.bf16.msra.mxu0 %v894
        %905 = vmatprep.subr.bf16.mxu0 0
        %906 = vmatpush1.bf16.msra.mxu0 0
        %907 = vmatprep.subr.bf16.mxu0 0
        %908 = vmatpush1.bf16.msra.mxu0 0
        %909 = vmatprep.subr.bf16.mxu0 0
        %910 = vmatpush1.bf16.msra.mxu0 0
        %911 = vmatprep.subr.bf16.mxu0 0
        %912 = vmatpush1.bf16.msra.mxu0 0
        %913 = vmatprep.subr.bf16.mxu0 0
        %914 = vmatpush1.bf16.msra.mxu0 0
        %915 = vmatprep.subr.bf16.mxu0 0
        %916 = vmatpush1.bf16.msra.mxu0 0
        %917 = vmatprep.subr.bf16.mxu0 0
        %918 = vmatpush1.bf16.msra.mxu0 0
        %919 = vmatprep.subr.bf16.mxu0 0
        %920 = vmatpush1.bf16.msra.mxu0 0
        %921 = vmatprep.subr.bf16.mxu0 0
        %922 = vmatpush1.bf16.msra.mxu0 0
        %923 = vmatprep.subr.bf16.mxu0 0
        %924 = vmatpush1.bf16.msra.mxu0 0
        %925 = vmatprep.subr.bf16.mxu0 0
        %926 = vmatpush1.bf16.msra.mxu0 0
        %927 = vmatprep.subr.bf16.mxu0 0
        %928 = vmatpush1.bf16.msra.mxu0 0
        %929 = vmatprep.subr.bf16.mxu0 0
        %930 = vmatpush1.bf16.msra.mxu0 0
        %931 = vmatprep.subr.bf16.mxu0 0
        %932 = vmatpush1.bf16.msra.mxu0 0
        %933 = vmatprep.mubr.bf16.mxu0 0
        %934 = vmatmul.mubr.bf16.gmra.mrb[0].mxu0 %v899
        %v935 = vpop.f32.mrb[0].mxu0
        %v936 = vadd.f32 %v883, %v935
        %v937 = vpop.f32.mrb[0].mxu0
        %v938 = vpop.f32.mrb[0].mxu0
        %v939 = vadd.f32 %v883, %v938
        %v940 = vpop.f32.mrb[0].mxu0
        %941 = vdwg.mxu0
        %v942 = vpack.c.bf16 %v936, %v936
        %v943 = vpack.c.bf16 %v939, %v939
        %945 = vrot.lane.b32.xlu0 %v942, 96
        %v946 = vpop.permute.xlu0 %945
        %vm947 = vcmask 64512
        %v949 = vsel %vm947, %v942, 0
        %v952 = vsel %vm947, %v946, 0
        %954 = vmatprep.subr.bf16.mxu0 0
        %955 = vmatpush1.bf16.xpose.msra.mxu0 %v952
        %956 = vmatprep.subr.bf16.mxu0 0
        %957 = vmatpush1.bf16.xpose.msra.mxu0 0
        %958 = vmatprep.subr.bf16.mxu0 0
        %959 = vmatpush1.bf16.xpose.msra.mxu0 0
        %960 = vmatprep.subr.bf16.mxu0 0
        %961 = vmatpush1.bf16.xpose.msra.mxu0 0
        %962 = vmatprep.subr.bf16.mxu0 0
        %963 = vmatpush1.bf16.xpose.msra.mxu0 0
        %964 = vmatprep.subr.bf16.mxu0 0
        %965 = vmatpush1.bf16.xpose.msra.mxu0 0
        %966 = vmatprep.subr.bf16.mxu0 0
        %967 = vmatpush1.bf16.xpose.msra.mxu0 0
        %968 = vmatprep.subr.bf16.mxu0 0
        %969 = vmatpush1.bf16.xpose.msra.mxu0 0
        %970 = vmatprep.subr.bf16.mxu0 0
        %971 = vmatpush1.bf16.xpose.msra.mxu0 0
        %972 = vmatprep.subr.bf16.mxu0 0
        %973 = vmatpush1.bf16.xpose.msra.mxu0 0
        %974 = vmatprep.subr.bf16.mxu0 0
        %975 = vmatpush1.bf16.xpose.msra.mxu0 0
        %976 = vmatprep.subr.bf16.mxu0 0
        %977 = vmatpush1.bf16.xpose.msra.mxu0 0
        %978 = vmatprep.subr.bf16.mxu0 0
        %979 = vmatpush1.bf16.xpose.msra.mxu0 0
        %980 = vmatprep.subr.bf16.mxu0 0
        %981 = vmatpush1.bf16.xpose.msra.mxu0 0
        %982 = vmatprep.subr.bf16.mxu0 0
        %983 = vmatpush1.bf16.xpose.msra.mxu0 0
        %984 = vmatprep.subr.bf16.mxu0 0
        %985 = vmatpush1.bf16.xpose.msra.mxu0 0
        %986 = vmatprep.mubr.bf16.mxu0 0
        %987 = vmatmul.mubr.bf16.gmra.mrb[0].mxu0 %v949
        %v988 = vpop.f32.mrb[0].mxu0
        %v989 = vadd.f32 0.0, %v988
        %v990 = vpop.f32.mrb[0].mxu0
        %v991 = vpop.f32.mrb[0].mxu0
        %v992 = vpop.f32.mrb[0].mxu0
        %993 = vdwg.mxu0
        %995 = vrot.lane.b32.xlu0 %v943, 96
        %v996 = vpop.permute.xlu0 %995
        %v998 = vsel %vm947, %v943, 0
        %v1001 = vsel %vm947, %v996, 0
        %1003 = vmatprep.subr.bf16.mxu0 0
        %1004 = vmatpush1.bf16.xpose.msra.mxu0 %v1001
        %1005 = vmatprep.subr.bf16.mxu0 0
        %1006 = vmatpush1.bf16.xpose.msra.mxu0 0
        %1007 = vmatprep.subr.bf16.mxu0 0
        %1008 = vmatpush1.bf16.xpose.msra.mxu0 0
        %1009 = vmatprep.subr.bf16.mxu0 0
        %1010 = vmatpush1.bf16.xpose.msra.mxu0 0
        %1011 = vmatprep.subr.bf16.mxu0 0
        %1012 = vmatpush1.bf16.xpose.msra.mxu0 0
        %1013 = vmatprep.subr.bf16.mxu0 0
        %1014 = vmatpush1.bf16.xpose.msra.mxu0 0
        %1015 = vmatprep.subr.bf16.mxu0 0
        %1016 = vmatpush1.bf16.xpose.msra.mxu0 0
        %1017 = vmatprep.subr.bf16.mxu0 0
        %1018 = vmatpush1.bf16.xpose.msra.mxu0 0
        %1019 = vmatprep.subr.bf16.mxu0 0
        %1020 = vmatpush1.bf16.xpose.msra.mxu0 0
        %1021 = vmatprep.subr.bf16.mxu0 0
        %1022 = vmatpush1.bf16.xpose.msra.mxu0 0
        %1023 = vmatprep.subr.bf16.mxu0 0
        %1024 = vmatpush1.bf16.xpose.msra.mxu0 0
        %1025 = vmatprep.subr.bf16.mxu0 0
        %1026 = vmatpush1.bf16.xpose.msra.mxu0 0
        %1027 = vmatprep.subr.bf16.mxu0 0
        %1028 = vmatpush1.bf16.xpose.msra.mxu0 0
        %1029 = vmatprep.subr.bf16.mxu0 0
        %1030 = vmatpush1.bf16.xpose.msra.mxu0 0
        %1031 = vmatprep.subr.bf16.mxu0 0
        %1032 = vmatpush1.bf16.xpose.msra.mxu0 0
        %1033 = vmatprep.subr.bf16.mxu0 0
        %1034 = vmatpush1.bf16.xpose.msra.mxu0 0
        %1035 = vmatprep.mubr.bf16.mxu0 0
        %1036 = vmatmul.mubr.bf16.gmra.mrb[0].mxu0 %v998
        %v1037 = vpop.f32.mrb[0].mxu0
        %v1038 = vadd.f32 0.0, %v1037
        %v1039 = vpop.f32.mrb[0].mxu0
        %v1040 = vpop.f32.mrb[0].mxu0
        %v1041 = vpop.f32.mrb[0].mxu0
        %1042 = vdwg.mxu0
        %v1043 = vmul.f32 %v989, 0.35355338
        %v1044 = vmul.f32 %v1038, 0.35355338
        %v1047 = vunpack.c.l.s4 1966171168
        %v1048 = vunpack.c.0.s8 %v1047
        %v1049 = vlaneseq
        %v1050 = vshrl.u32 %v1049, 7
        %v1051 = vsub.s32 %v1048, %v1050
        %v1052 = vrot.slane %v872, %v1051
        %v1053 = vcombine.high %v1052, %v1052
        %v1055 = vunpack.c.l.s4 1966171168
        %v1056 = vunpack.c.0.s8 %v1055
        %v1057 = vlaneseq
        %v1058 = vshrl.u32 %v1057, 7
        %v1059 = vsub.s32 %v1056, %v1058
        %v1060 = vrot.slane %v1052, %v1059
        %v1062 = vunpack.c.l.s4 1966171168
        %v1063 = vunpack.c.0.s8 %v1062
        %v1064 = vlaneseq
        %v1065 = vshrl.u32 %v1064, 7
        %v1066 = vsub.s32 %v1063, %v1065
        %v1067 = vrot.slane %v1053, %v1066
        %v1068 = vlaneseq
        %v1069 = vshrl.u32 %v1068, 7
        %v1070 = vsub.s32 0, %v1069
        %v1071 = vrot.slane %v1060, %v1070
        %v1072 = vlaneseq
        %v1073 = vshrl.u32 %v1072, 7
        %v1074 = vsub.s32 0, %v1073
        %v1075 = vrot.slane %v1067, %v1074
        %v1078 = vadd.f32 %v1043, %v1071
        %v1079 = vadd.f32 %v1044, %v1075
        %v1080 = vsel %vm947, %v1078, -inf
        %1081 = vmax.xlane.f32.xlu0 %v1080
        %v1082 = vpop.xlane.xlu0 %1081
        %v1083 = vsel %vm947, %v1079, -inf
        %1084 = vmax.xlane.f32.xlu0 %v1083
        %v1085 = vpop.xlane.xlu0 %1084
        %v1086 = vsub.f32 %v1078, %v1082
        %v1087 = vsub.f32 %v1079, %v1085
        %v1088 = vmul.f32 %v1086, 1.442695
        %v1089 = vpow.pop %v1088
        %v1090 = vmul.f32 %v1087, 1.442695
        %v1091 = vpow.pop %v1090
        %v1092 = vsel %vm947, %v1089, 0.0
        %1093 = vadd.xlane.f32.xlu0 %v1092
        %v1094 = vpop.xlane.xlu0 %1093
        %v1095 = vsel %vm947, %v1091, 0.0
        %1096 = vadd.xlane.f32.xlu0 %v1095
        %v1097 = vpop.xlane.xlu0 %1096
        %v1098 = vrcp.pop %v1094
        %v1099 = vrcp.pop %v1097
        %v1100 = vmul.f32 %v1089, %v1098
        %v1101 = vmul.f32 %v1091, %v1099
        %v1102 = vpack.c.bf16 %v1100, %v1100
        %v1103 = vpack.c.bf16 %v1101, %v1101
        %1104 = vrot.lane.b32.xlu0 %v942, 64
        %v1105 = vpop.permute.xlu0 %1104
        %v1107 = vsel %vm947, %v1102, 0
        %vm1109 = vcmask 1043456
        %v1111 = vsel %vm1109, %v1105, 0
        %1113 = vmatprep.subr.bf16.mxu0 0
        %1114 = vmatpush1.bf16.msra.mxu0 %v1111
        %1115 = vmatprep.subr.bf16.mxu0 0
        %1116 = vmatpush1.bf16.msra.mxu0 0
        %1117 = vmatprep.subr.bf16.mxu0 0
        %1118 = vmatpush1.bf16.msra.mxu0 0
        %1119 = vmatprep.subr.bf16.mxu0 0
        %1120 = vmatpush1.bf16.msra.mxu0 0
        %1121 = vmatprep.subr.bf16.mxu0 0
        %1122 = vmatpush1.bf16.msra.mxu0 0
        %1123 = vmatprep.subr.bf16.mxu0 0
        %1124 = vmatpush1.bf16.msra.mxu0 0
        %1125 = vmatprep.subr.bf16.mxu0 0
        %1126 = vmatpush1.bf16.msra.mxu0 0
        %1127 = vmatprep.subr.bf16.mxu0 0
        %1128 = vmatpush1.bf16.msra.mxu0 0
        %1129 = vmatprep.subr.bf16.mxu0 0
        %1130 = vmatpush1.bf16.msra.mxu0 0
        %1131 = vmatprep.subr.bf16.mxu0 0
        %1132 = vmatpush1.bf16.msra.mxu0 0
        %1133 = vmatprep.subr.bf16.mxu0 0
        %1134 = vmatpush1.bf16.msra.mxu0 0
        %1135 = vmatprep.subr.bf16.mxu0 0
        %1136 = vmatpush1.bf16.msra.mxu0 0
        %1137 = vmatprep.subr.bf16.mxu0 0
        %1138 = vmatpush1.bf16.msra.mxu0 0
        %1139 = vmatprep.subr.bf16.mxu0 0
        %1140 = vmatpush1.bf16.msra.mxu0 0
        %1141 = vmatprep.subr.bf16.mxu0 0
        %1142 = vmatpush1.bf16.msra.mxu0 0
        %1143 = vmatprep.subr.bf16.mxu0 0
        %1144 = vmatpush1.bf16.msra.mxu0 0
        %1145 = vmatprep.mubr.bf16.mxu0 0
        %1146 = vmatmul.mubr.bf16.gmra.mrb[0].mxu0 %v1107
        %v1147 = vpop.f32.mrb[0].mxu0
        %v1148 = vadd.f32 0.0, %v1147
        %v1149 = vpop.f32.mrb[0].mxu0
        %v1150 = vpop.f32.mrb[0].mxu0
        %v1151 = vpop.f32.mrb[0].mxu0
        %1152 = vdwg.mxu0
        %1153 = vrot.lane.b32.xlu0 %v943, 64
        %v1154 = vpop.permute.xlu0 %1153
        %v1156 = vsel %vm947, %v1103, 0
        %v1159 = vsel %vm1109, %v1154, 0
        %1161 = vmatprep.subr.bf16.mxu0 0
        %1162 = vmatpush1.bf16.msra.mxu0 %v1159
        %1163 = vmatprep.subr.bf16.mxu0 0
        %1164 = vmatpush1.bf16.msra.mxu0 0
        %1165 = vmatprep.subr.bf16.mxu0 0
        %1166 = vmatpush1.bf16.msra.mxu0 0
        %1167 = vmatprep.subr.bf16.mxu0 0
        %1168 = vmatpush1.bf16.msra.mxu0 0
        %1169 = vmatprep.subr.bf16.mxu0 0
        %1170 = vmatpush1.bf16.msra.mxu0 0
        %1171 = vmatprep.subr.bf16.mxu0 0
        %1172 = vmatpush1.bf16.msra.mxu0 0
        %1173 = vmatprep.subr.bf16.mxu0 0
        %1174 = vmatpush1.bf16.msra.mxu0 0
        %1175 = vmatprep.subr.bf16.mxu0 0
        %1176 = vmatpush1.bf16.msra.mxu0 0
        %1177 = vmatprep.subr.bf16.mxu0 0
        %1178 = vmatpush1.bf16.msra.mxu0 0
        %1179 = vmatprep.subr.bf16.mxu0 0
        %1180 = vmatpush1.bf16.msra.mxu0 0
        %1181 = vmatprep.subr.bf16.mxu0 0
        %1182 = vmatpush1.bf16.msra.mxu0 0
        %1183 = vmatprep.subr.bf16.mxu0 0
        %1184 = vmatpush1.bf16.msra.mxu0 0
        %1185 = vmatprep.subr.bf16.mxu0 0
        %1186 = vmatpush1.bf16.msra.mxu0 0
        %1187 = vmatprep.subr.bf16.mxu0 0
        %1188 = vmatpush1.bf16.msra.mxu0 0
        %1189 = vmatprep.subr.bf16.mxu0 0
        %1190 = vmatpush1.bf16.msra.mxu0 0
        %1191 = vmatprep.subr.bf16.mxu0 0
        %1192 = vmatpush1.bf16.msra.mxu0 0
        %1193 = vmatprep.mubr.bf16.mxu0 0
        %1194 = vmatmul.mubr.bf16.gmra.mrb[0].mxu0 %v1156
        %v1195 = vpop.f32.mrb[0].mxu0
        %v1196 = vadd.f32 0.0, %v1195
        %v1197 = vpop.f32.mrb[0].mxu0
        %v1198 = vpop.f32.mrb[0].mxu0
        %v1199 = vpop.f32.mrb[0].mxu0
        %1200 = vdwg.mxu0
        %1201 = vst.msk [vmem:[#allocation3] sm:$0xff] %vm947, %v1148
        %1202 = vst.msk [vmem:[#allocation3 + $0x8] sm:$0xff] %vm947, %v1196
        %1203 = vrot.lane.b32.xlu0 %v942, 120
        %v1204 = vpop.permute.xlu0 %1203
        %1205 = vrot.lane.b32.xlu0 %v942, 88
        %v1206 = vpop.permute.xlu0 %1205
        %v1208 = vsel %vm947, %v1204, 0
        %v1211 = vsel %vm947, %v1206, 0
        %1213 = vmatprep.subr.bf16.mxu0 0
        %1214 = vmatpush1.bf16.xpose.msra.mxu0 %v1211
        %1215 = vmatprep.subr.bf16.mxu0 0
        %1216 = vmatpush1.bf16.xpose.msra.mxu0 0
        %1217 = vmatprep.subr.bf16.mxu0 0
        %1218 = vmatpush1.bf16.xpose.msra.mxu0 0
        %1219 = vmatprep.subr.bf16.mxu0 0
        %1220 = vmatpush1.bf16.xpose.msra.mxu0 0
        %1221 = vmatprep.subr.bf16.mxu0 0
        %1222 = vmatpush1.bf16.xpose.msra.mxu0 0
        %1223 = vmatprep.subr.bf16.mxu0 0
        %1224 = vmatpush1.bf16.xpose.msra.mxu0 0
        %1225 = vmatprep.subr.bf16.mxu0 0
        %1226 = vmatpush1.bf16.xpose.msra.mxu0 0
        %1227 = vmatprep.subr.bf16.mxu0 0
        %1228 = vmatpush1.bf16.xpose.msra.mxu0 0
        %1229 = vmatprep.subr.bf16.mxu0 0
        %1230 = vmatpush1.bf16.xpose.msra.mxu0 0
        %1231 = vmatprep.subr.bf16.mxu0 0
        %1232 = vmatpush1.bf16.xpose.msra.mxu0 0
        %1233 = vmatprep.subr.bf16.mxu0 0
        %1234 = vmatpush1.bf16.xpose.msra.mxu0 0
        %1235 = vmatprep.subr.bf16.mxu0 0
        %1236 = vmatpush1.bf16.xpose.msra.mxu0 0
        %1237 = vmatprep.subr.bf16.mxu0 0
        %1238 = vmatpush1.bf16.xpose.msra.mxu0 0
        %1239 = vmatprep.subr.bf16.mxu0 0
        %1240 = vmatpush1.bf16.xpose.msra.mxu0 0
        %1241 = vmatprep.subr.bf16.mxu0 0
        %1242 = vmatpush1.bf16.xpose.msra.mxu0 0
        %1243 = vmatprep.subr.bf16.mxu0 0
        %1244 = vmatpush1.bf16.xpose.msra.mxu0 0
        %1245 = vmatprep.mubr.bf16.mxu0 0
        %1246 = vmatmul.mubr.bf16.gmra.mrb[0].mxu0 %v1208
        %v1247 = vpop.f32.mrb[0].mxu0
        %v1248 = vadd.f32 0.0, %v1247
        %v1249 = vpop.f32.mrb[0].mxu0
        %v1250 = vpop.f32.mrb[0].mxu0
        %v1251 = vpop.f32.mrb[0].mxu0
        %1252 = vdwg.mxu0
        %1253 = vrot.lane.b32.xlu0 %v943, 120
        %v1254 = vpop.permute.xlu0 %1253
        %1255 = vrot.lane.b32.xlu0 %v943, 88
        %v1256 = vpop.permute.xlu0 %1255
        %v1258 = vsel %vm947, %v1254, 0
        %v1261 = vsel %vm947, %v1256, 0
        %1263 = vmatprep.subr.bf16.mxu0 0
        %1264 = vmatpush1.bf16.xpose.msra.mxu0 %v1261
        %1265 = vmatprep.subr.bf16.mxu0 0
        %1266 = vmatpush1.bf16.xpose.msra.mxu0 0
        %1267 = vmatprep.subr.bf16.mxu0 0
        %1268 = vmatpush1.bf16.xpose.msra.mxu0 0
        %1269 = vmatprep.subr.bf16.mxu0 0
        %1270 = vmatpush1.bf16.xpose.msra.mxu0 0
        %1271 = vmatprep.subr.bf16.mxu0 0
        %1272 = vmatpush1.bf16.xpose.msra.mxu0 0
        %1273 = vmatprep.subr.bf16.mxu0 0
        %1274 = vmatpush1.bf16.xpose.msra.mxu0 0
        %1275 = vmatprep.subr.bf16.mxu0 0
        %1276 = vmatpush1.bf16.xpose.msra.mxu0 0
        %1277 = vmatprep.subr.bf16.mxu0 0
        %1278 = vmatpush1.bf16.xpose.msra.mxu0 0
        %1279 = vmatprep.subr.bf16.mxu0 0
        %1280 = vmatpush1.bf16.xpose.msra.mxu0 0
        %1281 = vmatprep.subr.bf16.mxu0 0
        %1282 = vmatpush1.bf16.xpose.msra.mxu0 0
        %1283 = vmatprep.subr.bf16.mxu0 0
        %1284 = vmatpush1.bf16.xpose.msra.mxu0 0
        %1285 = vmatprep.subr.bf16.mxu0 0
        %1286 = vmatpush1.bf16.xpose.msra.mxu0 0
        %1287 = vmatprep.subr.bf16.mxu0 0
        %1288 = vmatpush1.bf16.xpose.msra.mxu0 0
        %1289 = vmatprep.subr.bf16.mxu0 0
        %1290 = vmatpush1.bf16.xpose.msra.mxu0 0
        %1291 = vmatprep.subr.bf16.mxu0 0
        %1292 = vmatpush1.bf16.xpose.msra.mxu0 0
        %1293 = vmatprep.subr.bf16.mxu0 0
        %1294 = vmatpush1.bf16.xpose.msra.mxu0 0
        %1295 = vmatprep.mubr.bf16.mxu0 0
        %1296 = vmatmul.mubr.bf16.gmra.mrb[0].mxu0 %v1258
        %v1297 = vpop.f32.mrb[0].mxu0
        %v1298 = vadd.f32 0.0, %v1297
        %v1299 = vpop.f32.mrb[0].mxu0
        %v1300 = vpop.f32.mrb[0].mxu0
        %v1301 = vpop.f32.mrb[0].mxu0
        %1302 = vdwg.mxu0
        %v1303 = vmul.f32 %v1248, 0.35355338
        %v1304 = vmul.f32 %v1298, 0.35355338
        %v1305 = vadd.f32 %v1303, %v1071
        %v1306 = vadd.f32 %v1304, %v1075
        %v1307 = vsel %vm947, %v1305, -inf
        %1308 = vmax.xlane.f32.xlu0 %v1307
        %v1309 = vpop.xlane.xlu0 %1308
        %v1310 = vsel %vm947, %v1306, -inf
        %1311 = vmax.xlane.f32.xlu0 %v1310
        %v1312 = vpop.xlane.xlu0 %1311
        %v1313 = vsub.f32 %v1305, %v1309
        %v1314 = vsub.f32 %v1306, %v1312
        %v1315 = vmul.f32 %v1313, 1.442695
        %v1316 = vpow.pop %v1315
        %v1317 = vmul.f32 %v1314, 1.442695
        %v1318 = vpow.pop %v1317
        %v1319 = vsel %vm947, %v1316, 0.0
        %1320 = vadd.xlane.f32.xlu0 %v1319
        %v1321 = vpop.xlane.xlu0 %1320
        %v1322 = vsel %vm947, %v1318, 0.0
        %1323 = vadd.xlane.f32.xlu0 %v1322
        %v1324 = vpop.xlane.xlu0 %1323
        %v1325 = vrcp.pop %v1321
        %v1326 = vrcp.pop %v1324
        %v1327 = vmul.f32 %v1316, %v1325
        %v1328 = vmul.f32 %v1318, %v1326
        %v1329 = vpack.c.bf16 %v1327, %v1327
        %v1330 = vpack.c.bf16 %v1328, %v1328
        %1331 = vrot.lane.b32.xlu0 %v942, 56
        %v1332 = vpop.permute.xlu0 %1331
        %v1334 = vsel %vm947, %v1329, 0
        %v1337 = vsel %vm1109, %v1332, 0
        %1339 = vmatprep.subr.bf16.mxu0 0
        %1340 = vmatpush1.bf16.msra.mxu0 %v1337
        %1341 = vmatprep.subr.bf16.mxu0 0
        %1342 = vmatpush1.bf16.msra.mxu0 0
        %1343 = vmatprep.subr.bf16.mxu0 0
        %1344 = vmatpush1.bf16.msra.mxu0 0
        %1345 = vmatprep.subr.bf16.mxu0 0
        %1346 = vmatpush1.bf16.msra.mxu0 0
        %1347 = vmatprep.subr.bf16.mxu0 0
        %1348 = vmatpush1.bf16.msra.mxu0 0
        %1349 = vmatprep.subr.bf16.mxu0 0
        %1350 = vmatpush1.bf16.msra.mxu0 0
        %1351 = vmatprep.subr.bf16.mxu0 0
        %1352 = vmatpush1.bf16.msra.mxu0 0
        %1353 = vmatprep.subr.bf16.mxu0 0
        %1354 = vmatpush1.bf16.msra.mxu0 0
        %1355 = vmatprep.subr.bf16.mxu0 0
        %1356 = vmatpush1.bf16.msra.mxu0 0
        %1357 = vmatprep.subr.bf16.mxu0 0
        %1358 = vmatpush1.bf16.msra.mxu0 0
        %1359 = vmatprep.subr.bf16.mxu0 0
        %1360 = vmatpush1.bf16.msra.mxu0 0
        %1361 = vmatprep.subr.bf16.mxu0 0
        %1362 = vmatpush1.bf16.msra.mxu0 0
        %1363 = vmatprep.subr.bf16.mxu0 0
        %1364 = vmatpush1.bf16.msra.mxu0 0
        %1365 = vmatprep.subr.bf16.mxu0 0
        %1366 = vmatpush1.bf16.msra.mxu0 0
        %1367 = vmatprep.subr.bf16.mxu0 0
        %1368 = vmatpush1.bf16.msra.mxu0 0
        %1369 = vmatprep.subr.bf16.mxu0 0
        %1370 = vmatpush1.bf16.msra.mxu0 0
        %1371 = vmatprep.mubr.bf16.mxu0 0
        %1372 = vmatmul.mubr.bf16.gmra.mrb[0].mxu0 %v1334
        %v1373 = vpop.f32.mrb[0].mxu0
        %v1374 = vadd.f32 0.0, %v1373
        %v1375 = vpop.f32.mrb[0].mxu0
        %v1376 = vpop.f32.mrb[0].mxu0
        %v1377 = vpop.f32.mrb[0].mxu0
        %1378 = vdwg.mxu0
        %1379 = vrot.lane.b32.xlu0 %v943, 56
        %v1380 = vpop.permute.xlu0 %1379
        %v1382 = vsel %vm947, %v1330, 0
        %v1385 = vsel %vm1109, %v1380, 0
        %1387 = vmatprep.subr.bf16.mxu0 0
        %1388 = vmatpush1.bf16.msra.mxu0 %v1385
        %1389 = vmatprep.subr.bf16.mxu0 0
        %1390 = vmatpush1.bf16.msra.mxu0 0
        %1391 = vmatprep.subr.bf16.mxu0 0
        %1392 = vmatpush1.bf16.msra.mxu0 0
        %1393 = vmatprep.subr.bf16.mxu0 0
        %1394 = vmatpush1.bf16.msra.mxu0 0
        %1395 = vmatprep.subr.bf16.mxu0 0
        %1396 = vmatpush1.bf16.msra.mxu0 0
        %1397 = vmatprep.subr.bf16.mxu0 0
        %1398 = vmatpush1.bf16.msra.mxu0 0
        %1399 = vmatprep.subr.bf16.mxu0 0
        %1400 = vmatpush1.bf16.msra.mxu0 0
        %1401 = vmatprep.subr.bf16.mxu0 0
        %1402 = vmatpush1.bf16.msra.mxu0 0
        %1403 = vmatprep.subr.bf16.mxu0 0
        %1404 = vmatpush1.bf16.msra.mxu0 0
        %1405 = vmatprep.subr.bf16.mxu0 0
        %1406 = vmatpush1.bf16.msra.mxu0 0
        %1407 = vmatprep.subr.bf16.mxu0 0
        %1408 = vmatpush1.bf16.msra.mxu0 0
        %1409 = vmatprep.subr.bf16.mxu0 0
        %1410 = vmatpush1.bf16.msra.mxu0 0
        %1411 = vmatprep.subr.bf16.mxu0 0
        %1412 = vmatpush1.bf16.msra.mxu0 0
        %1413 = vmatprep.subr.bf16.mxu0 0
        %1414 = vmatpush1.bf16.msra.mxu0 0
        %1415 = vmatprep.subr.bf16.mxu0 0
        %1416 = vmatpush1.bf16.msra.mxu0 0
        %1417 = vmatprep.subr.bf16.mxu0 0
        %1418 = vmatpush1.bf16.msra.mxu0 0
        %1419 = vmatprep.mubr.bf16.mxu0 0
        %1420 = vmatmul.mubr.bf16.gmra.mrb[0].mxu0 %v1382
        %v1421 = vpop.f32.mrb[0].mxu0
        %v1422 = vadd.f32 0.0, %v1421
        %v1423 = vpop.f32.mrb[0].mxu0
        %v1424 = vpop.f32.mrb[0].mxu0
        %v1425 = vpop.f32.mrb[0].mxu0
        %1426 = vdwg.mxu0
        %1429 = vrot.lane.b32.xlu0 %v1374, 8
        %v1430 = vpop.permute.xlu0 %1429
        %1431 = vrot.lane.b32.xlu0 %v1422, 8
        %v1432 = vpop.permute.xlu0 %1431
        %vm1435 = vcmask 130112
        %1436 = vst.msk [vmem:[#allocation3] sm:$0xff] %vm1435, %v1430
        %1437 = vst.msk [vmem:[#allocation3 + $0x8] sm:$0xff] %vm1435, %v1432
        %1438 = vrot.lane.b32.xlu0 %v942, 112
        %v1439 = vpop.permute.xlu0 %1438
        %1440 = vrot.lane.b32.xlu0 %v942, 80
        %v1441 = vpop.permute.xlu0 %1440
        %v1443 = vsel %vm947, %v1439, 0
        %v1446 = vsel %vm947, %v1441, 0
        %1448 = vmatprep.subr.bf16.mxu0 0
        %1449 = vmatpush1.bf16.xpose.msra.mxu0 %v1446
        %1450 = vmatprep.subr.bf16.mxu0 0
        %1451 = vmatpush1.bf16.xpose.msra.mxu0 0
        %1452 = vmatprep.subr.bf16.mxu0 0
        %1453 = vmatpush1.bf16.xpose.msra.mxu0 0
        %1454 = vmatprep.subr.bf16.mxu0 0
        %1455 = vmatpush1.bf16.xpose.msra.mxu0 0
        %1456 = vmatprep.subr.bf16.mxu0 0
        %1457 = vmatpush1.bf16.xpose.msra.mxu0 0
        %1458 = vmatprep.subr.bf16.mxu0 0
        %1459 = vmatpush1.bf16.xpose.msra.mxu0 0
        %1460 = vmatprep.subr.bf16.mxu0 0
        %1461 = vmatpush1.bf16.xpose.msra.mxu0 0
        %1462 = vmatprep.subr.bf16.mxu0 0
        %1463 = vmatpush1.bf16.xpose.msra.mxu0 0
        %1464 = vmatprep.subr.bf16.mxu0 0
        %1465 = vmatpush1.bf16.xpose.msra.mxu0 0
        %1466 = vmatprep.subr.bf16.mxu0 0
        %1467 = vmatpush1.bf16.xpose.msra.mxu0 0
        %1468 = vmatprep.subr.bf16.mxu0 0
        %1469 = vmatpush1.bf16.xpose.msra.mxu0 0
        %1470 = vmatprep.subr.bf16.mxu0 0
        %1471 = vmatpush1.bf16.xpose.msra.mxu0 0
        %1472 = vmatprep.subr.bf16.mxu0 0
        %1473 = vmatpush1.bf16.xpose.msra.mxu0 0
        %1474 = vmatprep.subr.bf16.mxu0 0
        %1475 = vmatpush1.bf16.xpose.msra.mxu0 0
        %1476 = vmatprep.subr.bf16.mxu0 0
        %1477 = vmatpush1.bf16.xpose.msra.mxu0 0
        %1478 = vmatprep.subr.bf16.mxu0 0
        %1479 = vmatpush1.bf16.xpose.msra.mxu0 0
        %1480 = vmatprep.mubr.bf16.mxu0 0
        %1481 = vmatmul.mubr.bf16.gmra.mrb[0].mxu0 %v1443
        %v1482 = vpop.f32.mrb[0].mxu0
        %v1483 = vadd.f32 0.0, %v1482
        %v1484 = vpop.f32.mrb[0].mxu0
        %v1485 = vpop.f32.mrb[0].mxu0
        %v1486 = vpop.f32.mrb[0].mxu0
        %1487 = vdwg.mxu0
        %1488 = vrot.lane.b32.xlu0 %v943, 112
        %v1489 = vpop.permute.xlu0 %1488
        %1490 = vrot.lane.b32.xlu0 %v943, 80
        %v1491 = vpop.permute.xlu0 %1490
        %v1493 = vsel %vm947, %v1489, 0
        %v1496 = vsel %vm947, %v1491, 0
        %1498 = vmatprep.subr.bf16.mxu0 0
        %1499 = vmatpush1.bf16.xpose.msra.mxu0 %v1496
        %1500 = vmatprep.subr.bf16.mxu0 0
        %1501 = vmatpush1.bf16.xpose.msra.mxu0 0
        %1502 = vmatprep.subr.bf16.mxu0 0
        %1503 = vmatpush1.bf16.xpose.msra.mxu0 0
        %1504 = vmatprep.subr.bf16.mxu0 0
        %1505 = vmatpush1.bf16.xpose.msra.mxu0 0
        %1506 = vmatprep.subr.bf16.mxu0 0
        %1507 = vmatpush1.bf16.xpose.msra.mxu0 0
        %1508 = vmatprep.subr.bf16.mxu0 0
        %1509 = vmatpush1.bf16.xpose.msra.mxu0 0
        %1510 = vmatprep.subr.bf16.mxu0 0
        %1511 = vmatpush1.bf16.xpose.msra.mxu0 0
        %1512 = vmatprep.subr.bf16.mxu0 0
        %1513 = vmatpush1.bf16.xpose.msra.mxu0 0
        %1514 = vmatprep.subr.bf16.mxu0 0
        %1515 = vmatpush1.bf16.xpose.msra.mxu0 0
        %1516 = vmatprep.subr.bf16.mxu0 0
        %1517 = vmatpush1.bf16.xpose.msra.mxu0 0
        %1518 = vmatprep.subr.bf16.mxu0 0
        %1519 = vmatpush1.bf16.xpose.msra.mxu0 0
        %1520 = vmatprep.subr.bf16.mxu0 0
        %1521 = vmatpush1.bf16.xpose.msra.mxu0 0
        %1522 = vmatprep.subr.bf16.mxu0 0
        %1523 = vmatpush1.bf16.xpose.msra.mxu0 0
        %1524 = vmatprep.subr.bf16.mxu0 0
        %1525 = vmatpush1.bf16.xpose.msra.mxu0 0
        %1526 = vmatprep.subr.bf16.mxu0 0
        %1527 = vmatpush1.bf16.xpose.msra.mxu0 0
        %1528 = vmatprep.subr.bf16.mxu0 0
        %1529 = vmatpush1.bf16.xpose.msra.mxu0 0
        %1530 = vmatprep.mubr.bf16.mxu0 0
        %1531 = vmatmul.mubr.bf16.gmra.mrb[0].mxu0 %v1493
        %v1532 = vpop.f32.mrb[0].mxu0
        %v1533 = vadd.f32 0.0, %v1532
        %v1534 = vpop.f32.mrb[0].mxu0
        %v1535 = vpop.f32.mrb[0].mxu0
        %v1536 = vpop.f32.mrb[0].mxu0
        %1537 = vdwg.mxu0
        %v1538 = vmul.f32 %v1483, 0.35355338
        %v1539 = vmul.f32 %v1533, 0.35355338
        %v1540 = vadd.f32 %v1538, %v1071
        %v1541 = vadd.f32 %v1539, %v1075
        %v1542 = vsel %vm947, %v1540, -inf
        %1543 = vmax.xlane.f32.xlu0 %v1542
        %v1544 = vpop.xlane.xlu0 %1543
        %v1545 = vsel %vm947, %v1541, -inf
        %1546 = vmax.xlane.f32.xlu0 %v1545
        %v1547 = vpop.xlane.xlu0 %1546
        %v1548 = vsub.f32 %v1540, %v1544
        %v1549 = vsub.f32 %v1541, %v1547
        %v1550 = vmul.f32 %v1548, 1.442695
        %v1551 = vpow.pop %v1550
        %v1552 = vmul.f32 %v1549, 1.442695
        %v1553 = vpow.pop %v1552
        %v1554 = vsel %vm947, %v1551, 0.0
        %1555 = vadd.xlane.f32.xlu0 %v1554
        %v1556 = vpop.xlane.xlu0 %1555
        %v1557 = vsel %vm947, %v1553, 0.0
        %1558 = vadd.xlane.f32.xlu0 %v1557
        %v1559 = vpop.xlane.xlu0 %1558
        %v1560 = vrcp.pop %v1556
        %v1561 = vrcp.pop %v1559
        %v1562 = vmul.f32 %v1551, %v1560
        %v1563 = vmul.f32 %v1553, %v1561
        %v1564 = vpack.c.bf16 %v1562, %v1562
        %v1565 = vpack.c.bf16 %v1563, %v1563
        %1566 = vrot.lane.b32.xlu0 %v942, 48
        %v1567 = vpop.permute.xlu0 %1566
        %v1569 = vsel %vm947, %v1564, 0
        %v1572 = vsel %vm1109, %v1567, 0
        %1574 = vmatprep.subr.bf16.mxu0 0
        %1575 = vmatpush1.bf16.msra.mxu0 %v1572
        %1576 = vmatprep.subr.bf16.mxu0 0
        %1577 = vmatpush1.bf16.msra.mxu0 0
        %1578 = vmatprep.subr.bf16.mxu0 0
        %1579 = vmatpush1.bf16.msra.mxu0 0
        %1580 = vmatprep.subr.bf16.mxu0 0
        %1581 = vmatpush1.bf16.msra.mxu0 0
        %1582 = vmatprep.subr.bf16.mxu0 0
        %1583 = vmatpush1.bf16.msra.mxu0 0
        %1584 = vmatprep.subr.bf16.mxu0 0
        %1585 = vmatpush1.bf16.msra.mxu0 0
        %1586 = vmatprep.subr.bf16.mxu0 0
        %1587 = vmatpush1.bf16.msra.mxu0 0
        %1588 = vmatprep.subr.bf16.mxu0 0
        %1589 = vmatpush1.bf16.msra.mxu0 0
        %1590 = vmatprep.subr.bf16.mxu0 0
        %1591 = vmatpush1.bf16.msra.mxu0 0
        %1592 = vmatprep.subr.bf16.mxu0 0
        %1593 = vmatpush1.bf16.msra.mxu0 0
        %1594 = vmatprep.subr.bf16.mxu0 0
        %1595 = vmatpush1.bf16.msra.mxu0 0
        %1596 = vmatprep.subr.bf16.mxu0 0
        %1597 = vmatpush1.bf16.msra.mxu0 0
        %1598 = vmatprep.subr.bf16.mxu0 0
        %1599 = vmatpush1.bf16.msra.mxu0 0
        %1600 = vmatprep.subr.bf16.mxu0 0
        %1601 = vmatpush1.bf16.msra.mxu0 0
        %1602 = vmatprep.subr.bf16.mxu0 0
        %1603 = vmatpush1.bf16.msra.mxu0 0
        %1604 = vmatprep.subr.bf16.mxu0 0
        %1605 = vmatpush1.bf16.msra.mxu0 0
        %1606 = vmatprep.mubr.bf16.mxu0 0
        %1607 = vmatmul.mubr.bf16.gmra.mrb[0].mxu0 %v1569
        %v1608 = vpop.f32.mrb[0].mxu0
        %v1609 = vadd.f32 0.0, %v1608
        %v1610 = vpop.f32.mrb[0].mxu0
        %v1611 = vpop.f32.mrb[0].mxu0
        %v1612 = vpop.f32.mrb[0].mxu0
        %1613 = vdwg.mxu0
        %1614 = vrot.lane.b32.xlu0 %v943, 48
        %v1615 = vpop.permute.xlu0 %1614
        %v1617 = vsel %vm947, %v1565, 0
        %v1620 = vsel %vm1109, %v1615, 0
        %1622 = vmatprep.subr.bf16.mxu0 0
        %1623 = vmatpush1.bf16.msra.mxu0 %v1620
        %1624 = vmatprep.subr.bf16.mxu0 0
        %1625 = vmatpush1.bf16.msra.mxu0 0
        %1626 = vmatprep.subr.bf16.mxu0 0
        %1627 = vmatpush1.bf16.msra.mxu0 0
        %1628 = vmatprep.subr.bf16.mxu0 0
        %1629 = vmatpush1.bf16.msra.mxu0 0
        %1630 = vmatprep.subr.bf16.mxu0 0
        %1631 = vmatpush1.bf16.msra.mxu0 0
        %1632 = vmatprep.subr.bf16.mxu0 0
        %1633 = vmatpush1.bf16.msra.mxu0 0
        %1634 = vmatprep.subr.bf16.mxu0 0
        %1635 = vmatpush1.bf16.msra.mxu0 0
        %1636 = vmatprep.subr.bf16.mxu0 0
        %1637 = vmatpush1.bf16.msra.mxu0 0
        %1638 = vmatprep.subr.bf16.mxu0 0
        %1639 = vmatpush1.bf16.msra.mxu0 0
        %1640 = vmatprep.subr.bf16.mxu0 0
        %1641 = vmatpush1.bf16.msra.mxu0 0
        %1642 = vmatprep.subr.bf16.mxu0 0
        %1643 = vmatpush1.bf16.msra.mxu0 0
        %1644 = vmatprep.subr.bf16.mxu0 0
        %1645 = vmatpush1.bf16.msra.mxu0 0
        %1646 = vmatprep.subr.bf16.mxu0 0
        %1647 = vmatpush1.bf16.msra.mxu0 0
        %1648 = vmatprep.subr.bf16.mxu0 0
        %1649 = vmatpush1.bf16.msra.mxu0 0
        %1650 = vmatprep.subr.bf16.mxu0 0
        %1651 = vmatpush1.bf16.msra.mxu0 0
        %1652 = vmatprep.subr.bf16.mxu0 0
        %1653 = vmatpush1.bf16.msra.mxu0 0
        %1654 = vmatprep.mubr.bf16.mxu0 0
        %1655 = vmatmul.mubr.bf16.gmra.mrb[0].mxu0 %v1617
        %v1656 = vpop.f32.mrb[0].mxu0
        %v1657 = vadd.f32 0.0, %v1656
        %v1658 = vpop.f32.mrb[0].mxu0
        %v1659 = vpop.f32.mrb[0].mxu0
        %v1660 = vpop.f32.mrb[0].mxu0
        %1661 = vdwg.mxu0
        %1664 = vrot.lane.b32.xlu0 %v1609, 16
        %v1665 = vpop.permute.xlu0 %1664
        %1666 = vrot.lane.b32.xlu0 %v1657, 16
        %v1667 = vpop.permute.xlu0 %1666
        %vm1670 = vcmask 195712
        %1671 = vst.msk [vmem:[#allocation3] sm:$0xff] %vm1670, %v1665
        %1672 = vst.msk [vmem:[#allocation3 + $0x8] sm:$0xff] %vm1670, %v1667
        %1673 = vrot.lane.b32.xlu0 %v942, 104
        %v1674 = vpop.permute.xlu0 %1673
        %1675 = vrot.lane.b32.xlu0 %v942, 72
        %v1676 = vpop.permute.xlu0 %1675
        %v1678 = vsel %vm947, %v1674, 0
        %v1681 = vsel %vm947, %v1676, 0
        %1683 = vmatprep.subr.bf16.mxu0 0
        %1684 = vmatpush1.bf16.xpose.msra.mxu0 %v1681
        %1685 = vmatprep.subr.bf16.mxu0 0
        %1686 = vmatpush1.bf16.xpose.msra.mxu0 0
        %1687 = vmatprep.subr.bf16.mxu0 0
        %1688 = vmatpush1.bf16.xpose.msra.mxu0 0
        %1689 = vmatprep.subr.bf16.mxu0 0
        %1690 = vmatpush1.bf16.xpose.msra.mxu0 0
        %1691 = vmatprep.subr.bf16.mxu0 0
        %1692 = vmatpush1.bf16.xpose.msra.mxu0 0
        %1693 = vmatprep.subr.bf16.mxu0 0
        %1694 = vmatpush1.bf16.xpose.msra.mxu0 0
        %1695 = vmatprep.subr.bf16.mxu0 0
        %1696 = vmatpush1.bf16.xpose.msra.mxu0 0
        %1697 = vmatprep.subr.bf16.mxu0 0
        %1698 = vmatpush1.bf16.xpose.msra.mxu0 0
        %1699 = vmatprep.subr.bf16.mxu0 0
        %1700 = vmatpush1.bf16.xpose.msra.mxu0 0
        %1701 = vmatprep.subr.bf16.mxu0 0
        %1702 = vmatpush1.bf16.xpose.msra.mxu0 0
        %1703 = vmatprep.subr.bf16.mxu0 0
        %1704 = vmatpush1.bf16.xpose.msra.mxu0 0
        %1705 = vmatprep.subr.bf16.mxu0 0
        %1706 = vmatpush1.bf16.xpose.msra.mxu0 0
        %1707 = vmatprep.subr.bf16.mxu0 0
        %1708 = vmatpush1.bf16.xpose.msra.mxu0 0
        %1709 = vmatprep.subr.bf16.mxu0 0
        %1710 = vmatpush1.bf16.xpose.msra.mxu0 0
        %1711 = vmatprep.subr.bf16.mxu0 0
        %1712 = vmatpush1.bf16.xpose.msra.mxu0 0
        %1713 = vmatprep.subr.bf16.mxu0 0
        %1714 = vmatpush1.bf16.xpose.msra.mxu0 0
        %1715 = vmatprep.mubr.bf16.mxu0 0
        %1716 = vmatmul.mubr.bf16.gmra.mrb[0].mxu0 %v1678
        %v1717 = vpop.f32.mrb[0].mxu0
        %v1718 = vadd.f32 0.0, %v1717
        %v1719 = vpop.f32.mrb[0].mxu0
        %v1720 = vpop.f32.mrb[0].mxu0
        %v1721 = vpop.f32.mrb[0].mxu0
        %1722 = vdwg.mxu0
        %1723 = vrot.lane.b32.xlu0 %v943, 104
        %v1724 = vpop.permute.xlu0 %1723
        %1725 = vrot.lane.b32.xlu0 %v943, 72
        %v1726 = vpop.permute.xlu0 %1725
        %v1728 = vsel %vm947, %v1724, 0
        %v1731 = vsel %vm947, %v1726, 0
        %1733 = vmatprep.subr.bf16.mxu0 0
        %1734 = vmatpush1.bf16.xpose.msra.mxu0 %v1731
        %1735 = vmatprep.subr.bf16.mxu0 0
        %1736 = vmatpush1.bf16.xpose.msra.mxu0 0
        %1737 = vmatprep.subr.bf16.mxu0 0
        %1738 = vmatpush1.bf16.xpose.msra.mxu0 0
        %1739 = vmatprep.subr.bf16.mxu0 0
        %1740 = vmatpush1.bf16.xpose.msra.mxu0 0
        %1741 = vmatprep.subr.bf16.mxu0 0
        %1742 = vmatpush1.bf16.xpose.msra.mxu0 0
        %1743 = vmatprep.subr.bf16.mxu0 0
        %1744 = vmatpush1.bf16.xpose.msra.mxu0 0
        %1745 = vmatprep.subr.bf16.mxu0 0
        %1746 = vmatpush1.bf16.xpose.msra.mxu0 0
        %1747 = vmatprep.subr.bf16.mxu0 0
        %1748 = vmatpush1.bf16.xpose.msra.mxu0 0
        %1749 = vmatprep.subr.bf16.mxu0 0
        %1750 = vmatpush1.bf16.xpose.msra.mxu0 0
        %1751 = vmatprep.subr.bf16.mxu0 0
        %1752 = vmatpush1.bf16.xpose.msra.mxu0 0
        %1753 = vmatprep.subr.bf16.mxu0 0
        %1754 = vmatpush1.bf16.xpose.msra.mxu0 0
        %1755 = vmatprep.subr.bf16.mxu0 0
        %1756 = vmatpush1.bf16.xpose.msra.mxu0 0
        %1757 = vmatprep.subr.bf16.mxu0 0
        %1758 = vmatpush1.bf16.xpose.msra.mxu0 0
        %1759 = vmatprep.subr.bf16.mxu0 0
        %1760 = vmatpush1.bf16.xpose.msra.mxu0 0
        %1761 = vmatprep.subr.bf16.mxu0 0
        %1762 = vmatpush1.bf16.xpose.msra.mxu0 0
        %1763 = vmatprep.subr.bf16.mxu0 0
        %1764 = vmatpush1.bf16.xpose.msra.mxu0 0
        %1765 = vmatprep.mubr.bf16.mxu0 0
        %1766 = vmatmul.mubr.bf16.gmra.mrb[0].mxu0 %v1728
        %v1767 = vpop.f32.mrb[0].mxu0
        %v1768 = vadd.f32 0.0, %v1767
        %v1769 = vpop.f32.mrb[0].mxu0
        %v1770 = vpop.f32.mrb[0].mxu0
        %v1771 = vpop.f32.mrb[0].mxu0
        %1772 = vdwg.mxu0
        %v1773 = vmul.f32 %v1718, 0.35355338
        %v1774 = vmul.f32 %v1768, 0.35355338
        %v1775 = vadd.f32 %v1773, %v1071
        %v1776 = vadd.f32 %v1774, %v1075
        %v1777 = vsel %vm947, %v1775, -inf
        %1778 = vmax.xlane.f32.xlu0 %v1777
        %v1779 = vpop.xlane.xlu0 %1778
        %v1780 = vsel %vm947, %v1776, -inf
        %1781 = vmax.xlane.f32.xlu0 %v1780
        %v1782 = vpop.xlane.xlu0 %1781
        %v1783 = vsub.f32 %v1775, %v1779
        %v1784 = vsub.f32 %v1776, %v1782
        %v1785 = vmul.f32 %v1783, 1.442695
        %v1786 = vpow.pop %v1785
        %v1787 = vmul.f32 %v1784, 1.442695
        %v1788 = vpow.pop %v1787
        %v1789 = vsel %vm947, %v1786, 0.0
        %1790 = vadd.xlane.f32.xlu0 %v1789
        %v1791 = vpop.xlane.xlu0 %1790
        %v1792 = vsel %vm947, %v1788, 0.0
        %1793 = vadd.xlane.f32.xlu0 %v1792
        %v1794 = vpop.xlane.xlu0 %1793
        %v1795 = vrcp.pop %v1791
        %v1796 = vrcp.pop %v1794
        %v1797 = vmul.f32 %v1786, %v1795
        %v1798 = vmul.f32 %v1788, %v1796
        %v1799 = vpack.c.bf16 %v1797, %v1797
        %v1800 = vpack.c.bf16 %v1798, %v1798
        %1801 = vrot.lane.b32.xlu0 %v942, 40
        %v1802 = vpop.permute.xlu0 %1801
        %v1804 = vsel %vm947, %v1799, 0
        %v1807 = vsel %vm1109, %v1802, 0
        %1809 = vmatprep.subr.bf16.mxu0 0
        %1810 = vmatpush1.bf16.msra.mxu0 %v1807
        %1811 = vmatprep.subr.bf16.mxu0 0
        %1812 = vmatpush1.bf16.msra.mxu0 0
        %1813 = vmatprep.subr.bf16.mxu0 0
        %1814 = vmatpush1.bf16.msra.mxu0 0
        %1815 = vmatprep.subr.bf16.mxu0 0
        %1816 = vmatpush1.bf16.msra.mxu0 0
        %1817 = vmatprep.subr.bf16.mxu0 0
        %1818 = vmatpush1.bf16.msra.mxu0 0
        %1819 = vmatprep.subr.bf16.mxu0 0
        %1820 = vmatpush1.bf16.msra.mxu0 0
        %1821 = vmatprep.subr.bf16.mxu0 0
        %1822 = vmatpush1.bf16.msra.mxu0 0
        %1823 = vmatprep.subr.bf16.mxu0 0
        %1824 = vmatpush1.bf16.msra.mxu0 0
        %1825 = vmatprep.subr.bf16.mxu0 0
        %1826 = vmatpush1.bf16.msra.mxu0 0
        %1827 = vmatprep.subr.bf16.mxu0 0
        %1828 = vmatpush1.bf16.msra.mxu0 0
        %1829 = vmatprep.subr.bf16.mxu0 0
        %1830 = vmatpush1.bf16.msra.mxu0 0
        %1831 = vmatprep.subr.bf16.mxu0 0
        %1832 = vmatpush1.bf16.msra.mxu0 0
        %1833 = vmatprep.subr.bf16.mxu0 0
        %1834 = vmatpush1.bf16.msra.mxu0 0
        %1835 = vmatprep.subr.bf16.mxu0 0
        %1836 = vmatpush1.bf16.msra.mxu0 0
        %1837 = vmatprep.subr.bf16.mxu0 0
        %1838 = vmatpush1.bf16.msra.mxu0 0
        %1839 = vmatprep.subr.bf16.mxu0 0
        %1840 = vmatpush1.bf16.msra.mxu0 0
        %1841 = vmatprep.mubr.bf16.mxu0 0
        %1842 = vmatmul.mubr.bf16.gmra.mrb[0].mxu0 %v1804
        %v1843 = vpop.f32.mrb[0].mxu0
        %v1844 = vadd.f32 0.0, %v1843
        %v1845 = vpop.f32.mrb[0].mxu0
        %v1846 = vpop.f32.mrb[0].mxu0
        %v1847 = vpop.f32.mrb[0].mxu0
        %1848 = vdwg.mxu0
        %1849 = vrot.lane.b32.xlu0 %v943, 40
        %v1850 = vpop.permute.xlu0 %1849
        %v1852 = vsel %vm947, %v1800, 0
        %v1855 = vsel %vm1109, %v1850, 0
        %1857 = vmatprep.subr.bf16.mxu0 0
        %1858 = vmatpush1.bf16.msra.mxu0 %v1855
        %1859 = vmatprep.subr.bf16.mxu0 0
        %1860 = vmatpush1.bf16.msra.mxu0 0
        %1861 = vmatprep.subr.bf16.mxu0 0
        %1862 = vmatpush1.bf16.msra.mxu0 0
        %1863 = vmatprep.subr.bf16.mxu0 0
        %1864 = vmatpush1.bf16.msra.mxu0 0
        %1865 = vmatprep.subr.bf16.mxu0 0
        %1866 = vmatpush1.bf16.msra.mxu0 0
        %1867 = vmatprep.subr.bf16.mxu0 0
        %1868 = vmatpush1.bf16.msra.mxu0 0
        %1869 = vmatprep.subr.bf16.mxu0 0
        %1870 = vmatpush1.bf16.msra.mxu0 0
        %1871 = vmatprep.subr.bf16.mxu0 0
        %1872 = vmatpush1.bf16.msra.mxu0 0
        %1873 = vmatprep.subr.bf16.mxu0 0
        %1874 = vmatpush1.bf16.msra.mxu0 0
        %1875 = vmatprep.subr.bf16.mxu0 0
        %1876 = vmatpush1.bf16.msra.mxu0 0
        %1877 = vmatprep.subr.bf16.mxu0 0
        %1878 = vmatpush1.bf16.msra.mxu0 0
        %1879 = vmatprep.subr.bf16.mxu0 0
        %1880 = vmatpush1.bf16.msra.mxu0 0
        %1881 = vmatprep.subr.bf16.mxu0 0
        %1882 = vmatpush1.bf16.msra.mxu0 0
        %1883 = vmatprep.subr.bf16.mxu0 0
        %1884 = vmatpush1.bf16.msra.mxu0 0
        %1885 = vmatprep.subr.bf16.mxu0 0
        %1886 = vmatpush1.bf16.msra.mxu0 0
        %1887 = vmatprep.subr.bf16.mxu0 0
        %1888 = vmatpush1.bf16.msra.mxu0 0
        %1889 = vmatprep.mubr.bf16.mxu0 0
        %1890 = vmatmul.mubr.bf16.gmra.mrb[0].mxu0 %v1852
        %v1891 = vpop.f32.mrb[0].mxu0
        %v1892 = vadd.f32 0.0, %v1891
        %v1893 = vpop.f32.mrb[0].mxu0
        %v1894 = vpop.f32.mrb[0].mxu0
        %v1895 = vpop.f32.mrb[0].mxu0
        %1896 = vdwg.mxu0
        %1899 = vrot.lane.b32.xlu0 %v1844, 24
        %v1900 = vpop.permute.xlu0 %1899
        %1901 = vrot.lane.b32.xlu0 %v1892, 24
        %v1902 = vpop.permute.xlu0 %1901
        %vm1905 = vcmask 261312
        %1906 = vst.msk [vmem:[#allocation3] sm:$0xff] %vm1905, %v1900
        %1907 = vst.msk [vmem:[#allocation3 + $0x8] sm:$0xff] %vm1905, %v1902
        %v1908 = vld [vmem:[#allocation3] sm:$0xff]
        %v1909 = vld [vmem:[#allocation3 + $0x8] sm:$0xff]
        %v1910 = vpack.c.bf16 %v1909, %v1908
        %v1911 = vld [vmem:[%s783] sm:$0xf]
        %v1912 = vld [vmem:[%s783 + $0x4] sm:$0xf]
        %v1913 = vld [vmem:[%s783 + $0x8] sm:$0xf]
        %v1914 = vld [vmem:[%s783 + $0xc] sm:$0xf]
        %v1915 = vld [vmem:[%s786] sm:$0x1]
        %v1917 = vlaneseq
        %v1918 = vshrl.u32 %v1917, 7
        %v1919 = vsub.s32 0, %v1918
        %v1920 = vrot.slane %v1915, %v1919
        %v1926 = vunpack.c.l.b16 %v1911
        %v1927 = vunpack.c.l.b16 %v1912
        %v1928 = vunpack.c.l.b16 %v1913
        %v1929 = vunpack.c.l.b16 %v1914
        %v1930 = vpack.c.b16 %v1927, %v1926
        %v1931 = vpack.c.b16 %v1929, %v1928
        %v1935 = vsel %vm897, %v1910, 0
        %1937 = vmatprep.subr.bf16.mxu0 0
        %1938 = vmatpush1.bf16.msra.mxu0 %v1930
        %1939 = vmatprep.subr.bf16.mxu0 0
        %1940 = vmatpush1.bf16.msra.mxu0 %v1931
        %1941 = vmatprep.subr.bf16.mxu0 0
        %1942 = vmatpush1.bf16.msra.mxu0 0
        %1943 = vmatprep.subr.bf16.mxu0 0
        %1944 = vmatpush1.bf16.msra.mxu0 0
        %1945 = vmatprep.subr.bf16.mxu0 0
        %1946 = vmatpush1.bf16.msra.mxu0 0
        %1947 = vmatprep.subr.bf16.mxu0 0
        %1948 = vmatpush1.bf16.msra.mxu0 0
        %1949 = vmatprep.subr.bf16.mxu0 0
        %1950 = vmatpush1.bf16.msra.mxu0 0
        %1951 = vmatprep.subr.bf16.mxu0 0
        %1952 = vmatpush1.bf16.msra.mxu0 0
        %1953 = vmatprep.subr.bf16.mxu0 0
        %1954 = vmatpush1.bf16.msra.mxu0 0
        %1955 = vmatprep.subr.bf16.mxu0 0
        %1956 = vmatpush1.bf16.msra.mxu0 0
        %1957 = vmatprep.subr.bf16.mxu0 0
        %1958 = vmatpush1.bf16.msra.mxu0 0
        %1959 = vmatprep.subr.bf16.mxu0 0
        %1960 = vmatpush1.bf16.msra.mxu0 0
        %1961 = vmatprep.subr.bf16.mxu0 0
        %1962 = vmatpush1.bf16.msra.mxu0 0
        %1963 = vmatprep.subr.bf16.mxu0 0
        %1964 = vmatpush1.bf16.msra.mxu0 0
        %1965 = vmatprep.subr.bf16.mxu0 0
        %1966 = vmatpush1.bf16.msra.mxu0 0
        %1967 = vmatprep.subr.bf16.mxu0 0
        %1968 = vmatpush1.bf16.msra.mxu0 0
        %1969 = vmatprep.mubr.bf16.mxu0 0
        %1970 = vmatmul.mubr.bf16.gmra.mrb[0].mxu0 %v1935
        %v1971 = vpop.f32.mrb[0].mxu0
        %v1972 = vadd.f32 %v1920, %v1971
        %v1973 = vpop.f32.mrb[0].mxu0
        %v1974 = vpop.f32.mrb[0].mxu0
        %v1975 = vadd.f32 %v1920, %v1974
        %v1976 = vpop.f32.mrb[0].mxu0
        %1977 = vdwg.mxu0
        %v1978 = vadd.f32 %v1972, %v870
        %v1979 = vadd.f32 %v1975, %v871
        %v1980 = vld [vmem:[%s789] sm:$0x1]
        %v1981 = vld [vmem:[%s792] sm:$0x1]
        %v1982 = vsel %vm897, %v1978, 0.0
        %1983 = vadd.xlane.f32.xlu0 %v1982
        %v1984 = vpop.xlane.xlu0 %1983
        %v1985 = vsel %vm897, %v1979, 0.0
        %1986 = vadd.xlane.f32.xlu0 %v1985
        %v1987 = vpop.xlane.xlu0 %1986
        %v1988 = vrcp.pop 32.0
        %v1989 = vmul.f32 %v1984, %v1988
        %v1990 = vmul.f32 %v1987, %v1988
        %v1991 = vsub.f32 %v1978, %v1989
        %v1992 = vsub.f32 %v1979, %v1990
        %v1993 = vmul.f32 %v1991, %v1991
        %v1994 = vmul.f32 %v1992, %v1992
        %v1995 = vsel %vm897, %v1993, 0.0
        %1996 = vadd.xlane.f32.xlu0 %v1995
        %v1997 = vpop.xlane.xlu0 %1996
        %v1998 = vsel %vm897, %v1994, 0.0
        %1999 = vadd.xlane.f32.xlu0 %v1998
        %v2000 = vpop.xlane.xlu0 %1999
        %v2001 = vmul.f32 %v1997, %v1988
        %v2002 = vmul.f32 %v2000, %v1988
        %v2003 = vadd.f32 %v2001, 1e-12
        %v2004 = vadd.f32 %v2002, 1e-12
        %v2005 = vrsqrt.pop %v2003
        %v2006 = vrsqrt.pop %v2004
        %v2007 = vmul.f32 %v1991, %v2005
        %v2008 = vmul.f32 %v1992, %v2006
        %v2010 = vlaneseq
        %v2011 = vshrl.u32 %v2010, 7
        %v2012 = vsub.s32 0, %v2011
        %v2013 = vrot.slane %v1980, %v2012
        %v2015 = vmul.f32 %v2007, %v2013
        %v2016 = vmul.f32 %v2008, %v2013
        %v2018 = vlaneseq
        %v2019 = vshrl.u32 %v2018, 7
        %v2020 = vsub.s32 0, %v2019
        %v2021 = vrot.slane %v1981, %v2020
        %v2023 = vadd.f32 %v2015, %v2021
        %v2024 = vadd.f32 %v2016, %v2021
        %v2025 = vpack.c.bf16 %v2024, %v2023
        %v2026 = vld [vmem:[%s797] sm:$0xf]
        %v2027 = vld [vmem:[%s797 + $0x4] sm:$0xf]
        %v2028 = vld [vmem:[%s797 + $0x8] sm:$0xf]
        %v2029 = vld [vmem:[%s797 + $0xc] sm:$0xf]
        %v2030 = vld [vmem:[%s800] sm:$0x1]
        %v2032 = vlaneseq
        %v2033 = vshrl.u32 %v2032, 7
        %v2034 = vsub.s32 0, %v2033
        %v2035 = vrot.slane %v2030, %v2034
        %v2041 = vunpack.c.l.b16 %v2026
        %v2042 = vunpack.c.l.b16 %v2027
        %v2043 = vunpack.c.l.b16 %v2028
        %v2044 = vunpack.c.l.b16 %v2029
        %v2045 = vpack.c.b16 %v2042, %v2041
        %v2046 = vpack.c.b16 %v2044, %v2043
        %v2050 = vsel %vm897, %v2025, 0
        %2052 = vmatprep.subr.bf16.mxu0 0
        %2053 = vmatpush1.bf16.msra.mxu0 %v2045
        %2054 = vmatprep.subr.bf16.mxu0 0
        %2055 = vmatpush1.bf16.msra.mxu0 %v2046
        %2056 = vmatprep.subr.bf16.mxu0 0
        %2057 = vmatpush1.bf16.msra.mxu0 0
        %2058 = vmatprep.subr.bf16.mxu0 0
        %2059 = vmatpush1.bf16.msra.mxu0 0
        %2060 = vmatprep.subr.bf16.mxu0 0
        %2061 = vmatpush1.bf16.msra.mxu0 0
        %2062 = vmatprep.subr.bf16.mxu0 0
        %2063 = vmatpush1.bf16.msra.mxu0 0
        %2064 = vmatprep.subr.bf16.mxu0 0
        %2065 = vmatpush1.bf16.msra.mxu0 0
        %2066 = vmatprep.subr.bf16.mxu0 0
        %2067 = vmatpush1.bf16.msra.mxu0 0
        %2068 = vmatprep.subr.bf16.mxu0 0
        %2069 = vmatpush1.bf16.msra.mxu0 0
        %2070 = vmatprep.subr.bf16.mxu0 0
        %2071 = vmatpush1.bf16.msra.mxu0 0
        %2072 = vmatprep.subr.bf16.mxu0 0
        %2073 = vmatpush1.bf16.msra.mxu0 0
        %2074 = vmatprep.subr.bf16.mxu0 0
        %2075 = vmatpush1.bf16.msra.mxu0 0
        %2076 = vmatprep.subr.bf16.mxu0 0
        %2077 = vmatpush1.bf16.msra.mxu0 0
        %2078 = vmatprep.subr.bf16.mxu0 0
        %2079 = vmatpush1.bf16.msra.mxu0 0
        %2080 = vmatprep.subr.bf16.mxu0 0
        %2081 = vmatpush1.bf16.msra.mxu0 0
        %2082 = vmatprep.subr.bf16.mxu0 0
        %2083 = vmatpush1.bf16.msra.mxu0 0
        %2084 = vmatprep.mubr.bf16.mxu0 0
        %2085 = vmatmul.mubr.bf16.gmra.mrb[0].mxu0 %v2050
        %v2086 = vpop.f32.mrb[0].mxu0
        %v2087 = vadd.f32 %v2035, %v2086
        %v2088 = vpop.f32.mrb[0].mxu0
        %v2089 = vpop.f32.mrb[0].mxu0
        %v2090 = vadd.f32 %v2035, %v2089
        %v2091 = vpop.f32.mrb[0].mxu0
        %2092 = vdwg.mxu0
        %v2093 = vmul.f32 %v2087, 0.5
        %v2094 = vmul.f32 %v2090, 0.5
        %v2095 = vmul.f32 %v2087, 0.70710677
        %v2096 = vmul.f32 %v2090, 0.70710677
        %v2097 = vand.u32 2147483647, %v2095
        %v2098 = vand.u32 2147483647, %v2096
        %v2099 = vmul.f32 %v2097, 0.3275911
        %v2100 = vmul.f32 %v2098, 0.3275911
        %v2101 = vadd.f32 %v2099, 1.0
        %v2102 = vadd.f32 %v2100, 1.0
        %v2103 = vrcp.pop %v2101
        %v2104 = vrcp.pop %v2102
        %v2105 = vmul.f32 %v2103, 1.0614054
        %v2106 = vmul.f32 %v2104, 1.0614054
        %v2107 = vadd.f32 %v2105, -1.4531521
        %v2108 = vadd.f32 %v2106, -1.4531521
        %v2109 = vmul.f32 %v2107, %v2103
        %v2110 = vmul.f32 %v2108, %v2104
        %v2111 = vadd.f32 %v2109, 1.4214138
        %v2112 = vadd.f32 %v2110, 1.4214138
        %v2113 = vmul.f32 %v2111, %v2103
        %v2114 = vmul.f32 %v2112, %v2104
        %v2115 = vadd.f32 %v2113, -0.28449672
        %v2116 = vadd.f32 %v2114, -0.28449672
        %v2117 = vmul.f32 %v2115, %v2103
        %v2118 = vmul.f32 %v2116, %v2104
        %v2119 = vadd.f32 %v2117, 0.2548296
        %v2120 = vadd.f32 %v2118, 0.2548296
        %v2121 = vmul.f32 %v2119, %v2103
        %v2122 = vmul.f32 %v2120, %v2104
        %v2123 = vsub.f32 0.0, %v2097
        %v2124 = vsub.f32 0.0, %v2098
        %v2125 = vmul.f32 %v2123, %v2097
        %v2126 = vmul.f32 %v2124, %v2098
        %v2127 = vmul.f32 %v2125, 1.442695
        %v2128 = vpow.pop %v2127
        %v2129 = vmul.f32 %v2126, 1.442695
        %v2130 = vpow.pop %v2129
        %v2131 = vmul.f32 %v2121, %v2128
        %v2132 = vmul.f32 %v2122, %v2130
        %v2133 = vsub.f32 1.0, %v2131
        %v2134 = vsub.f32 1.0, %v2132
        %vm2135 = vcmp.ge.f32.partialorder %v2095, 0.0
        %vm2136 = vcmp.ge.f32.partialorder %v2096, 0.0
        %v2137 = vsub.f32 0.0, %v2133
        %v2138 = vsub.f32 0.0, %v2134
        %v2139 = vsel %vm2135, %v2133, %v2137
        %v2140 = vsel %vm2136, %v2134, %v2138
        %v2141 = vadd.f32 %v2139, 1.0
        %v2142 = vadd.f32 %v2140, 1.0
        %v2143 = vmul.f32 %v2093, %v2141
        %v2144 = vmul.f32 %v2094, %v2142
        %v2145 = vpack.c.bf16 %v2144, %v2143
        %v2146 = vld [vmem:[%s805] sm:$0xf]
        %v2147 = vld [vmem:[%s805 + $0x4] sm:$0xf]
        %v2148 = vld [vmem:[%s805 + $0x8] sm:$0xf]
        %v2149 = vld [vmem:[%s805 + $0xc] sm:$0xf]
        %v2150 = vld [vmem:[%s805 + $0x10] sm:$0xf]
        %v2151 = vld [vmem:[%s805 + $0x14] sm:$0xf]
        %v2152 = vld [vmem:[%s805 + $0x18] sm:$0xf]
        %v2153 = vld [vmem:[%s805 + $0x1c] sm:$0xf]
        %v2154 = vld [vmem:[%s808] sm:$0x1]
        %v2156 = vlaneseq
        %v2157 = vshrl.u32 %v2156, 7
        %v2158 = vsub.s32 0, %v2157
        %v2159 = vrot.slane %v2154, %v2158
        %v2169 = vunpack.c.l.b16 %v2146
        %v2170 = vunpack.c.l.b16 %v2147
        %v2171 = vunpack.c.l.b16 %v2148
        %v2172 = vunpack.c.l.b16 %v2149
        %v2173 = vunpack.c.l.b16 %v2150
        %v2174 = vunpack.c.l.b16 %v2151
        %v2175 = vunpack.c.l.b16 %v2152
        %v2176 = vunpack.c.l.b16 %v2153
        %v2177 = vpack.c.b16 %v2170, %v2169
        %v2178 = vpack.c.b16 %v2172, %v2171
        %v2179 = vpack.c.b16 %v2174, %v2173
        %v2180 = vpack.c.b16 %v2176, %v2175
        %vm2185 = vcmask 523264
        %v2187 = vsel %vm2185, %v2145, 0
        %2189 = vmatprep.subr.bf16.mxu0 0
        %2190 = vmatpush1.bf16.msra.mxu0 %v2177
        %2191 = vmatprep.subr.bf16.mxu0 0
        %2192 = vmatpush1.bf16.msra.mxu0 %v2178
        %2193 = vmatprep.subr.bf16.mxu0 0
        %2194 = vmatpush1.bf16.msra.mxu0 %v2179
        %2195 = vmatprep.subr.bf16.mxu0 0
        %2196 = vmatpush1.bf16.msra.mxu0 %v2180
        %2197 = vmatprep.subr.bf16.mxu0 0
        %2198 = vmatpush1.bf16.msra.mxu0 0
        %2199 = vmatprep.subr.bf16.mxu0 0
        %2200 = vmatpush1.bf16.msra.mxu0 0
        %2201 = vmatprep.subr.bf16.mxu0 0
        %2202 = vmatpush1.bf16.msra.mxu0 0
        %2203 = vmatprep.subr.bf16.mxu0 0
        %2204 = vmatpush1.bf16.msra.mxu0 0
        %2205 = vmatprep.subr.bf16.mxu0 0
        %2206 = vmatpush1.bf16.msra.mxu0 0
        %2207 = vmatprep.subr.bf16.mxu0 0
        %2208 = vmatpush1.bf16.msra.mxu0 0
        %2209 = vmatprep.subr.bf16.mxu0 0
        %2210 = vmatpush1.bf16.msra.mxu0 0
        %2211 = vmatprep.subr.bf16.mxu0 0
        %2212 = vmatpush1.bf16.msra.mxu0 0
        %2213 = vmatprep.subr.bf16.mxu0 0
        %2214 = vmatpush1.bf16.msra.mxu0 0
        %2215 = vmatprep.subr.bf16.mxu0 0
        %2216 = vmatpush1.bf16.msra.mxu0 0
        %2217 = vmatprep.subr.bf16.mxu0 0
        %2218 = vmatpush1.bf16.msra.mxu0 0
        %2219 = vmatprep.subr.bf16.mxu0 0
        %2220 = vmatpush1.bf16.msra.mxu0 0
        %2221 = vmatprep.mubr.bf16.mxu0 0
        %2222 = vmatmul.mubr.bf16.gmra.mrb[0].mxu0 %v2187
        %v2223 = vpop.f32.mrb[0].mxu0
        %v2224 = vadd.f32 %v2159, %v2223
        %v2225 = vpop.f32.mrb[0].mxu0
        %v2226 = vpop.f32.mrb[0].mxu0
        %v2227 = vadd.f32 %v2159, %v2226
        %v2228 = vpop.f32.mrb[0].mxu0
        %2229 = vdwg.mxu0
        %v2230 = vadd.f32 %v2224, %v2023
        %v2231 = vadd.f32 %v2227, %v2024
        %v2232 = vld [vmem:[%s811] sm:$0x1]
        %v2233 = vld [vmem:[%s814] sm:$0x1]
        %v2234 = vsel %vm897, %v2230, 0.0
        %2235 = vadd.xlane.f32.xlu0 %v2234
        %v2236 = vpop.xlane.xlu0 %2235
        %v2237 = vsel %vm897, %v2231, 0.0
        %2238 = vadd.xlane.f32.xlu0 %v2237
        %v2239 = vpop.xlane.xlu0 %2238
        %v2240 = vmul.f32 %v2236, %v1988
        %v2241 = vmul.f32 %v2239, %v1988
        %v2242 = vsub.f32 %v2230, %v2240
        %v2243 = vsub.f32 %v2231, %v2241
        %v2244 = vmul.f32 %v2242, %v2242
        %v2245 = vmul.f32 %v2243, %v2243
        %v2246 = vsel %vm897, %v2244, 0.0
        %2247 = vadd.xlane.f32.xlu0 %v2246
        %v2248 = vpop.xlane.xlu0 %2247
        %v2249 = vsel %vm897, %v2245, 0.0
        %2250 = vadd.xlane.f32.xlu0 %v2249
        %v2251 = vpop.xlane.xlu0 %2250
        %v2252 = vmul.f32 %v2248, %v1988
        %v2253 = vmul.f32 %v2251, %v1988
        %v2254 = vadd.f32 %v2252, 1e-12
        %v2255 = vadd.f32 %v2253, 1e-12
        %v2256 = vrsqrt.pop %v2254
        %v2257 = vrsqrt.pop %v2255
        %v2258 = vmul.f32 %v2242, %v2256
        %v2259 = vmul.f32 %v2243, %v2257
        %v2261 = vlaneseq
        %v2262 = vshrl.u32 %v2261, 7
        %v2263 = vsub.s32 0, %v2262
        %v2264 = vrot.slane %v2232, %v2263
        %v2266 = vmul.f32 %v2258, %v2264
        %v2267 = vmul.f32 %v2259, %v2264
        %v2269 = vlaneseq
        %v2270 = vshrl.u32 %v2269, 7
        %v2271 = vsub.s32 0, %v2270
        %v2272 = vrot.slane %v2233, %v2271
        %v2274 = vadd.f32 %v2266, %v2272
        %v2275 = vadd.f32 %v2267, %v2272
        %2276 = vst.msk [vmem:[#allocation2] sm:$0xff] %vm897, %v2274
        %2277 = vst.msk [vmem:[#allocation2 + $0x8] sm:$0xff] %vm897, %v2275
        %p2278 = scmp.eq.s32.totalorder %s33, 1
        // Predicated region
        $region109: #{bert_forward.1} parent=103 // pred_check
          %p2279 = pneg %p2278
        $region110: #{bert_forward.1} parent=103 // pred_check_branch
          %2281 = sbr.rel (%p2279) target = $region112
        $region111: #{bert_forward.1} parent=103 // pred_region
          %v2282 = vld [vmem:[%s2] sm:$0x3]
          %vm2283 = vcmask 130048
          %v2285 = vsel %vm2283, %v2282, 0
          %2287 = vmatprep.subr.mxu0 0.0
          %2288 = vmatpush1.msra.mxu0 %v2274
          %2289 = vmatprep.subr.mxu0 0.0
          %2290 = vmatpush1.msra.mxu0 %v2275
          %2291 = vmatprep.subr.mxu0 0.0
          %2292 = vmatpush1.msra.mxu0 0.0
          %2293 = vmatprep.subr.mxu0 0.0
          %2294 = vmatpush1.msra.mxu0 0.0
          %2295 = vmatprep.subr.mxu0 0.0
          %2296 = vmatpush1.msra.mxu0 0.0
          %2297 = vmatprep.subr.mxu0 0.0
          %2298 = vmatpush1.msra.mxu0 0.0
          %2299 = vmatprep.subr.mxu0 0.0
          %2300 = vmatpush1.msra.mxu0 0.0
          %2301 = vmatprep.subr.mxu0 0.0
          %2302 = vmatpush1.msra.mxu0 0.0
          %2303 = vmatprep.subr.mxu0 0.0
          %2304 = vmatpush1.msra.mxu0 0.0
          %2305 = vmatprep.subr.mxu0 0.0
          %2306 = vmatpush1.msra.mxu0 0.0
          %2307 = vmatprep.subr.mxu0 0.0
          %2308 = vmatpush1.msra.mxu0 0.0
          %2309 = vmatprep.subr.mxu0 0.0
          %2310 = vmatpush1.msra.mxu0 0.0
          %2311 = vmatprep.subr.mxu0 0.0
          %2312 = vmatpush1.msra.mxu0 0.0
          %2313 = vmatprep.subr.mxu0 0.0
          %2314 = vmatpush1.msra.mxu0 0.0
          %2315 = vmatprep.subr.mxu0 0.0
          %2316 = vmatpush1.msra.mxu0 0.0
          %2317 = vmatprep.subr.mxu0 0.0
          %2318 = vmatpush1.msra.mxu0 0.0
          %2319 = vmatprep.subr.mxu0 0.0
          %2320 = vmatpush1.msra.mxu0 0.0
          %2321 = vmatprep.subr.mxu0 0.0
          %2322 = vmatpush1.msra.mxu0 0.0
          %2323 = vmatprep.subr.mxu0 0.0
          %2324 = vmatpush1.msra.mxu0 0.0
          %2325 = vmatprep.subr.mxu0 0.0
          %2326 = vmatpush1.msra.mxu0 0.0
          %2327 = vmatprep.subr.mxu0 0.0
          %2328 = vmatpush1.msra.mxu0 0.0
          %2329 = vmatprep.subr.mxu0 0.0
          %2330 = vmatpush1.msra.mxu0 0.0
          %2331 = vmatprep.subr.mxu0 0.0
          %2332 = vmatpush1.msra.mxu0 0.0
          %2333 = vmatprep.subr.mxu0 0.0
          %2334 = vmatpush1.msra.mxu0 0.0
          %2335 = vmatprep.subr.mxu0 0.0
          %2336 = vmatpush1.msra.mxu0 0.0
          %2337 = vmatprep.subr.mxu0 0.0
          %2338 = vmatpush1.msra.mxu0 0.0
          %2339 = vmatprep.subr.mxu0 0.0
          %2340 = vmatpush1.msra.mxu0 0.0
          %2341 = vmatprep.subr.mxu0 0.0
          %2342 = vmatpush1.msra.mxu0 0.0
          %2343 = vmatprep.subr.mxu0 0.0
          %2344 = vmatpush1.msra.mxu0 0.0
          %2345 = vmatprep.subr.mxu0 0.0
          %2346 = vmatpush1.msra.mxu0 0.0
          %2347 = vmatprep.subr.mxu0 0.0
          %2348 = vmatpush1.msra.mxu0 0.0
          %2349 = vmatprep.subr.mxu0 0.0
          %2350 = vmatpush1.msra.mxu0 0.0
          %2351 = vmatprep.mubr.f32.mxu0 0.0
          %2352 = vmatmul.mubr.f32.gmra.mrb[0].mxu0 %v2285
          %v2353 = vpop.f32.mrb[0].mxu0
          %v2354 = vadd.f32 0.0, %v2353
          %v2355 = vpop.f32.mrb[0].mxu0
          %2356 = vdwg.mxu0
          %v2357 = vpack.c.bf16 %v2354, %v2354
          %v2358 = vld [vmem:[%s17] sm:$0xf]
          %v2359 = vld [vmem:[%s17 + $0x4] sm:$0xf]
          %v2360 = vld [vmem:[%s17 + $0x8] sm:$0xf]
          %v2361 = vld [vmem:[%s17 + $0xc] sm:$0xf]
          %v2362 = vld [vmem:[%s18] sm:$0x1]
          %v2364 = vlaneseq
          %v2365 = vshrl.u32 %v2364, 7
          %v2366 = vsub.s32 0, %v2365
          %v2367 = vrot.slane %v2362, %v2366
          %v2373 = vunpack.c.l.b16 %v2358
          %v2374 = vunpack.c.l.b16 %v2359
          %v2375 = vunpack.c.l.b16 %v2360
          %v2376 = vunpack.c.l.b16 %v2361
          %v2377 = vpack.c.b16 %v2374, %v2373
          %v2378 = vpack.c.b16 %v2376, %v2375
          %v2382 = vsel %vm897, %v2357, 0
          %2384 = vmatprep.subr.bf16.mxu0 0
          %2385 = vmatpush1.bf16.msra.mxu0 %v2377
          %2386 = vmatprep.subr.bf16.mxu0 0
          %2387 = vmatpush1.bf16.msra.mxu0 %v2378
          %2388 = vmatprep.subr.bf16.mxu0 0
          %2389 = vmatpush1.bf16.msra.mxu0 0
          %2390 = vmatprep.subr.bf16.mxu0 0
          %2391 = vmatpush1.bf16.msra.mxu0 0
          %2392 = vmatprep.subr.bf16.mxu0 0
          %2393 = vmatpush1.bf16.msra.mxu0 0
          %2394 = vmatprep.subr.bf16.mxu0 0
          %2395 = vmatpush1.bf16.msra.mxu0 0
          %2396 = vmatprep.subr.bf16.mxu0 0
          %2397 = vmatpush1.bf16.msra.mxu0 0
          %2398 = vmatprep.subr.bf16.mxu0 0
          %2399 = vmatpush1.bf16.msra.mxu0 0
          %2400 = vmatprep.subr.bf16.mxu0 0
          %2401 = vmatpush1.bf16.msra.mxu0 0
          %2402 = vmatprep.subr.bf16.mxu0 0
          %2403 = vmatpush1.bf16.msra.mxu0 0
          %2404 = vmatprep.subr.bf16.mxu0 0
          %2405 = vmatpush1.bf16.msra.mxu0 0
          %2406 = vmatprep.subr.bf16.mxu0 0
          %2407 = vmatpush1.bf16.msra.mxu0 0
          %2408 = vmatprep.subr.bf16.mxu0 0
          %2409 = vmatpush1.bf16.msra.mxu0 0
          %2410 = vmatprep.subr.bf16.mxu0 0
          %2411 = vmatpush1.bf16.msra.mxu0 0
          %2412 = vmatprep.subr.bf16.mxu0 0
          %2413 = vmatpush1.bf16.msra.mxu0 0
          %2414 = vmatprep.subr.bf16.mxu0 0
          %2415 = vmatpush1.bf16.msra.mxu0 0
          %2416 = vmatprep.mubr.bf16.mxu0 0
          %2417 = vmatmul.mubr.bf16.gmra.mrb[0].mxu0 %v2382
          %v2418 = vpop.f32.mrb[0].mxu0
          %v2419 = vadd.f32 %v2367, %v2418
          %v2420 = vpop.f32.mrb[0].mxu0
          %v2421 = vpop.f32.mrb[0].mxu0
          %v2422 = vpop.f32.mrb[0].mxu0
          %2423 = vdwg.mxu0
          %v2424 = vtanh.pop %v2419
          %v2425 = vpack.c.bf16 %v2424, %v2424
          %v2426 = vld [vmem:[%s19] sm:$0xf]
          %v2427 = vld [vmem:[%s19 + $0x4] sm:$0xf]
          %v2428 = vld [vmem:[%s19 + $0x8] sm:$0xf]
          %v2429 = vld [vmem:[%s19 + $0xc] sm:$0xf]
          %v2430 = vld [vmem:[%s20] sm:$0x1]
          %v2432 = vlaneseq
          %v2433 = vshrl.u32 %v2432, 7
          %v2434 = vsub.s32 0, %v2433
          %v2435 = vrot.slane %v2430, %v2434
          %v2441 = vunpack.c.l.b16 %v2426
          %v2442 = vunpack.c.l.b16 %v2427
          %v2443 = vunpack.c.l.b16 %v2428
          %v2444 = vunpack.c.l.b16 %v2429
          %v2445 = vpack.c.b16 %v2442, %v2441
          %v2446 = vpack.c.b16 %v2444, %v2443
          %v2450 = vsel %vm897, %v2425, 0
          %2452 = vmatprep.subr.bf16.mxu0 0
          %2453 = vmatpush1.bf16.msra.mxu0 %v2445
          %2454 = vmatprep.subr.bf16.mxu0 0
          %2455 = vmatpush1.bf16.msra.mxu0 %v2446
          %2456 = vmatprep.subr.bf16.mxu0 0
          %2457 = vmatpush1.bf16.msra.mxu0 0
          %2458 = vmatprep.subr.bf16.mxu0 0
          %2459 = vmatpush1.bf16.msra.mxu0 0
          %2460 = vmatprep.subr.bf16.mxu0 0
          %2461 = vmatpush1.bf16.msra.mxu0 0
          %2462 = vmatprep.subr.bf16.mxu0 0
          %2463 = vmatpush1.bf16.msra.mxu0 0
          %2464 = vmatprep.subr.bf16.mxu0 0
          %2465 = vmatpush1.bf16.msra.mxu0 0
          %2466 = vmatprep.subr.bf16.mxu0 0
          %2467 = vmatpush1.bf16.msra.mxu0 0
          %2468 = vmatprep.subr.bf16.mxu0 0
          %2469 = vmatpush1.bf16.msra.mxu0 0
          %2470 = vmatprep.subr.bf16.mxu0 0
          %2471 = vmatpush1.bf16.msra.mxu0 0
          %2472 = vmatprep.subr.bf16.mxu0 0
          %2473 = vmatpush1.bf16.msra.mxu0 0
          %2474 = vmatprep.subr.bf16.mxu0 0
          %2475 = vmatpush1.bf16.msra.mxu0 0
          %2476 = vmatprep.subr.bf16.mxu0 0
          %2477 = vmatpush1.bf16.msra.mxu0 0
          %2478 = vmatprep.subr.bf16.mxu0 0
          %2479 = vmatpush1.bf16.msra.mxu0 0
          %2480 = vmatprep.subr.bf16.mxu0 0
          %2481 = vmatpush1.bf16.msra.mxu0 0
          %2482 = vmatprep.subr.bf16.mxu0 0
          %2483 = vmatpush1.bf16.msra.mxu0 0
          %2484 = vmatprep.mubr.bf16.mxu0 0
          %2485 = vmatmul.mubr.bf16.gmra.mrb[0].mxu0 %v2450
          %v2486 = vpop.f32.mrb[0].mxu0
          %v2487 = vadd.f32 %v2435, %v2486
          %v2488 = vpop.f32.mrb[0].mxu0
          %v2489 = vpop.f32.mrb[0].mxu0
          %v2490 = vpop.f32.mrb[0].mxu0
          %2491 = vdwg.mxu0
          %vm2492 = vcmask 17408
          %2493 = vst.msk [vmem:[#allocation4] sm:$0x3] %vm2492, %v2487
        $region112: #{bert_forward.1} parent=103 // pred_fallthru
          _
        // Predicated region
        $region113: #{bert_forward.1} parent=103 // pred_check
          %p2494 = pneg %p547
        $region114: #{bert_forward.1} parent=103 // pred_check_branch
          %2496 = sbr.rel (%p2494) target = $region116
        $region115: #{bert_forward.1} parent=103 // pred_region
          %s2498 = ssub.s32 32, 32
          %2499 = vsyncadd [#allocation5], %s2498
          %s2501 = sshll.u32 [#allocation4], 4
          %s2502 = int_to_ptr.vmem [resolvable:$true] %s2501
          %2504 = dma.vmem_to_hbm [thread:$0]  %s2502, 32, %s21, [#allocation5]
        $region116: #{bert_forward.1} parent=103 // pred_fallthru
          _
        // Predicated region
        $region117: #{bert_forward.1} parent=103 // pred_check
          %p2505 = pneg %p547
        $region118: #{bert_forward.1} parent=103 // pred_check_branch
          %2507 = sbr.rel (%p2505) target = $region120
        $region119: #{bert_forward.1} parent=103 // pred_region
          %2508 = dma.done [#allocation5], 32
        $region120: #{bert_forward.1} parent=103 // pred_fallthru
          _
      $region104: #{bert_forward.1} parent=5 // pred_fallthru
        _
      %p2509 = scmp.le.s32.totalorder 2, %s28
      // Predicated region
      $region121: #{bert_forward.1} parent=5 // pred_check
        %p2510 = pneg %p2509
      $region122: #{bert_forward.1} parent=5 // pred_check_branch
        %2512 = sbr.rel (%p2510) target = $region124
      $region123: #{bert_forward.1} parent=5 // pred_region
        %s2513 = ssub.s32 %s28, 2
      $region124: #{bert_forward.1} parent=5 // pred_fallthru
        _
    $region6: #{bert_forward.1} parent=1 // loop_footer
      %s32 = sadd.s32 1, %s28
    $region7: #{bert_forward.1} parent=1 // loop_footer_branch
      %27 = sbr.rel target = $region3
    $region8: #{bert_forward.1} parent=1 // loop_exit
      _
    %2514 = vsyncpa [#allocation5], 1
    %s2515 = scalar_lea.sflag [#allocation5], 1
    %2516 = vsyncpa %s2515, 1

</llo_original>
